<compile_context>
chip_gen: v6e
topology: v6e:2x2x1
jax: 0.10.0
libtpu: 0.0.40
codegen_flags: <defaults>
</compile_context>

<pallas_src>
import functools

import jax
import jax.numpy as jnp
from jax.experimental import pallas as pl
from jax.experimental.pallas import tpu as pltpu

_LANES = 128


# ---------------------------------------------------------------------------
# Fused Pallas kernel: embedding gather + cross + all Dense_dict + 3 Attentions
# ---------------------------------------------------------------------------
def _fused_forward_kernel(uid_ref, iid_ref, slab_ref, out_ref, *,
                          layout, nb, user_num, item_num, emb_size):
    f32 = jnp.float32
    bb = uid_ref.shape[0]
    E = emb_size
    E2 = 2 * emb_size
    NBL = nb[-1]
    n = len(nb)

    def param(name):                      # (rows, cols) static slice of the slab
        off, r, c = layout[name]
        return slab_ref[off:off + r, 0:c]

    def param_rows(name, r0, r1):         # static row sub-range of a slab entry
        off, _, c = layout[name]
        return slab_ref[off + r0:off + r1, 0:c]

    def linear(x, wname, bname, relu):
        y = jnp.dot(x, param(wname), preferred_element_type=f32) + param(bname)
        return jnp.maximum(y, 0.0) if relu else y

    # ---- fused embedding gather (tables resident in the slab) ----
    def gather(idx_ref, tname, tsize):
        iota = jax.lax.broadcasted_iota(jnp.int32, (bb, tsize), 1)
        onehot = (idx_ref[...] == iota).astype(f32)
        return jnp.dot(onehot, param(tname), preferred_element_type=f32)

    uemb = gather(uid_ref, "uid_emb", user_num)       # (bb, E)
    iemb = gather(iid_ref, "item_emb", item_num)      # (bb, E)

    # embedding = cat(uemb, iemb): stored directly into the packed output slab.
    out_ref[:, E2 + NBL:E2 + NBL + E] = uemb.astype(out_ref.dtype)
    out_ref[:, E2 + NBL + E:E2 + NBL + E2] = iemb.astype(out_ref.dtype)

    # cross: Linear(E2 -> E2), no activation.  The concat is decomposed into
    # per-chunk dots so the concatenated embedding is never materialized.
    h0 = (jnp.dot(uemb, param_rows("cross_w", 0, E), preferred_element_type=f32)
          + jnp.dot(iemb, param_rows("cross_w", E, E2), preferred_element_type=f32)
          + param("cross_b"))
    out_ref[:, 0:E2] = h0.astype(out_ref.dtype)       # input_dense

    hidden = {0: h0}
    for i in range(1, n):
        # Dense_dict[(j, i)]: Linear + Dropout(identity, eval) + ReLU
        outs = [linear(hidden[j], f"w_{j}_{i}", f"b_{j}_{i}", relu=True)
                for j in range(i)]
        if i == 1:
            hidden[i] = outs[0]
            continue

        k = i - 2
        D = nb[i]                         # feature width of each branch output
        # relu(cat(outs) @ W1 + b1) == relu(sum_j outs[j] @ W1[j*D:(j+1)*D] + b1)
        acc = jnp.dot(outs[0], param_rows(f"att{k}_w1", 0, D),
                      preferred_element_type=f32)
        for x in range(1, i):
            acc = acc + jnp.dot(outs[x],
                                param_rows(f"att{k}_w1", x * D, (x + 1) * D),
                                preferred_element_type=f32)
        hmid = jnp.maximum(acc + param(f"att{k}_b1"), 0.0)
        logits = (jnp.dot(hmid, param(f"att{k}_w2"), preferred_element_type=f32)
                  + param(f"att{k}_b2"))                          # (bb, i)
        m = jnp.max(logits, axis=1, keepdims=True)
        e = jnp.exp(logits - m)
        wgt = e * pl.reciprocal(jnp.sum(e, axis=1, keepdims=True), approx=True)

        # Attention-weighted sum, seeded with the x=0 term (no zero tile).
        out = wgt[:, 0:1] * outs[0]
        for x in range(1, i):
            out = out + wgt[:, x:x + 1] * outs[x]
        hidden[i] = out

    out_ref[:, E2:E2 + NBL] = hidden[n - 1].astype(out_ref.dtype)   # out_final


# ---------------------------------------------------------------------------
# Host-side helpers: weight-slab packing, VMEM budgeting, batch-tile selection
# ---------------------------------------------------------------------------
def _pack_params(params, nb):
    """Pack every weight/bias (and embedding tables) into one 8-row-aligned
    (R, 128) f32 slab.  Returns (slab, layout) with layout[name] = (row, rows, cols)."""
    entries = [("uid_emb", params["uid_emb"]),
               ("item_emb", params["item_emb"]),
               ("cross_w", params["cross_w"]),
               ("cross_b", params["cross_b"].reshape(1, -1))]
    for i in range(1, len(nb)):
        for j in range(i):
            lw = params["dense"][(j, i)]
            entries.append((f"w_{j}_{i}", lw["w"]))
            entries.append((f"b_{j}_{i}", lw["b"].reshape(1, -1)))
    for k in range(len(nb) - 2):
        ap = params["att"][k]
        entries.append((f"att{k}_w1", ap["w1"]))
        entries.append((f"att{k}_b1", ap["b1"].reshape(1, -1)))
        entries.append((f"att{k}_w2", ap["w2"]))
        entries.append((f"att{k}_b2", ap["b2"].reshape(1, -1)))

    layout, blocks, off = {}, [], 0
    for name, arr in entries:
        r, c = arr.shape
        assert c <= _LANES, name
        r_pad = -(-r // 8) * 8                 # sublane-align every entry's start
        blk = jnp.zeros((r_pad, _LANES), jnp.float32).at[:r, :c].set(
            arr.astype(jnp.float32))
        layout[name] = (off, r, c)
        blocks.append(blk)
        off += r_pad
    slab = jnp.concatenate(blocks, axis=0)
    return slab, layout


def _vmem_limit_bytes():
    cap = 64 << 20                             # v7x per-core worst case fallback
    try:
        info = pltpu.get_tpu_info()
        cap = int(getattr(info, "vmem_capacity_bytes", cap)) or cap
    except Exception:
        pass
    return (cap * 3) // 4                      # v7x ~48 MiB, v5e/v6e ~96 MiB


def _choose_block_b(B, vmem_limit_bytes):
    ALIGN = 16                                 # bf16 sublane packing
    PER_ROW_BYTES = 1600                       # ~live f32 intermediates + 2x-buffered I/O
    cap = (int(vmem_limit_bytes * 0.5) // PER_ROW_BYTES // ALIGN) * ALIGN
    cap = max(ALIGN, min(16384, cap))
    min_steps = 2 if B > 4096 else 1           # v7x: >=2 grid steps -> both TCs busy
    steps = max(min_steps, -(-B // cap))
    if steps == 1:
        return B, B                            # single full-batch block (full-dim legal)
    per = -(-B // steps)
    block_b = -(-per // ALIGN) * ALIGN
    return block_b, block_b * steps            # (tile, padded batch)


# ---------------------------------------------------------------------------
# Wrapper: one pallas_call, one resident weight slab, one packed bf16 output
# ---------------------------------------------------------------------------
def build_fused_forward(params, nb, user_num, item_num, emb_size,
                        io_dtype=jnp.bfloat16):
    slab, layout = _pack_params(params, nb)
    E2 = 2 * emb_size
    out_cols = E2 + nb[-1] + E2                # [input_dense | out_final | embedding]
    kern = functools.partial(_fused_forward_kernel, layout=layout, nb=tuple(nb),
                             user_num=user_num, item_num=item_num,
                             emb_size=emb_size)
    vmem_limit = _vmem_limit_bytes()

    def forward(user_vector, item_vector):
        B = int(user_vector.shape[0])
        block_b, padded_B = _choose_block_b(B, vmem_limit)
        uid = user_vector.astype(jnp.int32).reshape(-1, 1)
        iid = item_vector.astype(jnp.int32).reshape(-1, 1)
        if padded_B != B:
            uid = jnp.pad(uid, ((0, padded_B - B), (0, 0)))
            iid = jnp.pad(iid, ((0, padded_B - B), (0, 0)))
        grid = (padded_B // block_b,)

        out = pl.pallas_call(
            kern,
            out_shape=jax.ShapeDtypeStruct((padded_B, out_cols), io_dtype),
            grid=grid,
            in_specs=[
                pl.BlockSpec((block_b, 1), lambda b: (b, 0)),      # user ids
                pl.BlockSpec((block_b, 1), lambda b: (b, 0)),      # item ids
                pl.BlockSpec(slab.shape, lambda b: (0, 0)),        # resident weight slab
            ],
            out_specs=pl.BlockSpec((block_b, out_cols), lambda b: (b, 0)),
            compiler_params=pltpu.CompilerParams(
                dimension_semantics=("parallel",),
                vmem_limit_bytes=int(vmem_limit)),
        )(uid, iid, slab)

        out = out[:B]
        input_dense = out[:, 0:E2]
        out_final = out[:, E2:E2 + nb[-1]]
        embedding = out[:, E2 + nb[-1]:]
        return out_final, input_dense, embedding

    return forward


# ---------------------------------------------------------------------------
# Parameter construction (deterministic, synthetic)
# ---------------------------------------------------------------------------
def init_params(key, nb, user_num, item_num, emb_size):
    keys = iter(jax.random.split(key, 64))

    def mat(shape):
        return jax.random.normal(next(keys), shape, jnp.float32) * 0.1

    p = {}
    p["uid_emb"] = mat((user_num, emb_size))
    p["item_emb"] = mat((item_num, emb_size))
    p["cross_w"] = mat((emb_size * 2, emb_size * 2))
    p["cross_b"] = mat((emb_size * 2,))

    # Dense_dict[(j, i)] : Linear(nb[j] -> nb[i]) + Dropout + ReLU
    p["dense"] = {}
    for i in range(1, len(nb)):
        for j in range(i):
            p["dense"][(j, i)] = {"w": mat((nb[j], nb[i])), "b": mat((nb[i],))}

    # attention_list[k]: Attention(feature=nb[k+2], num=k+2, hidden=nb[k+2])
    p["att"] = []
    for k in range(3):
        num = k + 2
        feat = nb[k + 2]
        p["att"].append({
            "w1": mat((feat * num, feat)),
            "b1": mat((feat,)),
            "w2": mat((feat, num)),
            "b2": mat((num,)),
        })
    return p


# ---------------------------------------------------------------------------
# Pure-JAX reference (structural sanity check)
# ---------------------------------------------------------------------------
def _reference_forward(params, user_vector, item_vector, nb):
    ue = jnp.take(params["uid_emb"], user_vector, axis=0)
    ie = jnp.take(params["item_emb"], item_vector, axis=0)
    embedding = jnp.concatenate([ue, ie], axis=1)
    h0 = embedding @ params["cross_w"] + params["cross_b"]
    hidden = {0: h0}
    for i in range(1, len(nb)):
        outs = [jnp.maximum(hidden[j] @ params["dense"][(j, i)]["w"]
                            + params["dense"][(j, i)]["b"], 0.0) for j in range(i)]
        if i == 1:
            hidden[i] = outs[0]
            continue
        ap = params["att"][i - 2]
        att_vec = jnp.concatenate(outs, axis=1)
        hmid = jnp.maximum(att_vec @ ap["w1"] + ap["b1"], 0.0)
        wgt = jax.nn.softmax(hmid @ ap["w2"] + ap["b2"], axis=1)
        out = wgt[:, 0:1] * outs[0]
        for x in range(1, i):
            out = out + wgt[:, x:x + 1] * outs[x]
        hidden[i] = out
    return hidden[len(nb) - 1], h0, embedding


# ---------------------------------------------------------------------------
if __name__ == "__main__":
    # nb_hidden_list[0] must be 2*embedding_size; len(nb_hidden_list) == 5
    # (attention_list has exactly 3 entries).
    embedding_size = 16
    nb_hidden_list = [32, 32, 16, 16, 8]
    user_num, item_num = 10, 12
    batch = 64

    key = jax.random.PRNGKey(0)
    pkey, ukey, ikey = jax.random.split(key, 3)
    params = init_params(pkey, nb_hidden_list, user_num, item_num, embedding_size)

    user_vector = jax.random.randint(ukey, (batch,), 0, user_num, dtype=jnp.int32)
    item_vector = jax.random.randint(ikey, (batch,), 0, item_num, dtype=jnp.int32)

    forward = build_fused_forward(params, nb_hidden_list, user_num, item_num,
                                  embedding_size)
    out_final, input_dense, embedding = forward(user_vector, item_vector)
    jax.block_until_ready((out_final, input_dense, embedding))

    assert out_final.shape == (batch, nb_hidden_list[-1])
    assert input_dense.shape == (batch, embedding_size * 2)
    assert embedding.shape == (batch, embedding_size * 2)

    ref_final, ref_dense, ref_emb = _reference_forward(
        params, user_vector, item_vector, nb_hidden_list)
    assert jnp.allclose(embedding.astype(jnp.float32), ref_emb, atol=2e-2, rtol=2e-2)
    assert jnp.allclose(input_dense.astype(jnp.float32), ref_dense, atol=2e-2, rtol=2e-2)
    assert jnp.allclose(out_final.astype(jnp.float32), ref_final, atol=2e-2, rtol=2e-2)

    print("KERNEL_OK")
</pallas_src>

<mosaic_0001>
module attributes {stable_mosaic.version = 11 : i64} {
  func.func @_fused_forward_kernel(%arg0: i32, %arg1: memref<64x1xi32, #tpu.memory_space<vmem>>, %arg2: memref<64x1xi32, #tpu.memory_space<vmem>>, %arg3: memref<624x128xf32, #tpu.memory_space<vmem>>, %arg4: memref<64x72xbf16, #tpu.memory_space<vmem>>) attributes {dimension_semantics = [#tpu.dimension_semantics<parallel>], iteration_bounds = array<i64: 1>, scalar_prefetch = 0 : i64, scratch_operands = 0 : i64, tpu.core_type = #tpu.core_type<tc>, window_params = [{transform_indices = @transform_0, window_bounds = array<i64: 64, 1>}, {transform_indices = @transform_1, window_bounds = array<i64: 64, 1>}, {pipeline_mode = #tpu.pipeline_mode<synchronous>, transform_indices = @transform_2, window_bounds = array<i64: 624, 128>}, {transform_indices = @transform_3, window_bounds = array<i64: 64, 72>}]} {
    %0 = tpu.iota {dimensions = array<i32: 1>} : vector<64x10xi32>
    %c0 = arith.constant 0 : index
    %c0_0 = arith.constant 0 : index
    %1 = vector.load %arg1[%c0, %c0_0] : memref<64x1xi32, #tpu.memory_space<vmem>>, vector<64x1xi32>
    %2 = vector.broadcast %1 : vector<64x1xi32> to vector<64x10xi32>
    %3 = arith.cmpi eq, %2, %0 : vector<64x10xi32>
    %4 = arith.extui %3 : vector<64x10xi1> to vector<64x10xi32>
    %5 = arith.sitofp %4 : vector<64x10xi32> to vector<64x10xf32>
    %c0_1 = arith.constant 0 : index
    %c0_2 = arith.constant 0 : index
    %6 = vector.load %arg3[%c0_1, %c0_2] : memref<624x128xf32, #tpu.memory_space<vmem>>, vector<10x16xf32>
    %cst = arith.constant dense<0.000000e+00> : vector<64x16xf32>
    %7 = tpu.matmul %5, %6, %cst {dimension_numbers = #tpu.dot_dimension_numbers<[1], [0], [0], [1], [0, 0, 1, 1], [], []>} : vector<64x10xf32>, vector<10x16xf32>, vector<64x16xf32> -> vector<64x16xf32>
    %8 = tpu.iota {dimensions = array<i32: 1>} : vector<64x12xi32>
    %c0_3 = arith.constant 0 : index
    %c0_4 = arith.constant 0 : index
    %9 = vector.load %arg2[%c0_3, %c0_4] : memref<64x1xi32, #tpu.memory_space<vmem>>, vector<64x1xi32>
    %10 = vector.broadcast %9 : vector<64x1xi32> to vector<64x12xi32>
    %11 = arith.cmpi eq, %10, %8 : vector<64x12xi32>
    %12 = arith.extui %11 : vector<64x12xi1> to vector<64x12xi32>
    %13 = arith.sitofp %12 : vector<64x12xi32> to vector<64x12xf32>
    %c16 = arith.constant 16 : index
    %c0_5 = arith.constant 0 : index
    %14 = vector.load %arg3[%c16, %c0_5] : memref<624x128xf32, #tpu.memory_space<vmem>>, vector<12x16xf32>
    %cst_6 = arith.constant dense<0.000000e+00> : vector<64x16xf32>
    %15 = tpu.matmul %13, %14, %cst_6 {dimension_numbers = #tpu.dot_dimension_numbers<[1], [0], [0], [1], [0, 0, 1, 1], [], []>} : vector<64x12xf32>, vector<12x16xf32>, vector<64x16xf32> -> vector<64x16xf32>
    %16 = arith.truncf %7 : vector<64x16xf32> to vector<64x16xbf16>
    %c0_7 = arith.constant 0 : index
    %c40 = arith.constant 40 : index
    %17 = vector.load %arg4[%c0_7, %c40] : memref<64x72xbf16, #tpu.memory_space<vmem>>, vector<64x16xbf16>
    tpu.vector_store %arg4[%c0_7, %c40], %16 {strides = array<i32>} : memref<64x72xbf16, #tpu.memory_space<vmem>>, vector<64x16xbf16>,
    %18 = arith.truncf %15 : vector<64x16xf32> to vector<64x16xbf16>
    %c0_8 = arith.constant 0 : index
    %c56 = arith.constant 56 : index
    %19 = vector.load %arg4[%c0_8, %c56] : memref<64x72xbf16, #tpu.memory_space<vmem>>, vector<64x16xbf16>
    tpu.vector_store %arg4[%c0_8, %c56], %18 {strides = array<i32>} : memref<64x72xbf16, #tpu.memory_space<vmem>>, vector<64x16xbf16>,
    %c32 = arith.constant 32 : index
    %c0_9 = arith.constant 0 : index
    %20 = vector.load %arg3[%c32, %c0_9] : memref<624x128xf32, #tpu.memory_space<vmem>>, vector<16x32xf32>
    %cst_10 = arith.constant dense<0.000000e+00> : vector<64x32xf32>
    %21 = tpu.matmul %7, %20, %cst_10 {dimension_numbers = #tpu.dot_dimension_numbers<[1], [0], [0], [1], [0, 0, 1, 1], [], []>} : vector<64x16xf32>, vector<16x32xf32>, vector<64x32xf32> -> vector<64x32xf32>
    %c48 = arith.constant 48 : index
    %c0_11 = arith.constant 0 : index
    %22 = vector.load %arg3[%c48, %c0_11] : memref<624x128xf32, #tpu.memory_space<vmem>>, vector<16x32xf32>
    %cst_12 = arith.constant dense<0.000000e+00> : vector<64x32xf32>
    %23 = tpu.matmul %15, %22, %cst_12 {dimension_numbers = #tpu.dot_dimension_numbers<[1], [0], [0], [1], [0, 0, 1, 1], [], []>} : vector<64x16xf32>, vector<16x32xf32>, vector<64x32xf32> -> vector<64x32xf32>
    %24 = arith.addf %21, %23 : vector<64x32xf32>
    %c64 = arith.constant 64 : index
    %c0_13 = arith.constant 0 : index
    %25 = vector.load %arg3[%c64, %c0_13] : memref<624x128xf32, #tpu.memory_space<vmem>>, vector<1x32xf32>
    %26 = vector.broadcast %25 : vector<1x32xf32> to vector<64x32xf32>
    %27 = arith.addf %24, %26 : vector<64x32xf32>
    %28 = arith.truncf %27 : vector<64x32xf32> to vector<64x32xbf16>
    %c0_14 = arith.constant 0 : index
    %c0_15 = arith.constant 0 : index
    %29 = vector.load %arg4[%c0_14, %c0_15] : memref<64x72xbf16, #tpu.memory_space<vmem>>, vector<64x32xbf16>
    tpu.vector_store %arg4[%c0_14, %c0_15], %28 {strides = array<i32>} : memref<64x72xbf16, #tpu.memory_space<vmem>>, vector<64x32xbf16>,
    %c72 = arith.constant 72 : index
    %c0_16 = arith.constant 0 : index
    %30 = vector.load %arg3[%c72, %c0_16] : memref<624x128xf32, #tpu.memory_space<vmem>>, vector<32x32xf32>
    %cst_17 = arith.constant dense<0.000000e+00> : vector<64x32xf32>
    %31 = tpu.matmul %27, %30, %cst_17 {dimension_numbers = #tpu.dot_dimension_numbers<[1], [0], [0], [1], [0, 0, 1, 1], [], []>} : vector<64x32xf32>, vector<32x32xf32>, vector<64x32xf32> -> vector<64x32xf32>
    %c104 = arith.constant 104 : index
    %c0_18 = arith.constant 0 : index
    %32 = vector.load %arg3[%c104, %c0_18] : memref<624x128xf32, #tpu.memory_space<vmem>>, vector<1x32xf32>
    %33 = vector.broadcast %32 : vector<1x32xf32> to vector<64x32xf32>
    %34 = arith.addf %31, %33 : vector<64x32xf32>
    %cst_19 = arith.constant 0.000000e+00 : f32
    %35 = vector.broadcast %cst_19 : f32 to vector<64x32xf32>
    %36 = arith.maximumf %34, %35 : vector<64x32xf32>
    %c112 = arith.constant 112 : index
    %c0_20 = arith.constant 0 : index
    %37 = vector.load %arg3[%c112, %c0_20] : memref<624x128xf32, #tpu.memory_space<vmem>>, vector<32x16xf32>
    %cst_21 = arith.constant dense<0.000000e+00> : vector<64x16xf32>
    %38 = tpu.matmul %27, %37, %cst_21 {dimension_numbers = #tpu.dot_dimension_numbers<[1], [0], [0], [1], [0, 0, 1, 1], [], []>} : vector<64x32xf32>, vector<32x16xf32>, vector<64x16xf32> -> vector<64x16xf32>
    %c144 = arith.constant 144 : index
    %c0_22 = arith.constant 0 : index
    %39 = vector.load %arg3[%c144, %c0_22] : memref<624x128xf32, #tpu.memory_space<vmem>>, vector<1x16xf32>
    %40 = vector.broadcast %39 : vector<1x16xf32> to vector<64x16xf32>
    %41 = arith.addf %38, %40 : vector<64x16xf32>
    %cst_23 = arith.constant 0.000000e+00 : f32
    %42 = vector.broadcast %cst_23 : f32 to vector<64x16xf32>
    %43 = arith.maximumf %41, %42 : vector<64x16xf32>
    %c152 = arith.constant 152 : index
    %c0_24 = arith.constant 0 : index
    %44 = vector.load %arg3[%c152, %c0_24] : memref<624x128xf32, #tpu.memory_space<vmem>>, vector<32x16xf32>
    %cst_25 = arith.constant dense<0.000000e+00> : vector<64x16xf32>
    %45 = tpu.matmul %36, %44, %cst_25 {dimension_numbers = #tpu.dot_dimension_numbers<[1], [0], [0], [1], [0, 0, 1, 1], [], []>} : vector<64x32xf32>, vector<32x16xf32>, vector<64x16xf32> -> vector<64x16xf32>
    %c184 = arith.constant 184 : index
    %c0_26 = arith.constant 0 : index
    %46 = vector.load %arg3[%c184, %c0_26] : memref<624x128xf32, #tpu.memory_space<vmem>>, vector<1x16xf32>
    %47 = vector.broadcast %46 : vector<1x16xf32> to vector<64x16xf32>
    %48 = arith.addf %45, %47 : vector<64x16xf32>
    %cst_27 = arith.constant 0.000000e+00 : f32
    %49 = vector.broadcast %cst_27 : f32 to vector<64x16xf32>
    %50 = arith.maximumf %48, %49 : vector<64x16xf32>
    %c424 = arith.constant 424 : index
    %c0_28 = arith.constant 0 : index
    %51 = vector.load %arg3[%c424, %c0_28] : memref<624x128xf32, #tpu.memory_space<vmem>>, vector<16x16xf32>
    %cst_29 = arith.constant dense<0.000000e+00> : vector<64x16xf32>
    %52 = tpu.matmul %43, %51, %cst_29 {dimension_numbers = #tpu.dot_dimension_numbers<[1], [0], [0], [1], [0, 0, 1, 1], [], []>} : vector<64x16xf32>, vector<16x16xf32>, vector<64x16xf32> -> vector<64x16xf32>
    %c440 = arith.constant 440 : index
    %c0_30 = arith.constant 0 : index
    %53 = vector.load %arg3[%c440, %c0_30] : memref<624x128xf32, #tpu.memory_space<vmem>>, vector<16x16xf32>
    %cst_31 = arith.constant dense<0.000000e+00> : vector<64x16xf32>
    %54 = tpu.matmul %50, %53, %cst_31 {dimension_numbers = #tpu.dot_dimension_numbers<[1], [0], [0], [1], [0, 0, 1, 1], [], []>} : vector<64x16xf32>, vector<16x16xf32>, vector<64x16xf32> -> vector<64x16xf32>
    %55 = arith.addf %52, %54 : vector<64x16xf32>
    %c456 = arith.constant 456 : index
    %c0_32 = arith.constant 0 : index
    %56 = vector.load %arg3[%c456, %c0_32] : memref<624x128xf32, #tpu.memory_space<vmem>>, vector<1x16xf32>
    %57 = vector.broadcast %56 : vector<1x16xf32> to vector<64x16xf32>
    %58 = arith.addf %55, %57 : vector<64x16xf32>
    %cst_33 = arith.constant 0.000000e+00 : f32
    %59 = vector.broadcast %cst_33 : f32 to vector<64x16xf32>
    %60 = arith.maximumf %58, %59 : vector<64x16xf32>
    %c464 = arith.constant 464 : index
    %c0_34 = arith.constant 0 : index
    %61 = vector.load %arg3[%c464, %c0_34] : memref<624x128xf32, #tpu.memory_space<vmem>>, vector<16x2xf32>
    %cst_35 = arith.constant dense<0.000000e+00> : vector<64x2xf32>
    %62 = tpu.matmul %60, %61, %cst_35 {dimension_numbers = #tpu.dot_dimension_numbers<[1], [0], [0], [1], [0, 0, 1, 1], [], []>} : vector<64x16xf32>, vector<16x2xf32>, vector<64x2xf32> -> vector<64x2xf32>
    %c480 = arith.constant 480 : index
    %c0_36 = arith.constant 0 : index
    %63 = vector.load %arg3[%c480, %c0_36] : memref<624x128xf32, #tpu.memory_space<vmem>>, vector<1x2xf32>
    %64 = vector.broadcast %63 : vector<1x2xf32> to vector<64x2xf32>
    %65 = arith.addf %62, %64 : vector<64x2xf32>
    %cst_37 = arith.constant dense<0xFF800000> : vector<64xf32>
    %66 = vector.multi_reduction <maximumf>, %65, %cst_37 [1] : vector<64x2xf32> to vector<64xf32>
    %67 = vector.shape_cast %66 : vector<64xf32> to vector<64x1xf32>
    %68 = vector.broadcast %67 : vector<64x1xf32> to vector<64x2xf32>
    %69 = arith.subf %65, %68 : vector<64x2xf32>
    %70 = math.exp %69 : vector<64x2xf32>
    %cst_38 = arith.constant dense<0.000000e+00> : vector<64xf32>
    %71 = vector.multi_reduction <add>, %70, %cst_38 [1] : vector<64x2xf32> to vector<64xf32>
    %72 = vector.shape_cast %71 : vector<64xf32> to vector<64x1xf32>
    %73 = tpu.reciprocal %72 {approx = true} : vector<64x1xf32> -> vector<64x1xf32>
    %74 = vector.broadcast %73 : vector<64x1xf32> to vector<64x2xf32>
    %75 = arith.mulf %70, %74 : vector<64x2xf32>
    %76 = vector.extract_strided_slice %75 {offsets = [0, 0], sizes = [64, 1], strides = [1, 1]} : vector<64x2xf32> to vector<64x1xf32>
    %77 = vector.broadcast %76 : vector<64x1xf32> to vector<64x16xf32>
    %78 = arith.mulf %77, %43 : vector<64x16xf32>
    %79 = vector.extract_strided_slice %75 {offsets = [0, 1], sizes = [64, 1], strides = [1, 1]} : vector<64x2xf32> to vector<64x1xf32>
    %80 = vector.broadcast %79 : vector<64x1xf32> to vector<64x16xf32>
    %81 = arith.mulf %80, %50 : vector<64x16xf32>
    %82 = arith.addf %78, %81 : vector<64x16xf32>
    %c192 = arith.constant 192 : index
    %c0_39 = arith.constant 0 : index
    %83 = vector.load %arg3[%c192, %c0_39] : memref<624x128xf32, #tpu.memory_space<vmem>>, vector<32x16xf32>
    %cst_40 = arith.constant dense<0.000000e+00> : vector<64x16xf32>
    %84 = tpu.matmul %27, %83, %cst_40 {dimension_numbers = #tpu.dot_dimension_numbers<[1], [0], [0], [1], [0, 0, 1, 1], [], []>} : vector<64x32xf32>, vector<32x16xf32>, vector<64x16xf32> -> vector<64x16xf32>
    %c224 = arith.constant 224 : index
    %c0_41 = arith.constant 0 : index
    %85 = vector.load %arg3[%c224, %c0_41] : memref<624x128xf32, #tpu.memory_space<vmem>>, vector<1x16xf32>
    %86 = vector.broadcast %85 : vector<1x16xf32> to vector<64x16xf32>
    %87 = arith.addf %84, %86 : vector<64x16xf32>
    %cst_42 = arith.constant 0.000000e+00 : f32
    %88 = vector.broadcast %cst_42 : f32 to vector<64x16xf32>
    %89 = arith.maximumf %87, %88 : vector<64x16xf32>
    %c232 = arith.constant 232 : index
    %c0_43 = arith.constant 0 : index
    %90 = vector.load %arg3[%c232, %c0_43] : memref<624x128xf32, #tpu.memory_space<vmem>>, vector<32x16xf32>
    %cst_44 = arith.constant dense<0.000000e+00> : vector<64x16xf32>
    %91 = tpu.matmul %36, %90, %cst_44 {dimension_numbers = #tpu.dot_dimension_numbers<[1], [0], [0], [1], [0, 0, 1, 1], [], []>} : vector<64x32xf32>, vector<32x16xf32>, vector<64x16xf32> -> vector<64x16xf32>
    %c264 = arith.constant 264 : index
    %c0_45 = arith.constant 0 : index
    %92 = vector.load %arg3[%c264, %c0_45] : memref<624x128xf32, #tpu.memory_space<vmem>>, vector<1x16xf32>
    %93 = vector.broadcast %92 : vector<1x16xf32> to vector<64x16xf32>
    %94 = arith.addf %91, %93 : vector<64x16xf32>
    %cst_46 = arith.constant 0.000000e+00 : f32
    %95 = vector.broadcast %cst_46 : f32 to vector<64x16xf32>
    %96 = arith.maximumf %94, %95 : vector<64x16xf32>
    %c272 = arith.constant 272 : index
    %c0_47 = arith.constant 0 : index
    %97 = vector.load %arg3[%c272, %c0_47] : memref<624x128xf32, #tpu.memory_space<vmem>>, vector<16x16xf32>
    %cst_48 = arith.constant dense<0.000000e+00> : vector<64x16xf32>
    %98 = tpu.matmul %82, %97, %cst_48 {dimension_numbers = #tpu.dot_dimension_numbers<[1], [0], [0], [1], [0, 0, 1, 1], [], []>} : vector<64x16xf32>, vector<16x16xf32>, vector<64x16xf32> -> vector<64x16xf32>
    %c288 = arith.constant 288 : index
    %c0_49 = arith.constant 0 : index
    %99 = vector.load %arg3[%c288, %c0_49] : memref<624x128xf32, #tpu.memory_space<vmem>>, vector<1x16xf32>
    %100 = vector.broadcast %99 : vector<1x16xf32> to vector<64x16xf32>
    %101 = arith.addf %98, %100 : vector<64x16xf32>
    %cst_50 = arith.constant 0.000000e+00 : f32
    %102 = vector.broadcast %cst_50 : f32 to vector<64x16xf32>
    %103 = arith.maximumf %101, %102 : vector<64x16xf32>
    %c488 = arith.constant 488 : index
    %c0_51 = arith.constant 0 : index
    %104 = vector.load %arg3[%c488, %c0_51] : memref<624x128xf32, #tpu.memory_space<vmem>>, vector<16x16xf32>
    %cst_52 = arith.constant dense<0.000000e+00> : vector<64x16xf32>
    %105 = tpu.matmul %89, %104, %cst_52 {dimension_numbers = #tpu.dot_dimension_numbers<[1], [0], [0], [1], [0, 0, 1, 1], [], []>} : vector<64x16xf32>, vector<16x16xf32>, vector<64x16xf32> -> vector<64x16xf32>
    %c504 = arith.constant 504 : index
    %c0_53 = arith.constant 0 : index
    %106 = vector.load %arg3[%c504, %c0_53] : memref<624x128xf32, #tpu.memory_space<vmem>>, vector<16x16xf32>
    %cst_54 = arith.constant dense<0.000000e+00> : vector<64x16xf32>
    %107 = tpu.matmul %96, %106, %cst_54 {dimension_numbers = #tpu.dot_dimension_numbers<[1], [0], [0], [1], [0, 0, 1, 1], [], []>} : vector<64x16xf32>, vector<16x16xf32>, vector<64x16xf32> -> vector<64x16xf32>
    %108 = arith.addf %105, %107 : vector<64x16xf32>
    %c520 = arith.constant 520 : index
    %c0_55 = arith.constant 0 : index
    %109 = vector.load %arg3[%c520, %c0_55] : memref<624x128xf32, #tpu.memory_space<vmem>>, vector<16x16xf32>
    %cst_56 = arith.constant dense<0.000000e+00> : vector<64x16xf32>
    %110 = tpu.matmul %103, %109, %cst_56 {dimension_numbers = #tpu.dot_dimension_numbers<[1], [0], [0], [1], [0, 0, 1, 1], [], []>} : vector<64x16xf32>, vector<16x16xf32>, vector<64x16xf32> -> vector<64x16xf32>
    %111 = arith.addf %108, %110 : vector<64x16xf32>
    %c536 = arith.constant 536 : index
    %c0_57 = arith.constant 0 : index
    %112 = vector.load %arg3[%c536, %c0_57] : memref<624x128xf32, #tpu.memory_space<vmem>>, vector<1x16xf32>
    %113 = vector.broadcast %112 : vector<1x16xf32> to vector<64x16xf32>
    %114 = arith.addf %111, %113 : vector<64x16xf32>
    %cst_58 = arith.constant 0.000000e+00 : f32
    %115 = vector.broadcast %cst_58 : f32 to vector<64x16xf32>
    %116 = arith.maximumf %114, %115 : vector<64x16xf32>
    %c544 = arith.constant 544 : index
    %c0_59 = arith.constant 0 : index
    %117 = vector.load %arg3[%c544, %c0_59] : memref<624x128xf32, #tpu.memory_space<vmem>>, vector<16x3xf32>
    %cst_60 = arith.constant dense<0.000000e+00> : vector<64x3xf32>
    %118 = tpu.matmul %116, %117, %cst_60 {dimension_numbers = #tpu.dot_dimension_numbers<[1], [0], [0], [1], [0, 0, 1, 1], [], []>} : vector<64x16xf32>, vector<16x3xf32>, vector<64x3xf32> -> vector<64x3xf32>
    %c560 = arith.constant 560 : index
    %c0_61 = arith.constant 0 : index
    %119 = vector.load %arg3[%c560, %c0_61] : memref<624x128xf32, #tpu.memory_space<vmem>>, vector<1x3xf32>
    %120 = vector.broadcast %119 : vector<1x3xf32> to vector<64x3xf32>
    %121 = arith.addf %118, %120 : vector<64x3xf32>
    %cst_62 = arith.constant dense<0xFF800000> : vector<64xf32>
    %122 = vector.multi_reduction <maximumf>, %121, %cst_62 [1] : vector<64x3xf32> to vector<64xf32>
    %123 = vector.shape_cast %122 : vector<64xf32> to vector<64x1xf32>
    %124 = vector.broadcast %123 : vector<64x1xf32> to vector<64x3xf32>
    %125 = arith.subf %121, %124 : vector<64x3xf32>
    %126 = math.exp %125 : vector<64x3xf32>
    %cst_63 = arith.constant dense<0.000000e+00> : vector<64xf32>
    %127 = vector.multi_reduction <add>, %126, %cst_63 [1] : vector<64x3xf32> to vector<64xf32>
    %128 = vector.shape_cast %127 : vector<64xf32> to vector<64x1xf32>
    %129 = tpu.reciprocal %128 {approx = true} : vector<64x1xf32> -> vector<64x1xf32>
    %130 = vector.broadcast %129 : vector<64x1xf32> to vector<64x3xf32>
    %131 = arith.mulf %126, %130 : vector<64x3xf32>
    %132 = vector.extract_strided_slice %131 {offsets = [0, 0], sizes = [64, 1], strides = [1, 1]} : vector<64x3xf32> to vector<64x1xf32>
    %133 = vector.broadcast %132 : vector<64x1xf32> to vector<64x16xf32>
    %134 = arith.mulf %133, %89 : vector<64x16xf32>
    %135 = vector.extract_strided_slice %131 {offsets = [0, 1], sizes = [64, 1], strides = [1, 1]} : vector<64x3xf32> to vector<64x1xf32>
    %136 = vector.broadcast %135 : vector<64x1xf32> to vector<64x16xf32>
    %137 = arith.mulf %136, %96 : vector<64x16xf32>
    %138 = arith.addf %134, %137 : vector<64x16xf32>
    %139 = vector.extract_strided_slice %131 {offsets = [0, 2], sizes = [64, 1], strides = [1, 1]} : vector<64x3xf32> to vector<64x1xf32>
    %140 = vector.broadcast %139 : vector<64x1xf32> to vector<64x16xf32>
    %141 = arith.mulf %140, %103 : vector<64x16xf32>
    %142 = arith.addf %138, %141 : vector<64x16xf32>
    %c296 = arith.constant 296 : index
    %c0_64 = arith.constant 0 : index
    %143 = vector.load %arg3[%c296, %c0_64] : memref<624x128xf32, #tpu.memory_space<vmem>>, vector<32x8xf32>
    %cst_65 = arith.constant dense<0.000000e+00> : vector<64x8xf32>
    %144 = tpu.matmul %27, %143, %cst_65 {dimension_numbers = #tpu.dot_dimension_numbers<[1], [0], [0], [1], [0, 0, 1, 1], [], []>} : vector<64x32xf32>, vector<32x8xf32>, vector<64x8xf32> -> vector<64x8xf32>
    %c328 = arith.constant 328 : index
    %c0_66 = arith.constant 0 : index
    %145 = vector.load %arg3[%c328, %c0_66] : memref<624x128xf32, #tpu.memory_space<vmem>>, vector<1x8xf32>
    %146 = vector.broadcast %145 : vector<1x8xf32> to vector<64x8xf32>
    %147 = arith.addf %144, %146 : vector<64x8xf32>
    %cst_67 = arith.constant 0.000000e+00 : f32
    %148 = vector.broadcast %cst_67 : f32 to vector<64x8xf32>
    %149 = arith.maximumf %147, %148 : vector<64x8xf32>
    %c336 = arith.constant 336 : index
    %c0_68 = arith.constant 0 : index
    %150 = vector.load %arg3[%c336, %c0_68] : memref<624x128xf32, #tpu.memory_space<vmem>>, vector<32x8xf32>
    %cst_69 = arith.constant dense<0.000000e+00> : vector<64x8xf32>
    %151 = tpu.matmul %36, %150, %cst_69 {dimension_numbers = #tpu.dot_dimension_numbers<[1], [0], [0], [1], [0, 0, 1, 1], [], []>} : vector<64x32xf32>, vector<32x8xf32>, vector<64x8xf32> -> vector<64x8xf32>
    %c368 = arith.constant 368 : index
    %c0_70 = arith.constant 0 : index
    %152 = vector.load %arg3[%c368, %c0_70] : memref<624x128xf32, #tpu.memory_space<vmem>>, vector<1x8xf32>
    %153 = vector.broadcast %152 : vector<1x8xf32> to vector<64x8xf32>
    %154 = arith.addf %151, %153 : vector<64x8xf32>
    %cst_71 = arith.constant 0.000000e+00 : f32
    %155 = vector.broadcast %cst_71 : f32 to vector<64x8xf32>
    %156 = arith.maximumf %154, %155 : vector<64x8xf32>
    %c376 = arith.constant 376 : index
    %c0_72 = arith.constant 0 : index
    %157 = vector.load %arg3[%c376, %c0_72] : memref<624x128xf32, #tpu.memory_space<vmem>>, vector<16x8xf32>
    %cst_73 = arith.constant dense<0.000000e+00> : vector<64x8xf32>
    %158 = tpu.matmul %82, %157, %cst_73 {dimension_numbers = #tpu.dot_dimension_numbers<[1], [0], [0], [1], [0, 0, 1, 1], [], []>} : vector<64x16xf32>, vector<16x8xf32>, vector<64x8xf32> -> vector<64x8xf32>
    %c392 = arith.constant 392 : index
    %c0_74 = arith.constant 0 : index
    %159 = vector.load %arg3[%c392, %c0_74] : memref<624x128xf32, #tpu.memory_space<vmem>>, vector<1x8xf32>
    %160 = vector.broadcast %159 : vector<1x8xf32> to vector<64x8xf32>
    %161 = arith.addf %158, %160 : vector<64x8xf32>
    %cst_75 = arith.constant 0.000000e+00 : f32
    %162 = vector.broadcast %cst_75 : f32 to vector<64x8xf32>
    %163 = arith.maximumf %161, %162 : vector<64x8xf32>
    %c400 = arith.constant 400 : index
    %c0_76 = arith.constant 0 : index
    %164 = vector.load %arg3[%c400, %c0_76] : memref<624x128xf32, #tpu.memory_space<vmem>>, vector<16x8xf32>
    %cst_77 = arith.constant dense<0.000000e+00> : vector<64x8xf32>
    %165 = tpu.matmul %142, %164, %cst_77 {dimension_numbers = #tpu.dot_dimension_numbers<[1], [0], [0], [1], [0, 0, 1, 1], [], []>} : vector<64x16xf32>, vector<16x8xf32>, vector<64x8xf32> -> vector<64x8xf32>
    %c416 = arith.constant 416 : index
    %c0_78 = arith.constant 0 : index
    %166 = vector.load %arg3[%c416, %c0_78] : memref<624x128xf32, #tpu.memory_space<vmem>>, vector<1x8xf32>
    %167 = vector.broadcast %166 : vector<1x8xf32> to vector<64x8xf32>
    %168 = arith.addf %165, %167 : vector<64x8xf32>
    %cst_79 = arith.constant 0.000000e+00 : f32
    %169 = vector.broadcast %cst_79 : f32 to vector<64x8xf32>
    %170 = arith.maximumf %168, %169 : vector<64x8xf32>
    %c568 = arith.constant 568 : index
    %c0_80 = arith.constant 0 : index
    %171 = vector.load %arg3[%c568, %c0_80] : memref<624x128xf32, #tpu.memory_space<vmem>>, vector<8x8xf32>
    %cst_81 = arith.constant dense<0.000000e+00> : vector<64x8xf32>
    %172 = tpu.matmul %149, %171, %cst_81 {dimension_numbers = #tpu.dot_dimension_numbers<[1], [0], [0], [1], [0, 0, 1, 1], [], []>} : vector<64x8xf32>, vector<8x8xf32>, vector<64x8xf32> -> vector<64x8xf32>
    %c576 = arith.constant 576 : index
    %c0_82 = arith.constant 0 : index
    %173 = vector.load %arg3[%c576, %c0_82] : memref<624x128xf32, #tpu.memory_space<vmem>>, vector<8x8xf32>
    %cst_83 = arith.constant dense<0.000000e+00> : vector<64x8xf32>
    %174 = tpu.matmul %156, %173, %cst_83 {dimension_numbers = #tpu.dot_dimension_numbers<[1], [0], [0], [1], [0, 0, 1, 1], [], []>} : vector<64x8xf32>, vector<8x8xf32>, vector<64x8xf32> -> vector<64x8xf32>
    %175 = arith.addf %172, %174 : vector<64x8xf32>
    %c584 = arith.constant 584 : index
    %c0_84 = arith.constant 0 : index
    %176 = vector.load %arg3[%c584, %c0_84] : memref<624x128xf32, #tpu.memory_space<vmem>>, vector<8x8xf32>
    %cst_85 = arith.constant dense<0.000000e+00> : vector<64x8xf32>
    %177 = tpu.matmul %163, %176, %cst_85 {dimension_numbers = #tpu.dot_dimension_numbers<[1], [0], [0], [1], [0, 0, 1, 1], [], []>} : vector<64x8xf32>, vector<8x8xf32>, vector<64x8xf32> -> vector<64x8xf32>
    %178 = arith.addf %175, %177 : vector<64x8xf32>
    %c592 = arith.constant 592 : index
    %c0_86 = arith.constant 0 : index
    %179 = vector.load %arg3[%c592, %c0_86] : memref<624x128xf32, #tpu.memory_space<vmem>>, vector<8x8xf32>
    %cst_87 = arith.constant dense<0.000000e+00> : vector<64x8xf32>
    %180 = tpu.matmul %170, %179, %cst_87 {dimension_numbers = #tpu.dot_dimension_numbers<[1], [0], [0], [1], [0, 0, 1, 1], [], []>} : vector<64x8xf32>, vector<8x8xf32>, vector<64x8xf32> -> vector<64x8xf32>
    %181 = arith.addf %178, %180 : vector<64x8xf32>
    %c600 = arith.constant 600 : index
    %c0_88 = arith.constant 0 : index
    %182 = vector.load %arg3[%c600, %c0_88] : memref<624x128xf32, #tpu.memory_space<vmem>>, vector<1x8xf32>
    %183 = vector.broadcast %182 : vector<1x8xf32> to vector<64x8xf32>
    %184 = arith.addf %181, %183 : vector<64x8xf32>
    %cst_89 = arith.constant 0.000000e+00 : f32
    %185 = vector.broadcast %cst_89 : f32 to vector<64x8xf32>
    %186 = arith.maximumf %184, %185 : vector<64x8xf32>
    %c608 = arith.constant 608 : index
    %c0_90 = arith.constant 0 : index
    %187 = vector.load %arg3[%c608, %c0_90] : memref<624x128xf32, #tpu.memory_space<vmem>>, vector<8x4xf32>
    %cst_91 = arith.constant dense<0.000000e+00> : vector<64x4xf32>
    %188 = tpu.matmul %186, %187, %cst_91 {dimension_numbers = #tpu.dot_dimension_numbers<[1], [0], [0], [1], [0, 0, 1, 1], [], []>} : vector<64x8xf32>, vector<8x4xf32>, vector<64x4xf32> -> vector<64x4xf32>
    %c616 = arith.constant 616 : index
    %c0_92 = arith.constant 0 : index
    %189 = vector.load %arg3[%c616, %c0_92] : memref<624x128xf32, #tpu.memory_space<vmem>>, vector<1x4xf32>
    %190 = vector.broadcast %189 : vector<1x4xf32> to vector<64x4xf32>
    %191 = arith.addf %188, %190 : vector<64x4xf32>
    %cst_93 = arith.constant dense<0xFF800000> : vector<64xf32>
    %192 = vector.multi_reduction <maximumf>, %191, %cst_93 [1] : vector<64x4xf32> to vector<64xf32>
    %193 = vector.shape_cast %192 : vector<64xf32> to vector<64x1xf32>
    %194 = vector.broadcast %193 : vector<64x1xf32> to vector<64x4xf32>
    %195 = arith.subf %191, %194 : vector<64x4xf32>
    %196 = math.exp %195 : vector<64x4xf32>
    %cst_94 = arith.constant dense<0.000000e+00> : vector<64xf32>
    %197 = vector.multi_reduction <add>, %196, %cst_94 [1] : vector<64x4xf32> to vector<64xf32>
    %198 = vector.shape_cast %197 : vector<64xf32> to vector<64x1xf32>
    %199 = tpu.reciprocal %198 {approx = true} : vector<64x1xf32> -> vector<64x1xf32>
    %200 = vector.broadcast %199 : vector<64x1xf32> to vector<64x4xf32>
    %201 = arith.mulf %196, %200 : vector<64x4xf32>
    %202 = vector.extract_strided_slice %201 {offsets = [0, 0], sizes = [64, 1], strides = [1, 1]} : vector<64x4xf32> to vector<64x1xf32>
    %203 = vector.broadcast %202 : vector<64x1xf32> to vector<64x8xf32>
    %204 = arith.mulf %203, %149 : vector<64x8xf32>
    %205 = vector.extract_strided_slice %201 {offsets = [0, 1], sizes = [64, 1], strides = [1, 1]} : vector<64x4xf32> to vector<64x1xf32>
    %206 = vector.broadcast %205 : vector<64x1xf32> to vector<64x8xf32>
    %207 = arith.mulf %206, %156 : vector<64x8xf32>
    %208 = arith.addf %204, %207 : vector<64x8xf32>
    %209 = vector.extract_strided_slice %201 {offsets = [0, 2], sizes = [64, 1], strides = [1, 1]} : vector<64x4xf32> to vector<64x1xf32>
    %210 = vector.broadcast %209 : vector<64x1xf32> to vector<64x8xf32>
    %211 = arith.mulf %210, %163 : vector<64x8xf32>
    %212 = arith.addf %208, %211 : vector<64x8xf32>
    %213 = vector.extract_strided_slice %201 {offsets = [0, 3], sizes = [64, 1], strides = [1, 1]} : vector<64x4xf32> to vector<64x1xf32>
    %214 = vector.broadcast %213 : vector<64x1xf32> to vector<64x8xf32>
    %215 = arith.mulf %214, %170 : vector<64x8xf32>
    %216 = arith.addf %212, %215 : vector<64x8xf32>
    %217 = arith.truncf %216 : vector<64x8xf32> to vector<64x8xbf16>
    %c0_95 = arith.constant 0 : index
    %c32_96 = arith.constant 32 : index
    %218 = vector.load %arg4[%c0_95, %c32_96] : memref<64x72xbf16, #tpu.memory_space<vmem>>, vector<64x8xbf16>
    tpu.vector_store %arg4[%c0_95, %c32_96], %217 {strides = array<i32>} : memref<64x72xbf16, #tpu.memory_space<vmem>>, vector<64x8xbf16>,
    return
  }
  func.func @transform_0(%arg0: i32) -> (i32, i32) {
    %c0_i32 = arith.constant 0 : i32
    %c0_i32_0 = arith.constant 0 : i32
    return %arg0, %c0_i32 : i32, i32
  }
  func.func @transform_1(%arg0: i32) -> (i32, i32) {
    %c0_i32 = arith.constant 0 : i32
    %c0_i32_0 = arith.constant 0 : i32
    return %arg0, %c0_i32 : i32, i32
  }
  func.func @transform_2(%arg0: i32) -> (i32, i32) {
    %c0_i32 = arith.constant 0 : i32
    %c0_i32_0 = arith.constant 0 : i32
    %c0_i32_1 = arith.constant 0 : i32
    return %c0_i32, %c0_i32_0 : i32, i32
  }
  func.func @transform_3(%arg0: i32) -> (i32, i32) {
    %c0_i32 = arith.constant 0 : i32
    %c0_i32_0 = arith.constant 0 : i32
    return %arg0, %c0_i32 : i32, i32
  }
}

</mosaic_0001>

<llo_original>
// kernel: tpu_custom_call.1
$region0: #{tpu_custom_call.1}
  #allocation0 [shape = 'u32[]', space=smem, size = 0x4, offset = 0x4, fixed_abs, tag = 'smem constant byte address 0x4 - core index']
  #allocation1 [shape = 'u32[144,128]{1,0:T(1,128)}', space=vmem, size = 0x12000, scoped, tag = 'internal scratch']
  %s0 = inlined_call_operand.vmem [shape: s32[64,1], index: 0, kind: input, shape index: {}]
  %s1 = inlined_call_operand.vmem [shape: s32[64,1], index: 1, kind: input, shape index: {}]
  %s2 = inlined_call_operand.hbm [shape: f32[624,128], index: 2, kind: input, shape index: {}]
  %s3 = inlined_call_operand.hbm [shape: bf16[64,72], index: 3, kind: output, shape index: {}]
  %s4 = sld [smem:[#allocation0]]
  $region26: #{tpu_custom_call.1} parent=0
    _
  %s6 = ssub.s32 1, %s4
  %s7 = scalar_select 0, %s6, %s4
  $region1: #{tpu_custom_call.1} parent=0
    #allocation2 [shape = 'u8[319488]{0}', space=vmem, size = 0x4e000, scoped, tag = 'input window, operand 2, single buffered']
    #allocation3 [shape = 's32[1]{0}', space=sflag, size = 0x4, scoped, tag = 'scoped memory for tpu_custom_call.1']
    #allocation4 [shape = 's32[1]{0}', space=sflag, size = 0x4, scoped, tag = 'scoped memory for tpu_custom_call.1']
    #allocation5 [shape = 'u8[16384]{0}', space=vmem, size = 0x4000, scoped, tag = 'output window, operand 0, single buffered']
    %8 = vsyncpa [#allocation3], 0
    %9 = vsyncpa [#allocation4], 0
    // Predicated region
    $region2: #{tpu_custom_call.1} parent=1 // pred_check
      _
    $region3: #{tpu_custom_call.1} parent=1 // pred_check_branch
      %11 = sbr.rel (0) target = $region5
    $region4: #{tpu_custom_call.1} parent=1 // pred_region
      _
    $region5: #{tpu_custom_call.1} parent=1 // pred_fallthru
      _
    // Predicated region
    $region6: #{tpu_custom_call.1} parent=1 // pred_check
      _
    $region7: #{tpu_custom_call.1} parent=1 // pred_check_branch
      %13 = sbr.rel (0) target = $region9
    $region8: #{tpu_custom_call.1} parent=1 // pred_region
      _
    $region9: #{tpu_custom_call.1} parent=1 // pred_fallthru
      _
    // Predicated region
    $region10: #{tpu_custom_call.1} parent=1 // pred_check
      _
    $region11: #{tpu_custom_call.1} parent=1 // pred_check_branch
      %15 = sbr.rel (0) target = $region13
    $region12: #{tpu_custom_call.1} parent=1 // pred_region
      %s17 = ssub.s32 9984, 9984
      %18 = vsyncadd [#allocation3], %s17
      %s19 = sshll.u32 [#allocation2], 4
      %s20 = int_to_ptr.vmem [resolvable:$true] %s19
      %25 = dma.hbm_to_vmem [thread:$0]  %s2, 9984, %s20, [#allocation3], 128, 128, 8
    $region13: #{tpu_custom_call.1} parent=1 // pred_fallthru
      _
    // Predicated region
    $region14: #{tpu_custom_call.1} parent=1 // pred_check
      _
    $region15: #{tpu_custom_call.1} parent=1 // pred_check_branch
      %27 = sbr.rel (0) target = $region17
    $region16: #{tpu_custom_call.1} parent=1 // pred_region
      %28 = dma.done [#allocation3], 9984
    $region17: #{tpu_custom_call.1} parent=1 // pred_fallthru
      _
    %v29 = vlaneseq
    %v30 = vand.u32 %v29, 127
    %v31 = vld [vmem:[%s0] sm:$0xff]
    %v32 = vld [vmem:[%s0 + $0x8] sm:$0xff]
    %v33 = vld [vmem:[%s0 + $0x10] sm:$0xff]
    %v34 = vld [vmem:[%s0 + $0x18] sm:$0xff]
    %v35 = vld [vmem:[%s0 + $0x20] sm:$0xff]
    %v36 = vld [vmem:[%s0 + $0x28] sm:$0xff]
    %v37 = vld [vmem:[%s0 + $0x30] sm:$0xff]
    %v38 = vld [vmem:[%s0 + $0x38] sm:$0xff]
    %39 = vset.pattern.permute.xlu0 0
    %40 = vperm.xlu0 %39, %v31
    %v41 = vpop.permute.xlu0 %40
    %42 = vset.pattern.permute.xlu0 0
    %43 = vperm.xlu0 %42, %v32
    %v44 = vpop.permute.xlu0 %43
    %45 = vset.pattern.permute.xlu0 0
    %46 = vperm.xlu0 %45, %v33
    %v47 = vpop.permute.xlu0 %46
    %48 = vset.pattern.permute.xlu0 0
    %49 = vperm.xlu0 %48, %v34
    %v50 = vpop.permute.xlu0 %49
    %51 = vset.pattern.permute.xlu0 0
    %52 = vperm.xlu0 %51, %v35
    %v53 = vpop.permute.xlu0 %52
    %54 = vset.pattern.permute.xlu0 0
    %55 = vperm.xlu0 %54, %v36
    %v56 = vpop.permute.xlu0 %55
    %57 = vset.pattern.permute.xlu0 0
    %58 = vperm.xlu0 %57, %v37
    %v59 = vpop.permute.xlu0 %58
    %60 = vset.pattern.permute.xlu0 0
    %61 = vperm.xlu0 %60, %v38
    %v62 = vpop.permute.xlu0 %61
    %vm63 = vcmp.eq.s32.totalorder %v41, %v30
    %vm64 = vcmp.eq.s32.totalorder %v44, %v30
    %vm65 = vcmp.eq.s32.totalorder %v47, %v30
    %vm66 = vcmp.eq.s32.totalorder %v50, %v30
    %vm67 = vcmp.eq.s32.totalorder %v53, %v30
    %vm68 = vcmp.eq.s32.totalorder %v56, %v30
    %vm69 = vcmp.eq.s32.totalorder %v59, %v30
    %vm70 = vcmp.eq.s32.totalorder %v62, %v30
    %v71 = vsel %vm63, 1, 0
    %v72 = vsel %vm64, 1, 0
    %v73 = vsel %vm65, 1, 0
    %v74 = vsel %vm66, 1, 0
    %v75 = vsel %vm67, 1, 0
    %v76 = vsel %vm68, 1, 0
    %v77 = vsel %vm69, 1, 0
    %v78 = vsel %vm70, 1, 0
    %v79 = vcvt.s32.f32 %v71
    %v80 = vcvt.s32.f32 %v72
    %v81 = vcvt.s32.f32 %v73
    %v82 = vcvt.s32.f32 %v74
    %v83 = vcvt.s32.f32 %v75
    %v84 = vcvt.s32.f32 %v76
    %v85 = vcvt.s32.f32 %v77
    %v86 = vcvt.s32.f32 %v78
    %v87 = vld [vmem:[#allocation2] sm:$0xff]
    %v88 = vld [vmem:[#allocation2 + $0x8] sm:$0x3]
    %vm89 = vcmask 80896
    %v91 = vsel %vm89, %v79, 0
    %v94 = vsel %vm89, %v80, 0
    %v97 = vsel %vm89, %v81, 0
    %v100 = vsel %vm89, %v82, 0
    %v103 = vsel %vm89, %v83, 0
    %v106 = vsel %vm89, %v84, 0
    %v109 = vsel %vm89, %v85, 0
    %v112 = vsel %vm89, %v86, 0
    %vm114 = vcmask 1041408
    %v116 = vsel %vm114, %v88, 0
    %118 = vmatprep.subr.mxu0 0.0
    %119 = vmatpush1.msra.mxu0 0.0
    %120 = vmatprep.subr.mxu0 0.0
    %121 = vmatpush1.msra.mxu0 0.0
    %122 = vmatprep.subr.mxu0 0.0
    %123 = vmatpush1.msra.mxu0 0.0
    %124 = vmatprep.subr.mxu0 0.0
    %125 = vmatpush1.msra.mxu0 0.0
    %126 = vmatprep.subr.mxu0 0.0
    %127 = vmatpush1.msra.mxu0 0.0
    %128 = vmatprep.subr.mxu0 0.0
    %129 = vmatpush1.msra.mxu0 0.0
    %130 = vmatprep.subr.mxu0 0.0
    %131 = vmatpush1.msra.mxu0 0.0
    %132 = vmatprep.subr.mxu0 0.0
    %133 = vmatpush1.msra.mxu0 0.0
    %134 = vmatprep.subr.mxu0 0.0
    %135 = vmatpush1.msra.mxu0 0.0
    %136 = vmatprep.subr.mxu0 0.0
    %137 = vmatpush1.msra.mxu0 0.0
    %138 = vmatprep.subr.mxu0 0.0
    %139 = vmatpush1.msra.mxu0 0.0
    %140 = vmatprep.subr.mxu0 0.0
    %141 = vmatpush1.msra.mxu0 0.0
    %142 = vmatprep.subr.mxu0 0.0
    %143 = vmatpush1.msra.mxu0 0.0
    %144 = vmatprep.subr.mxu0 0.0
    %145 = vmatpush1.msra.mxu0 0.0
    %146 = vmatprep.subr.mxu0 0.0
    %147 = vmatpush1.msra.mxu0 %v116
    %148 = vmatprep.subr.mxu0 0.0
    %149 = vmatpush1.msra.mxu0 %v87
    %150 = vmatprep.subr.mxu0 0.0
    %151 = vmatpush2.msra.mxu0 0.0
    %152 = vmatprep.subr.mxu0 0.0
    %153 = vmatpush2.msra.mxu0 0.0
    %154 = vmatprep.subr.mxu0 0.0
    %155 = vmatpush2.msra.mxu0 0.0
    %156 = vmatprep.subr.mxu0 0.0
    %157 = vmatpush2.msra.mxu0 0.0
    %158 = vmatprep.subr.mxu0 0.0
    %159 = vmatpush2.msra.mxu0 0.0
    %160 = vmatprep.subr.mxu0 0.0
    %161 = vmatpush2.msra.mxu0 0.0
    %162 = vmatprep.subr.mxu0 0.0
    %163 = vmatpush2.msra.mxu0 0.0
    %164 = vmatprep.subr.mxu0 0.0
    %165 = vmatpush2.msra.mxu0 0.0
    %166 = vmatprep.subr.mxu0 0.0
    %167 = vmatpush2.msra.mxu0 0.0
    %168 = vmatprep.subr.mxu0 0.0
    %169 = vmatpush2.msra.mxu0 0.0
    %170 = vmatprep.subr.mxu0 0.0
    %171 = vmatpush2.msra.mxu0 0.0
    %172 = vmatprep.subr.mxu0 0.0
    %173 = vmatpush2.msra.mxu0 0.0
    %174 = vmatprep.subr.mxu0 0.0
    %175 = vmatpush2.msra.mxu0 0.0
    %176 = vmatprep.subr.mxu0 0.0
    %177 = vmatpush2.msra.mxu0 0.0
    %178 = vmatprep.subr.mxu0 0.0
    %179 = vmatpush2.msra.mxu0 0.0
    %180 = vmatprep.subr.mxu0 0.0
    %181 = vmatpush2.msra.mxu0 0.0
    %182 = vmatprep.mubr.f32.mxu0 0.0
    %183 = vmatmul.mubr.f32.gmra.mxu0 %v91
    %v184 = vpop.f32.mrf.mxu0
    %v185 = vadd.f32 0.0, %v184
    %v186 = vpop.f32.mrf.mxu0
    %187 = vmatprep.mubr.f32.mxu0 0.0
    %188 = vmatmul.mubr.f32.gmra.mxu0 %v94
    %v189 = vpop.f32.mrf.mxu0
    %v190 = vadd.f32 0.0, %v189
    %v191 = vpop.f32.mrf.mxu0
    %192 = vmatprep.mubr.f32.mxu0 0.0
    %193 = vmatmul.mubr.f32.gmra.mxu0 %v97
    %v194 = vpop.f32.mrf.mxu0
    %v195 = vadd.f32 0.0, %v194
    %v196 = vpop.f32.mrf.mxu0
    %197 = vmatprep.mubr.f32.mxu0 0.0
    %198 = vmatmul.mubr.f32.gmra.mxu0 %v100
    %v199 = vpop.f32.mrf.mxu0
    %v200 = vadd.f32 0.0, %v199
    %v201 = vpop.f32.mrf.mxu0
    %202 = vmatprep.mubr.f32.mxu0 0.0
    %203 = vmatmul.mubr.f32.gmra.mxu0 %v103
    %v204 = vpop.f32.mrf.mxu0
    %v205 = vadd.f32 0.0, %v204
    %v206 = vpop.f32.mrf.mxu0
    %207 = vmatprep.mubr.f32.mxu0 0.0
    %208 = vmatmul.mubr.f32.gmra.mxu0 %v106
    %v209 = vpop.f32.mrf.mxu0
    %v210 = vadd.f32 0.0, %v209
    %v211 = vpop.f32.mrf.mxu0
    %212 = vmatprep.mubr.f32.mxu0 0.0
    %213 = vmatmul.mubr.f32.gmra.mxu0 %v109
    %v214 = vpop.f32.mrf.mxu0
    %v215 = vadd.f32 0.0, %v214
    %v216 = vpop.f32.mrf.mxu0
    %217 = vmatprep.mubr.f32.mxu0 0.0
    %218 = vmatmul.mubr.f32.gmra.mxu0 %v112
    %v219 = vpop.f32.mrf.mxu0
    %v220 = vadd.f32 0.0, %v219
    %v221 = vpop.f32.mrf.mxu0
    %222 = vdwg.mxu0
    %v223 = vld [vmem:[%s1] sm:$0xff]
    %v224 = vld [vmem:[%s1 + $0x8] sm:$0xff]
    %v225 = vld [vmem:[%s1 + $0x10] sm:$0xff]
    %v226 = vld [vmem:[%s1 + $0x18] sm:$0xff]
    %v227 = vld [vmem:[%s1 + $0x20] sm:$0xff]
    %v228 = vld [vmem:[%s1 + $0x28] sm:$0xff]
    %v229 = vld [vmem:[%s1 + $0x30] sm:$0xff]
    %v230 = vld [vmem:[%s1 + $0x38] sm:$0xff]
    %231 = vset.pattern.permute.xlu0 0
    %232 = vperm.xlu0 %231, %v223
    %v233 = vpop.permute.xlu0 %232
    %234 = vset.pattern.permute.xlu0 0
    %235 = vperm.xlu0 %234, %v224
    %v236 = vpop.permute.xlu0 %235
    %237 = vset.pattern.permute.xlu0 0
    %238 = vperm.xlu0 %237, %v225
    %v239 = vpop.permute.xlu0 %238
    %240 = vset.pattern.permute.xlu0 0
    %241 = vperm.xlu0 %240, %v226
    %v242 = vpop.permute.xlu0 %241
    %243 = vset.pattern.permute.xlu0 0
    %244 = vperm.xlu0 %243, %v227
    %v245 = vpop.permute.xlu0 %244
    %246 = vset.pattern.permute.xlu0 0
    %247 = vperm.xlu0 %246, %v228
    %v248 = vpop.permute.xlu0 %247
    %249 = vset.pattern.permute.xlu0 0
    %250 = vperm.xlu0 %249, %v229
    %v251 = vpop.permute.xlu0 %250
    %252 = vset.pattern.permute.xlu0 0
    %253 = vperm.xlu0 %252, %v230
    %v254 = vpop.permute.xlu0 %253
    %vm255 = vcmp.eq.s32.totalorder %v233, %v30
    %vm256 = vcmp.eq.s32.totalorder %v236, %v30
    %vm257 = vcmp.eq.s32.totalorder %v239, %v30
    %vm258 = vcmp.eq.s32.totalorder %v242, %v30
    %vm259 = vcmp.eq.s32.totalorder %v245, %v30
    %vm260 = vcmp.eq.s32.totalorder %v248, %v30
    %vm261 = vcmp.eq.s32.totalorder %v251, %v30
    %vm262 = vcmp.eq.s32.totalorder %v254, %v30
    %v263 = vsel %vm255, 1, 0
    %v264 = vsel %vm256, 1, 0
    %v265 = vsel %vm257, 1, 0
    %v266 = vsel %vm258, 1, 0
    %v267 = vsel %vm259, 1, 0
    %v268 = vsel %vm260, 1, 0
    %v269 = vsel %vm261, 1, 0
    %v270 = vsel %vm262, 1, 0
    %v271 = vcvt.s32.f32 %v263
    %v272 = vcvt.s32.f32 %v264
    %v273 = vcvt.s32.f32 %v265
    %v274 = vcvt.s32.f32 %v266
    %v275 = vcvt.s32.f32 %v267
    %v276 = vcvt.s32.f32 %v268
    %v277 = vcvt.s32.f32 %v269
    %v278 = vcvt.s32.f32 %v270
    %v279 = vld [vmem:[#allocation2 + $0x10] sm:$0xff]
    %v280 = vld [vmem:[#allocation2 + $0x18] sm:$0xf]
    %vm281 = vcmask 97280
    %v283 = vsel %vm281, %v271, 0
    %v286 = vsel %vm281, %v272, 0
    %v289 = vsel %vm281, %v273, 0
    %v292 = vsel %vm281, %v274, 0
    %v295 = vsel %vm281, %v275, 0
    %v298 = vsel %vm281, %v276, 0
    %v301 = vsel %vm281, %v277, 0
    %v304 = vsel %vm281, %v278, 0
    %vm306 = vcmask 1043456
    %v308 = vsel %vm306, %v280, 0
    %310 = vmatprep.subr.mxu0 0.0
    %311 = vmatpush1.msra.mxu0 0.0
    %312 = vmatprep.subr.mxu0 0.0
    %313 = vmatpush1.msra.mxu0 0.0
    %314 = vmatprep.subr.mxu0 0.0
    %315 = vmatpush1.msra.mxu0 0.0
    %316 = vmatprep.subr.mxu0 0.0
    %317 = vmatpush1.msra.mxu0 0.0
    %318 = vmatprep.subr.mxu0 0.0
    %319 = vmatpush1.msra.mxu0 0.0
    %320 = vmatprep.subr.mxu0 0.0
    %321 = vmatpush1.msra.mxu0 0.0
    %322 = vmatprep.subr.mxu0 0.0
    %323 = vmatpush1.msra.mxu0 0.0
    %324 = vmatprep.subr.mxu0 0.0
    %325 = vmatpush1.msra.mxu0 0.0
    %326 = vmatprep.subr.mxu0 0.0
    %327 = vmatpush1.msra.mxu0 0.0
    %328 = vmatprep.subr.mxu0 0.0
    %329 = vmatpush1.msra.mxu0 0.0
    %330 = vmatprep.subr.mxu0 0.0
    %331 = vmatpush1.msra.mxu0 0.0
    %332 = vmatprep.subr.mxu0 0.0
    %333 = vmatpush1.msra.mxu0 0.0
    %334 = vmatprep.subr.mxu0 0.0
    %335 = vmatpush1.msra.mxu0 0.0
    %336 = vmatprep.subr.mxu0 0.0
    %337 = vmatpush1.msra.mxu0 0.0
    %338 = vmatprep.subr.mxu0 0.0
    %339 = vmatpush1.msra.mxu0 %v308
    %340 = vmatprep.subr.mxu0 0.0
    %341 = vmatpush1.msra.mxu0 %v279
    %342 = vmatprep.subr.mxu0 0.0
    %343 = vmatpush2.msra.mxu0 0.0
    %344 = vmatprep.subr.mxu0 0.0
    %345 = vmatpush2.msra.mxu0 0.0
    %346 = vmatprep.subr.mxu0 0.0
    %347 = vmatpush2.msra.mxu0 0.0
    %348 = vmatprep.subr.mxu0 0.0
    %349 = vmatpush2.msra.mxu0 0.0
    %350 = vmatprep.subr.mxu0 0.0
    %351 = vmatpush2.msra.mxu0 0.0
    %352 = vmatprep.subr.mxu0 0.0
    %353 = vmatpush2.msra.mxu0 0.0
    %354 = vmatprep.subr.mxu0 0.0
    %355 = vmatpush2.msra.mxu0 0.0
    %356 = vmatprep.subr.mxu0 0.0
    %357 = vmatpush2.msra.mxu0 0.0
    %358 = vmatprep.subr.mxu0 0.0
    %359 = vmatpush2.msra.mxu0 0.0
    %360 = vmatprep.subr.mxu0 0.0
    %361 = vmatpush2.msra.mxu0 0.0
    %362 = vmatprep.subr.mxu0 0.0
    %363 = vmatpush2.msra.mxu0 0.0
    %364 = vmatprep.subr.mxu0 0.0
    %365 = vmatpush2.msra.mxu0 0.0
    %366 = vmatprep.subr.mxu0 0.0
    %367 = vmatpush2.msra.mxu0 0.0
    %368 = vmatprep.subr.mxu0 0.0
    %369 = vmatpush2.msra.mxu0 0.0
    %370 = vmatprep.subr.mxu0 0.0
    %371 = vmatpush2.msra.mxu0 0.0
    %372 = vmatprep.subr.mxu0 0.0
    %373 = vmatpush2.msra.mxu0 0.0
    %374 = vmatprep.mubr.f32.mxu0 0.0
    %375 = vmatmul.mubr.f32.gmra.mxu0 %v283
    %v376 = vpop.f32.mrf.mxu0
    %v377 = vadd.f32 0.0, %v376
    %v378 = vpop.f32.mrf.mxu0
    %379 = vmatprep.mubr.f32.mxu0 0.0
    %380 = vmatmul.mubr.f32.gmra.mxu0 %v286
    %v381 = vpop.f32.mrf.mxu0
    %v382 = vadd.f32 0.0, %v381
    %v383 = vpop.f32.mrf.mxu0
    %384 = vmatprep.mubr.f32.mxu0 0.0
    %385 = vmatmul.mubr.f32.gmra.mxu0 %v289
    %v386 = vpop.f32.mrf.mxu0
    %v387 = vadd.f32 0.0, %v386
    %v388 = vpop.f32.mrf.mxu0
    %389 = vmatprep.mubr.f32.mxu0 0.0
    %390 = vmatmul.mubr.f32.gmra.mxu0 %v292
    %v391 = vpop.f32.mrf.mxu0
    %v392 = vadd.f32 0.0, %v391
    %v393 = vpop.f32.mrf.mxu0
    %394 = vmatprep.mubr.f32.mxu0 0.0
    %395 = vmatmul.mubr.f32.gmra.mxu0 %v295
    %v396 = vpop.f32.mrf.mxu0
    %v397 = vadd.f32 0.0, %v396
    %v398 = vpop.f32.mrf.mxu0
    %399 = vmatprep.mubr.f32.mxu0 0.0
    %400 = vmatmul.mubr.f32.gmra.mxu0 %v298
    %v401 = vpop.f32.mrf.mxu0
    %v402 = vadd.f32 0.0, %v401
    %v403 = vpop.f32.mrf.mxu0
    %404 = vmatprep.mubr.f32.mxu0 0.0
    %405 = vmatmul.mubr.f32.gmra.mxu0 %v301
    %v406 = vpop.f32.mrf.mxu0
    %v407 = vadd.f32 0.0, %v406
    %v408 = vpop.f32.mrf.mxu0
    %409 = vmatprep.mubr.f32.mxu0 0.0
    %410 = vmatmul.mubr.f32.gmra.mxu0 %v304
    %v411 = vpop.f32.mrf.mxu0
    %v412 = vadd.f32 0.0, %v411
    %v413 = vpop.f32.mrf.mxu0
    %414 = vdwg.mxu0
    %v415 = vpack.c.bf16 %v190, %v185
    %v416 = vpack.c.bf16 %v200, %v195
    %v417 = vpack.c.bf16 %v210, %v205
    %v418 = vpack.c.bf16 %v220, %v215
    %v423 = vunpack.c.l.b16 %v415
    %v424 = vunpack.c.h.b16 %v415
    %v425 = vunpack.c.l.b16 %v416
    %v426 = vunpack.c.h.b16 %v416
    %v427 = vunpack.c.l.b16 %v417
    %v428 = vunpack.c.h.b16 %v417
    %v429 = vunpack.c.l.b16 %v418
    %v430 = vunpack.c.h.b16 %v418
    %v431 = vpack.c.b16 %v423, %v423
    %v432 = vpack.c.b16 %v424, %v424
    %v433 = vpack.c.b16 %v425, %v425
    %v434 = vpack.c.b16 %v426, %v426
    %v435 = vpack.c.b16 %v427, %v427
    %v436 = vpack.c.b16 %v428, %v428
    %v437 = vpack.c.b16 %v429, %v429
    %v438 = vpack.c.b16 %v430, %v430
    %439 = vrot.lane.b32.xlu0 %v431, 40
    %v440 = vpop.permute.xlu0 %439
    %441 = vrot.lane.b32.xlu0 %v432, 40
    %v442 = vpop.permute.xlu0 %441
    %443 = vrot.lane.b32.xlu0 %v433, 40
    %v444 = vpop.permute.xlu0 %443
    %445 = vrot.lane.b32.xlu0 %v434, 40
    %v446 = vpop.permute.xlu0 %445
    %447 = vrot.lane.b32.xlu0 %v435, 40
    %v448 = vpop.permute.xlu0 %447
    %449 = vrot.lane.b32.xlu0 %v436, 40
    %v450 = vpop.permute.xlu0 %449
    %451 = vrot.lane.b32.xlu0 %v437, 40
    %v452 = vpop.permute.xlu0 %451
    %453 = vrot.lane.b32.xlu0 %v438, 40
    %v454 = vpop.permute.xlu0 %453
    %vm463 = vcmask 453952
    %464 = vst.msk [vmem:[#allocation5] sm:$0xf] %vm463, %v440
    %465 = vst.msk [vmem:[#allocation5 + $0x4] sm:$0xf] %vm463, %v442
    %466 = vst.msk [vmem:[#allocation5 + $0x8] sm:$0xf] %vm463, %v444
    %467 = vst.msk [vmem:[#allocation5 + $0xc] sm:$0xf] %vm463, %v446
    %468 = vst.msk [vmem:[#allocation5 + $0x10] sm:$0xf] %vm463, %v448
    %469 = vst.msk [vmem:[#allocation5 + $0x14] sm:$0xf] %vm463, %v450
    %470 = vst.msk [vmem:[#allocation5 + $0x18] sm:$0xf] %vm463, %v452
    %471 = vst.msk [vmem:[#allocation5 + $0x1c] sm:$0xf] %vm463, %v454
    %v472 = vpack.c.bf16 %v382, %v377
    %v473 = vpack.c.bf16 %v392, %v387
    %v474 = vpack.c.bf16 %v402, %v397
    %v475 = vpack.c.bf16 %v412, %v407
    %v480 = vunpack.c.l.b16 %v472
    %v481 = vunpack.c.h.b16 %v472
    %v482 = vunpack.c.l.b16 %v473
    %v483 = vunpack.c.h.b16 %v473
    %v484 = vunpack.c.l.b16 %v474
    %v485 = vunpack.c.h.b16 %v474
    %v486 = vunpack.c.l.b16 %v475
    %v487 = vunpack.c.h.b16 %v475
    %v488 = vpack.c.b16 %v480, %v480
    %v489 = vpack.c.b16 %v481, %v481
    %v490 = vpack.c.b16 %v482, %v482
    %v491 = vpack.c.b16 %v483, %v483
    %v492 = vpack.c.b16 %v484, %v484
    %v493 = vpack.c.b16 %v485, %v485
    %v494 = vpack.c.b16 %v486, %v486
    %v495 = vpack.c.b16 %v487, %v487
    %496 = vrot.lane.b32.xlu0 %v488, 56
    %v497 = vpop.permute.xlu0 %496
    %498 = vrot.lane.b32.xlu0 %v489, 56
    %v499 = vpop.permute.xlu0 %498
    %500 = vrot.lane.b32.xlu0 %v490, 56
    %v501 = vpop.permute.xlu0 %500
    %502 = vrot.lane.b32.xlu0 %v491, 56
    %v503 = vpop.permute.xlu0 %502
    %504 = vrot.lane.b32.xlu0 %v492, 56
    %v505 = vpop.permute.xlu0 %504
    %506 = vrot.lane.b32.xlu0 %v493, 56
    %v507 = vpop.permute.xlu0 %506
    %508 = vrot.lane.b32.xlu0 %v494, 56
    %v509 = vpop.permute.xlu0 %508
    %510 = vrot.lane.b32.xlu0 %v495, 56
    %v511 = vpop.permute.xlu0 %510
    %vm520 = vcmask 585152
    %521 = vst.msk [vmem:[#allocation5] sm:$0xf] %vm520, %v497
    %522 = vst.msk [vmem:[#allocation5 + $0x4] sm:$0xf] %vm520, %v499
    %523 = vst.msk [vmem:[#allocation5 + $0x8] sm:$0xf] %vm520, %v501
    %524 = vst.msk [vmem:[#allocation5 + $0xc] sm:$0xf] %vm520, %v503
    %525 = vst.msk [vmem:[#allocation5 + $0x10] sm:$0xf] %vm520, %v505
    %526 = vst.msk [vmem:[#allocation5 + $0x14] sm:$0xf] %vm520, %v507
    %527 = vst.msk [vmem:[#allocation5 + $0x18] sm:$0xf] %vm520, %v509
    %528 = vst.msk [vmem:[#allocation5 + $0x1c] sm:$0xf] %vm520, %v511
    %v529 = vld [vmem:[#allocation2 + $0x20] sm:$0xff]
    %v530 = vld [vmem:[#allocation2 + $0x28] sm:$0xff]
    %v531 = vld [vmem:[#allocation2 + $0x30] sm:$0xff]
    %v532 = vld [vmem:[#allocation2 + $0x38] sm:$0xff]
    %vm533 = vcmask 130048
    %v535 = vsel %vm533, %v377, 0
    %v538 = vsel %vm533, %v382, 0
    %v541 = vsel %vm533, %v387, 0
    %v544 = vsel %vm533, %v392, 0
    %v547 = vsel %vm533, %v397, 0
    %v550 = vsel %vm533, %v402, 0
    %v553 = vsel %vm533, %v407, 0
    %v556 = vsel %vm533, %v412, 0
    %558 = vmatprep.subr.mxu0 0.0
    %559 = vmatpush1.msra.mxu0 0.0
    %560 = vmatprep.subr.mxu0 0.0
    %561 = vmatpush1.msra.mxu0 0.0
    %562 = vmatprep.subr.mxu0 0.0
    %563 = vmatpush1.msra.mxu0 0.0
    %564 = vmatprep.subr.mxu0 0.0
    %565 = vmatpush1.msra.mxu0 0.0
    %566 = vmatprep.subr.mxu0 0.0
    %567 = vmatpush1.msra.mxu0 0.0
    %568 = vmatprep.subr.mxu0 0.0
    %569 = vmatpush1.msra.mxu0 0.0
    %570 = vmatprep.subr.mxu0 0.0
    %571 = vmatpush1.msra.mxu0 0.0
    %572 = vmatprep.subr.mxu0 0.0
    %573 = vmatpush1.msra.mxu0 0.0
    %574 = vmatprep.subr.mxu0 0.0
    %575 = vmatpush1.msra.mxu0 0.0
    %576 = vmatprep.subr.mxu0 0.0
    %577 = vmatpush1.msra.mxu0 0.0
    %578 = vmatprep.subr.mxu0 0.0
    %579 = vmatpush1.msra.mxu0 0.0
    %580 = vmatprep.subr.mxu0 0.0
    %581 = vmatpush1.msra.mxu0 0.0
    %582 = vmatprep.subr.mxu0 0.0
    %583 = vmatpush1.msra.mxu0 0.0
    %584 = vmatprep.subr.mxu0 0.0
    %585 = vmatpush1.msra.mxu0 0.0
    %586 = vmatprep.subr.mxu0 0.0
    %587 = vmatpush1.msra.mxu0 %v532
    %588 = vmatprep.subr.mxu0 0.0
    %589 = vmatpush1.msra.mxu0 %v531
    %590 = vmatprep.subr.mxu0 0.0
    %591 = vmatpush2.msra.mxu0 0.0
    %592 = vmatprep.subr.mxu0 0.0
    %593 = vmatpush2.msra.mxu0 0.0
    %594 = vmatprep.subr.mxu0 0.0
    %595 = vmatpush2.msra.mxu0 0.0
    %596 = vmatprep.subr.mxu0 0.0
    %597 = vmatpush2.msra.mxu0 0.0
    %598 = vmatprep.subr.mxu0 0.0
    %599 = vmatpush2.msra.mxu0 0.0
    %600 = vmatprep.subr.mxu0 0.0
    %601 = vmatpush2.msra.mxu0 0.0
    %602 = vmatprep.subr.mxu0 0.0
    %603 = vmatpush2.msra.mxu0 0.0
    %604 = vmatprep.subr.mxu0 0.0
    %605 = vmatpush2.msra.mxu0 0.0
    %606 = vmatprep.subr.mxu0 0.0
    %607 = vmatpush2.msra.mxu0 0.0
    %608 = vmatprep.subr.mxu0 0.0
    %609 = vmatpush2.msra.mxu0 0.0
    %610 = vmatprep.subr.mxu0 0.0
    %611 = vmatpush2.msra.mxu0 0.0
    %612 = vmatprep.subr.mxu0 0.0
    %613 = vmatpush2.msra.mxu0 0.0
    %614 = vmatprep.subr.mxu0 0.0
    %615 = vmatpush2.msra.mxu0 0.0
    %616 = vmatprep.subr.mxu0 0.0
    %617 = vmatpush2.msra.mxu0 0.0
    %618 = vmatprep.subr.mxu0 0.0
    %619 = vmatpush2.msra.mxu0 0.0
    %620 = vmatprep.subr.mxu0 0.0
    %621 = vmatpush2.msra.mxu0 0.0
    %622 = vmatprep.mubr.f32.mxu0 0.0
    %623 = vmatmul.mubr.f32.gmra.mxu0 %v535
    %v624 = vpop.f32.mrf.mxu0
    %v625 = vadd.f32 0.0, %v624
    %v626 = vpop.f32.mrf.mxu0
    %627 = vmatprep.mubr.f32.mxu0 0.0
    %628 = vmatmul.mubr.f32.gmra.mxu0 %v538
    %v629 = vpop.f32.mrf.mxu0
    %v630 = vadd.f32 0.0, %v629
    %v631 = vpop.f32.mrf.mxu0
    %632 = vmatprep.mubr.f32.mxu0 0.0
    %633 = vmatmul.mubr.f32.gmra.mxu0 %v541
    %v634 = vpop.f32.mrf.mxu0
    %v635 = vadd.f32 0.0, %v634
    %v636 = vpop.f32.mrf.mxu0
    %637 = vmatprep.mubr.f32.mxu0 0.0
    %638 = vmatmul.mubr.f32.gmra.mxu0 %v544
    %v639 = vpop.f32.mrf.mxu0
    %v640 = vadd.f32 0.0, %v639
    %v641 = vpop.f32.mrf.mxu0
    %642 = vmatprep.mubr.f32.mxu0 0.0
    %643 = vmatmul.mubr.f32.gmra.mxu0 %v547
    %v644 = vpop.f32.mrf.mxu0
    %v645 = vadd.f32 0.0, %v644
    %v646 = vpop.f32.mrf.mxu0
    %647 = vmatprep.mubr.f32.mxu0 0.0
    %648 = vmatmul.mubr.f32.gmra.mxu0 %v550
    %v649 = vpop.f32.mrf.mxu0
    %v650 = vadd.f32 0.0, %v649
    %v651 = vpop.f32.mrf.mxu0
    %652 = vmatprep.mubr.f32.mxu0 0.0
    %653 = vmatmul.mubr.f32.gmra.mxu0 %v553
    %v654 = vpop.f32.mrf.mxu0
    %v655 = vadd.f32 0.0, %v654
    %v656 = vpop.f32.mrf.mxu0
    %657 = vmatprep.mubr.f32.mxu0 0.0
    %658 = vmatmul.mubr.f32.gmra.mxu0 %v556
    %v659 = vpop.f32.mrf.mxu0
    %v660 = vadd.f32 0.0, %v659
    %v661 = vpop.f32.mrf.mxu0
    %662 = vdwg.mxu0
    %v664 = vsel %vm533, %v185, 0
    %v667 = vsel %vm533, %v190, 0
    %v670 = vsel %vm533, %v195, 0
    %v673 = vsel %vm533, %v200, 0
    %v676 = vsel %vm533, %v205, 0
    %v679 = vsel %vm533, %v210, 0
    %v682 = vsel %vm533, %v215, 0
    %v685 = vsel %vm533, %v220, 0
    %687 = vmatprep.subr.mxu0 0.0
    %688 = vmatpush1.msra.mxu0 0.0
    %689 = vmatprep.subr.mxu0 0.0
    %690 = vmatpush1.msra.mxu0 0.0
    %691 = vmatprep.subr.mxu0 0.0
    %692 = vmatpush1.msra.mxu0 0.0
    %693 = vmatprep.subr.mxu0 0.0
    %694 = vmatpush1.msra.mxu0 0.0
    %695 = vmatprep.subr.mxu0 0.0
    %696 = vmatpush1.msra.mxu0 0.0
    %697 = vmatprep.subr.mxu0 0.0
    %698 = vmatpush1.msra.mxu0 0.0
    %699 = vmatprep.subr.mxu0 0.0
    %700 = vmatpush1.msra.mxu0 0.0
    %701 = vmatprep.subr.mxu0 0.0
    %702 = vmatpush1.msra.mxu0 0.0
    %703 = vmatprep.subr.mxu0 0.0
    %704 = vmatpush1.msra.mxu0 0.0
    %705 = vmatprep.subr.mxu0 0.0
    %706 = vmatpush1.msra.mxu0 0.0
    %707 = vmatprep.subr.mxu0 0.0
    %708 = vmatpush1.msra.mxu0 0.0
    %709 = vmatprep.subr.mxu0 0.0
    %710 = vmatpush1.msra.mxu0 0.0
    %711 = vmatprep.subr.mxu0 0.0
    %712 = vmatpush1.msra.mxu0 0.0
    %713 = vmatprep.subr.mxu0 0.0
    %714 = vmatpush1.msra.mxu0 0.0
    %715 = vmatprep.subr.mxu0 0.0
    %716 = vmatpush1.msra.mxu0 %v530
    %717 = vmatprep.subr.mxu0 0.0
    %718 = vmatpush1.msra.mxu0 %v529
    %719 = vmatprep.subr.mxu0 0.0
    %720 = vmatpush2.msra.mxu0 0.0
    %721 = vmatprep.subr.mxu0 0.0
    %722 = vmatpush2.msra.mxu0 0.0
    %723 = vmatprep.subr.mxu0 0.0
    %724 = vmatpush2.msra.mxu0 0.0
    %725 = vmatprep.subr.mxu0 0.0
    %726 = vmatpush2.msra.mxu0 0.0
    %727 = vmatprep.subr.mxu0 0.0
    %728 = vmatpush2.msra.mxu0 0.0
    %729 = vmatprep.subr.mxu0 0.0
    %730 = vmatpush2.msra.mxu0 0.0
    %731 = vmatprep.subr.mxu0 0.0
    %732 = vmatpush2.msra.mxu0 0.0
    %733 = vmatprep.subr.mxu0 0.0
    %734 = vmatpush2.msra.mxu0 0.0
    %735 = vmatprep.subr.mxu0 0.0
    %736 = vmatpush2.msra.mxu0 0.0
    %737 = vmatprep.subr.mxu0 0.0
    %738 = vmatpush2.msra.mxu0 0.0
    %739 = vmatprep.subr.mxu0 0.0
    %740 = vmatpush2.msra.mxu0 0.0
    %741 = vmatprep.subr.mxu0 0.0
    %742 = vmatpush2.msra.mxu0 0.0
    %743 = vmatprep.subr.mxu0 0.0
    %744 = vmatpush2.msra.mxu0 0.0
    %745 = vmatprep.subr.mxu0 0.0
    %746 = vmatpush2.msra.mxu0 0.0
    %747 = vmatprep.subr.mxu0 0.0
    %748 = vmatpush2.msra.mxu0 0.0
    %749 = vmatprep.subr.mxu0 0.0
    %750 = vmatpush2.msra.mxu0 0.0
    %751 = vmatprep.mubr.f32.mxu0 0.0
    %752 = vmatmul.mubr.f32.gmra.mxu0 %v664
    %v753 = vpop.f32.mrf.mxu0
    %v754 = vadd.f32 %v625, %v753
    %v755 = vpop.f32.mrf.mxu0
    %756 = vmatprep.mubr.f32.mxu0 0.0
    %757 = vmatmul.mubr.f32.gmra.mxu0 %v667
    %v758 = vpop.f32.mrf.mxu0
    %v759 = vadd.f32 %v630, %v758
    %v760 = vpop.f32.mrf.mxu0
    %761 = vmatprep.mubr.f32.mxu0 0.0
    %762 = vmatmul.mubr.f32.gmra.mxu0 %v670
    %v763 = vpop.f32.mrf.mxu0
    %v764 = vadd.f32 %v635, %v763
    %v765 = vpop.f32.mrf.mxu0
    %766 = vmatprep.mubr.f32.mxu0 0.0
    %767 = vmatmul.mubr.f32.gmra.mxu0 %v673
    %v768 = vpop.f32.mrf.mxu0
    %v769 = vadd.f32 %v640, %v768
    %v770 = vpop.f32.mrf.mxu0
    %771 = vmatprep.mubr.f32.mxu0 0.0
    %772 = vmatmul.mubr.f32.gmra.mxu0 %v676
    %v773 = vpop.f32.mrf.mxu0
    %v774 = vadd.f32 %v645, %v773
    %v775 = vpop.f32.mrf.mxu0
    %776 = vmatprep.mubr.f32.mxu0 0.0
    %777 = vmatmul.mubr.f32.gmra.mxu0 %v679
    %v778 = vpop.f32.mrf.mxu0
    %v779 = vadd.f32 %v650, %v778
    %v780 = vpop.f32.mrf.mxu0
    %781 = vmatprep.mubr.f32.mxu0 0.0
    %782 = vmatmul.mubr.f32.gmra.mxu0 %v682
    %v783 = vpop.f32.mrf.mxu0
    %v784 = vadd.f32 %v655, %v783
    %v785 = vpop.f32.mrf.mxu0
    %786 = vmatprep.mubr.f32.mxu0 0.0
    %787 = vmatmul.mubr.f32.gmra.mxu0 %v685
    %v788 = vpop.f32.mrf.mxu0
    %v789 = vadd.f32 %v660, %v788
    %v790 = vpop.f32.mrf.mxu0
    %791 = vdwg.mxu0
    %v792 = vld [vmem:[#allocation2 + $0x40] sm:$0x1]
    %v793 = vlaneseq
    %v794 = vshrl.u32 %v793, 7
    %v795 = vsub.s32 0, %v794
    %v796 = vrot.slane %v792, %v795
    %v797 = vadd.f32 %v754, %v796
    %v798 = vadd.f32 %v759, %v796
    %v799 = vadd.f32 %v764, %v796
    %v800 = vadd.f32 %v769, %v796
    %v801 = vadd.f32 %v774, %v796
    %v802 = vadd.f32 %v779, %v796
    %v803 = vadd.f32 %v784, %v796
    %v804 = vadd.f32 %v789, %v796
    %v805 = vpack.c.bf16 %v798, %v797
    %v806 = vpack.c.bf16 %v800, %v799
    %v807 = vpack.c.bf16 %v802, %v801
    %v808 = vpack.c.bf16 %v804, %v803
    %v813 = vunpack.c.l.b16 %v805
    %v814 = vunpack.c.h.b16 %v805
    %v815 = vunpack.c.l.b16 %v806
    %v816 = vunpack.c.h.b16 %v806
    %v817 = vunpack.c.l.b16 %v807
    %v818 = vunpack.c.h.b16 %v807
    %v819 = vunpack.c.l.b16 %v808
    %v820 = vunpack.c.h.b16 %v808
    %v821 = vpack.c.b16 %v813, %v813
    %v822 = vpack.c.b16 %v814, %v814
    %v823 = vpack.c.b16 %v815, %v815
    %v824 = vpack.c.b16 %v816, %v816
    %v825 = vpack.c.b16 %v817, %v817
    %v826 = vpack.c.b16 %v818, %v818
    %v827 = vpack.c.b16 %v819, %v819
    %v828 = vpack.c.b16 %v820, %v820
    %vm837 = vcmask 257024
    %838 = vst.msk [vmem:[#allocation5] sm:$0xf] %vm837, %v821
    %839 = vst.msk [vmem:[#allocation5 + $0x4] sm:$0xf] %vm837, %v822
    %840 = vst.msk [vmem:[#allocation5 + $0x8] sm:$0xf] %vm837, %v823
    %841 = vst.msk [vmem:[#allocation5 + $0xc] sm:$0xf] %vm837, %v824
    %842 = vst.msk [vmem:[#allocation5 + $0x10] sm:$0xf] %vm837, %v825
    %843 = vst.msk [vmem:[#allocation5 + $0x14] sm:$0xf] %vm837, %v826
    %844 = vst.msk [vmem:[#allocation5 + $0x18] sm:$0xf] %vm837, %v827
    %845 = vst.msk [vmem:[#allocation5 + $0x1c] sm:$0xf] %vm837, %v828
    %v846 = vld [vmem:[#allocation2 + $0x48] sm:$0xff]
    %v847 = vld [vmem:[#allocation2 + $0x50] sm:$0xff]
    %v848 = vld [vmem:[#allocation2 + $0x58] sm:$0xff]
    %v849 = vld [vmem:[#allocation2 + $0x60] sm:$0xff]
    %v850 = vld [vmem:[#allocation2 + $0x68] sm:$0x1]
    %v851 = vlaneseq
    %v852 = vshrl.u32 %v851, 7
    %v853 = vsub.s32 0, %v852
    %v854 = vrot.slane %v850, %v853
    %vm855 = vcmask 261120
    %v857 = vsel %vm855, %v797, 0
    %v860 = vsel %vm855, %v798, 0
    %v863 = vsel %vm855, %v799, 0
    %v866 = vsel %vm855, %v800, 0
    %v869 = vsel %vm855, %v801, 0
    %v872 = vsel %vm855, %v802, 0
    %v875 = vsel %vm855, %v803, 0
    %v878 = vsel %vm855, %v804, 0
    %880 = vmatprep.subr.mxu0 0.0
    %881 = vmatpush1.msra.mxu0 0.0
    %882 = vmatprep.subr.mxu0 0.0
    %883 = vmatpush1.msra.mxu0 0.0
    %884 = vmatprep.subr.mxu0 0.0
    %885 = vmatpush1.msra.mxu0 0.0
    %886 = vmatprep.subr.mxu0 0.0
    %887 = vmatpush1.msra.mxu0 0.0
    %888 = vmatprep.subr.mxu0 0.0
    %889 = vmatpush1.msra.mxu0 0.0
    %890 = vmatprep.subr.mxu0 0.0
    %891 = vmatpush1.msra.mxu0 0.0
    %892 = vmatprep.subr.mxu0 0.0
    %893 = vmatpush1.msra.mxu0 0.0
    %894 = vmatprep.subr.mxu0 0.0
    %895 = vmatpush1.msra.mxu0 0.0
    %896 = vmatprep.subr.mxu0 0.0
    %897 = vmatpush1.msra.mxu0 0.0
    %898 = vmatprep.subr.mxu0 0.0
    %899 = vmatpush1.msra.mxu0 0.0
    %900 = vmatprep.subr.mxu0 0.0
    %901 = vmatpush1.msra.mxu0 0.0
    %902 = vmatprep.subr.mxu0 0.0
    %903 = vmatpush1.msra.mxu0 0.0
    %904 = vmatprep.subr.mxu0 0.0
    %905 = vmatpush1.msra.mxu0 %v849
    %906 = vmatprep.subr.mxu0 0.0
    %907 = vmatpush1.msra.mxu0 %v848
    %908 = vmatprep.subr.mxu0 0.0
    %909 = vmatpush1.msra.mxu0 %v847
    %910 = vmatprep.subr.mxu0 0.0
    %911 = vmatpush1.msra.mxu0 %v846
    %912 = vmatprep.subr.mxu0 0.0
    %913 = vmatpush2.msra.mxu0 0.0
    %914 = vmatprep.subr.mxu0 0.0
    %915 = vmatpush2.msra.mxu0 0.0
    %916 = vmatprep.subr.mxu0 0.0
    %917 = vmatpush2.msra.mxu0 0.0
    %918 = vmatprep.subr.mxu0 0.0
    %919 = vmatpush2.msra.mxu0 0.0
    %920 = vmatprep.subr.mxu0 0.0
    %921 = vmatpush2.msra.mxu0 0.0
    %922 = vmatprep.subr.mxu0 0.0
    %923 = vmatpush2.msra.mxu0 0.0
    %924 = vmatprep.subr.mxu0 0.0
    %925 = vmatpush2.msra.mxu0 0.0
    %926 = vmatprep.subr.mxu0 0.0
    %927 = vmatpush2.msra.mxu0 0.0
    %928 = vmatprep.subr.mxu0 0.0
    %929 = vmatpush2.msra.mxu0 0.0
    %930 = vmatprep.subr.mxu0 0.0
    %931 = vmatpush2.msra.mxu0 0.0
    %932 = vmatprep.subr.mxu0 0.0
    %933 = vmatpush2.msra.mxu0 0.0
    %934 = vmatprep.subr.mxu0 0.0
    %935 = vmatpush2.msra.mxu0 0.0
    %936 = vmatprep.subr.mxu0 0.0
    %937 = vmatpush2.msra.mxu0 0.0
    %938 = vmatprep.subr.mxu0 0.0
    %939 = vmatpush2.msra.mxu0 0.0
    %940 = vmatprep.subr.mxu0 0.0
    %941 = vmatpush2.msra.mxu0 0.0
    %942 = vmatprep.subr.mxu0 0.0
    %943 = vmatpush2.msra.mxu0 0.0
    %944 = vmatprep.mubr.f32.mxu0 0.0
    %945 = vmatmul.mubr.f32.gmra.mxu0 %v857
    %v946 = vpop.f32.mrf.mxu0
    %v947 = vadd.f32 %v854, %v946
    %v948 = vpop.f32.mrf.mxu0
    %949 = vmatprep.mubr.f32.mxu0 0.0
    %950 = vmatmul.mubr.f32.gmra.mxu0 %v860
    %v951 = vpop.f32.mrf.mxu0
    %v952 = vadd.f32 %v854, %v951
    %v953 = vpop.f32.mrf.mxu0
    %954 = vmatprep.mubr.f32.mxu0 0.0
    %955 = vmatmul.mubr.f32.gmra.mxu0 %v863
    %v956 = vpop.f32.mrf.mxu0
    %v957 = vadd.f32 %v854, %v956
    %v958 = vpop.f32.mrf.mxu0
    %959 = vmatprep.mubr.f32.mxu0 0.0
    %960 = vmatmul.mubr.f32.gmra.mxu0 %v866
    %v961 = vpop.f32.mrf.mxu0
    %v962 = vadd.f32 %v854, %v961
    %v963 = vpop.f32.mrf.mxu0
    %964 = vmatprep.mubr.f32.mxu0 0.0
    %965 = vmatmul.mubr.f32.gmra.mxu0 %v869
    %v966 = vpop.f32.mrf.mxu0
    %v967 = vadd.f32 %v854, %v966
    %v968 = vpop.f32.mrf.mxu0
    %969 = vmatprep.mubr.f32.mxu0 0.0
    %970 = vmatmul.mubr.f32.gmra.mxu0 %v872
    %v971 = vpop.f32.mrf.mxu0
    %v972 = vadd.f32 %v854, %v971
    %v973 = vpop.f32.mrf.mxu0
    %974 = vmatprep.mubr.f32.mxu0 0.0
    %975 = vmatmul.mubr.f32.gmra.mxu0 %v875
    %v976 = vpop.f32.mrf.mxu0
    %v977 = vadd.f32 %v854, %v976
    %v978 = vpop.f32.mrf.mxu0
    %979 = vmatprep.mubr.f32.mxu0 0.0
    %980 = vmatmul.mubr.f32.gmra.mxu0 %v878
    %v981 = vpop.f32.mrf.mxu0
    %v982 = vadd.f32 %v854, %v981
    %v983 = vpop.f32.mrf.mxu0
    %984 = vdwg.mxu0
    %v985 = vmax.f32 %v947, 0.0
    %v986 = vmax.f32 %v952, 0.0
    %v987 = vmax.f32 %v957, 0.0
    %v988 = vmax.f32 %v962, 0.0
    %v989 = vmax.f32 %v967, 0.0
    %v990 = vmax.f32 %v972, 0.0
    %v991 = vmax.f32 %v977, 0.0
    %v992 = vmax.f32 %v982, 0.0
    %v993 = vld [vmem:[#allocation2 + $0x70] sm:$0xff]
    %v994 = vld [vmem:[#allocation2 + $0x78] sm:$0xff]
    %v995 = vld [vmem:[#allocation2 + $0x80] sm:$0xff]
    %v996 = vld [vmem:[#allocation2 + $0x88] sm:$0xff]
    %v997 = vld [vmem:[#allocation2 + $0x90] sm:$0x1]
    %v998 = vlaneseq
    %v999 = vshrl.u32 %v998, 7
    %v1000 = vsub.s32 0, %v999
    %v1001 = vrot.slane %v997, %v1000
    %1002 = vmatprep.subr.mxu0 0.0
    %1003 = vmatpush1.msra.mxu0 0.0
    %1004 = vmatprep.subr.mxu0 0.0
    %1005 = vmatpush1.msra.mxu0 0.0
    %1006 = vmatprep.subr.mxu0 0.0
    %1007 = vmatpush1.msra.mxu0 0.0
    %1008 = vmatprep.subr.mxu0 0.0
    %1009 = vmatpush1.msra.mxu0 0.0
    %1010 = vmatprep.subr.mxu0 0.0
    %1011 = vmatpush1.msra.mxu0 0.0
    %1012 = vmatprep.subr.mxu0 0.0
    %1013 = vmatpush1.msra.mxu0 0.0
    %1014 = vmatprep.subr.mxu0 0.0
    %1015 = vmatpush1.msra.mxu0 0.0
    %1016 = vmatprep.subr.mxu0 0.0
    %1017 = vmatpush1.msra.mxu0 0.0
    %1018 = vmatprep.subr.mxu0 0.0
    %1019 = vmatpush1.msra.mxu0 0.0
    %1020 = vmatprep.subr.mxu0 0.0
    %1021 = vmatpush1.msra.mxu0 0.0
    %1022 = vmatprep.subr.mxu0 0.0
    %1023 = vmatpush1.msra.mxu0 0.0
    %1024 = vmatprep.subr.mxu0 0.0
    %1025 = vmatpush1.msra.mxu0 0.0
    %1026 = vmatprep.subr.mxu0 0.0
    %1027 = vmatpush1.msra.mxu0 %v996
    %1028 = vmatprep.subr.mxu0 0.0
    %1029 = vmatpush1.msra.mxu0 %v995
    %1030 = vmatprep.subr.mxu0 0.0
    %1031 = vmatpush1.msra.mxu0 %v994
    %1032 = vmatprep.subr.mxu0 0.0
    %1033 = vmatpush1.msra.mxu0 %v993
    %1034 = vmatprep.subr.mxu0 0.0
    %1035 = vmatpush2.msra.mxu0 0.0
    %1036 = vmatprep.subr.mxu0 0.0
    %1037 = vmatpush2.msra.mxu0 0.0
    %1038 = vmatprep.subr.mxu0 0.0
    %1039 = vmatpush2.msra.mxu0 0.0
    %1040 = vmatprep.subr.mxu0 0.0
    %1041 = vmatpush2.msra.mxu0 0.0
    %1042 = vmatprep.subr.mxu0 0.0
    %1043 = vmatpush2.msra.mxu0 0.0
    %1044 = vmatprep.subr.mxu0 0.0
    %1045 = vmatpush2.msra.mxu0 0.0
    %1046 = vmatprep.subr.mxu0 0.0
    %1047 = vmatpush2.msra.mxu0 0.0
    %1048 = vmatprep.subr.mxu0 0.0
    %1049 = vmatpush2.msra.mxu0 0.0
    %1050 = vmatprep.subr.mxu0 0.0
    %1051 = vmatpush2.msra.mxu0 0.0
    %1052 = vmatprep.subr.mxu0 0.0
    %1053 = vmatpush2.msra.mxu0 0.0
    %1054 = vmatprep.subr.mxu0 0.0
    %1055 = vmatpush2.msra.mxu0 0.0
    %1056 = vmatprep.subr.mxu0 0.0
    %1057 = vmatpush2.msra.mxu0 0.0
    %1058 = vmatprep.subr.mxu0 0.0
    %1059 = vmatpush2.msra.mxu0 0.0
    %1060 = vmatprep.subr.mxu0 0.0
    %1061 = vmatpush2.msra.mxu0 0.0
    %1062 = vmatprep.subr.mxu0 0.0
    %1063 = vmatpush2.msra.mxu0 0.0
    %1064 = vmatprep.subr.mxu0 0.0
    %1065 = vmatpush2.msra.mxu0 0.0
    %1066 = vmatprep.mubr.f32.mxu0 0.0
    %1067 = vmatmul.mubr.f32.gmra.mxu0 %v857
    %v1068 = vpop.f32.mrf.mxu0
    %v1069 = vadd.f32 %v1001, %v1068
    %v1070 = vpop.f32.mrf.mxu0
    %1071 = vmatprep.mubr.f32.mxu0 0.0
    %1072 = vmatmul.mubr.f32.gmra.mxu0 %v860
    %v1073 = vpop.f32.mrf.mxu0
    %v1074 = vadd.f32 %v1001, %v1073
    %v1075 = vpop.f32.mrf.mxu0
    %1076 = vmatprep.mubr.f32.mxu0 0.0
    %1077 = vmatmul.mubr.f32.gmra.mxu0 %v863
    %v1078 = vpop.f32.mrf.mxu0
    %v1079 = vadd.f32 %v1001, %v1078
    %v1080 = vpop.f32.mrf.mxu0
    %1081 = vmatprep.mubr.f32.mxu0 0.0
    %1082 = vmatmul.mubr.f32.gmra.mxu0 %v866
    %v1083 = vpop.f32.mrf.mxu0
    %v1084 = vadd.f32 %v1001, %v1083
    %v1085 = vpop.f32.mrf.mxu0
    %1086 = vmatprep.mubr.f32.mxu0 0.0
    %1087 = vmatmul.mubr.f32.gmra.mxu0 %v869
    %v1088 = vpop.f32.mrf.mxu0
    %v1089 = vadd.f32 %v1001, %v1088
    %v1090 = vpop.f32.mrf.mxu0
    %1091 = vmatprep.mubr.f32.mxu0 0.0
    %1092 = vmatmul.mubr.f32.gmra.mxu0 %v872
    %v1093 = vpop.f32.mrf.mxu0
    %v1094 = vadd.f32 %v1001, %v1093
    %v1095 = vpop.f32.mrf.mxu0
    %1096 = vmatprep.mubr.f32.mxu0 0.0
    %1097 = vmatmul.mubr.f32.gmra.mxu0 %v875
    %v1098 = vpop.f32.mrf.mxu0
    %v1099 = vadd.f32 %v1001, %v1098
    %v1100 = vpop.f32.mrf.mxu0
    %1101 = vmatprep.mubr.f32.mxu0 0.0
    %1102 = vmatmul.mubr.f32.gmra.mxu0 %v878
    %v1103 = vpop.f32.mrf.mxu0
    %v1104 = vadd.f32 %v1001, %v1103
    %v1105 = vpop.f32.mrf.mxu0
    %1106 = vdwg.mxu0
    %v1107 = vmax.f32 %v1069, 0.0
    %v1108 = vmax.f32 %v1074, 0.0
    %v1109 = vmax.f32 %v1079, 0.0
    %v1110 = vmax.f32 %v1084, 0.0
    %v1111 = vmax.f32 %v1089, 0.0
    %v1112 = vmax.f32 %v1094, 0.0
    %v1113 = vmax.f32 %v1099, 0.0
    %v1114 = vmax.f32 %v1104, 0.0
    %v1115 = vld [vmem:[#allocation2 + $0x98] sm:$0xff]
    %v1116 = vld [vmem:[#allocation2 + $0xa0] sm:$0xff]
    %v1117 = vld [vmem:[#allocation2 + $0xa8] sm:$0xff]
    %v1118 = vld [vmem:[#allocation2 + $0xb0] sm:$0xff]
    %v1119 = vld [vmem:[#allocation2 + $0xb8] sm:$0x1]
    %v1120 = vlaneseq
    %v1121 = vshrl.u32 %v1120, 7
    %v1122 = vsub.s32 0, %v1121
    %v1123 = vrot.slane %v1119, %v1122
    %v1125 = vsel %vm855, %v985, 0
    %v1128 = vsel %vm855, %v986, 0
    %v1131 = vsel %vm855, %v987, 0
    %v1134 = vsel %vm855, %v988, 0
    %v1137 = vsel %vm855, %v989, 0
    %v1140 = vsel %vm855, %v990, 0
    %v1143 = vsel %vm855, %v991, 0
    %v1146 = vsel %vm855, %v992, 0
    %1148 = vmatprep.subr.mxu0 0.0
    %1149 = vmatpush1.msra.mxu0 0.0
    %1150 = vmatprep.subr.mxu0 0.0
    %1151 = vmatpush1.msra.mxu0 0.0
    %1152 = vmatprep.subr.mxu0 0.0
    %1153 = vmatpush1.msra.mxu0 0.0
    %1154 = vmatprep.subr.mxu0 0.0
    %1155 = vmatpush1.msra.mxu0 0.0
    %1156 = vmatprep.subr.mxu0 0.0
    %1157 = vmatpush1.msra.mxu0 0.0
    %1158 = vmatprep.subr.mxu0 0.0
    %1159 = vmatpush1.msra.mxu0 0.0
    %1160 = vmatprep.subr.mxu0 0.0
    %1161 = vmatpush1.msra.mxu0 0.0
    %1162 = vmatprep.subr.mxu0 0.0
    %1163 = vmatpush1.msra.mxu0 0.0
    %1164 = vmatprep.subr.mxu0 0.0
    %1165 = vmatpush1.msra.mxu0 0.0
    %1166 = vmatprep.subr.mxu0 0.0
    %1167 = vmatpush1.msra.mxu0 0.0
    %1168 = vmatprep.subr.mxu0 0.0
    %1169 = vmatpush1.msra.mxu0 0.0
    %1170 = vmatprep.subr.mxu0 0.0
    %1171 = vmatpush1.msra.mxu0 0.0
    %1172 = vmatprep.subr.mxu0 0.0
    %1173 = vmatpush1.msra.mxu0 %v1118
    %1174 = vmatprep.subr.mxu0 0.0
    %1175 = vmatpush1.msra.mxu0 %v1117
    %1176 = vmatprep.subr.mxu0 0.0
    %1177 = vmatpush1.msra.mxu0 %v1116
    %1178 = vmatprep.subr.mxu0 0.0
    %1179 = vmatpush1.msra.mxu0 %v1115
    %1180 = vmatprep.subr.mxu0 0.0
    %1181 = vmatpush2.msra.mxu0 0.0
    %1182 = vmatprep.subr.mxu0 0.0
    %1183 = vmatpush2.msra.mxu0 0.0
    %1184 = vmatprep.subr.mxu0 0.0
    %1185 = vmatpush2.msra.mxu0 0.0
    %1186 = vmatprep.subr.mxu0 0.0
    %1187 = vmatpush2.msra.mxu0 0.0
    %1188 = vmatprep.subr.mxu0 0.0
    %1189 = vmatpush2.msra.mxu0 0.0
    %1190 = vmatprep.subr.mxu0 0.0
    %1191 = vmatpush2.msra.mxu0 0.0
    %1192 = vmatprep.subr.mxu0 0.0
    %1193 = vmatpush2.msra.mxu0 0.0
    %1194 = vmatprep.subr.mxu0 0.0
    %1195 = vmatpush2.msra.mxu0 0.0
    %1196 = vmatprep.subr.mxu0 0.0
    %1197 = vmatpush2.msra.mxu0 0.0
    %1198 = vmatprep.subr.mxu0 0.0
    %1199 = vmatpush2.msra.mxu0 0.0
    %1200 = vmatprep.subr.mxu0 0.0
    %1201 = vmatpush2.msra.mxu0 0.0
    %1202 = vmatprep.subr.mxu0 0.0
    %1203 = vmatpush2.msra.mxu0 0.0
    %1204 = vmatprep.subr.mxu0 0.0
    %1205 = vmatpush2.msra.mxu0 0.0
    %1206 = vmatprep.subr.mxu0 0.0
    %1207 = vmatpush2.msra.mxu0 0.0
    %1208 = vmatprep.subr.mxu0 0.0
    %1209 = vmatpush2.msra.mxu0 0.0
    %1210 = vmatprep.subr.mxu0 0.0
    %1211 = vmatpush2.msra.mxu0 0.0
    %1212 = vmatprep.mubr.f32.mxu0 0.0
    %1213 = vmatmul.mubr.f32.gmra.mxu0 %v1125
    %v1214 = vpop.f32.mrf.mxu0
    %v1215 = vadd.f32 %v1123, %v1214
    %v1216 = vpop.f32.mrf.mxu0
    %1217 = vmatprep.mubr.f32.mxu0 0.0
    %1218 = vmatmul.mubr.f32.gmra.mxu0 %v1128
    %v1219 = vpop.f32.mrf.mxu0
    %v1220 = vadd.f32 %v1123, %v1219
    %v1221 = vpop.f32.mrf.mxu0
    %1222 = vmatprep.mubr.f32.mxu0 0.0
    %1223 = vmatmul.mubr.f32.gmra.mxu0 %v1131
    %v1224 = vpop.f32.mrf.mxu0
    %v1225 = vadd.f32 %v1123, %v1224
    %v1226 = vpop.f32.mrf.mxu0
    %1227 = vmatprep.mubr.f32.mxu0 0.0
    %1228 = vmatmul.mubr.f32.gmra.mxu0 %v1134
    %v1229 = vpop.f32.mrf.mxu0
    %v1230 = vadd.f32 %v1123, %v1229
    %v1231 = vpop.f32.mrf.mxu0
    %1232 = vmatprep.mubr.f32.mxu0 0.0
    %1233 = vmatmul.mubr.f32.gmra.mxu0 %v1137
    %v1234 = vpop.f32.mrf.mxu0
    %v1235 = vadd.f32 %v1123, %v1234
    %v1236 = vpop.f32.mrf.mxu0
    %1237 = vmatprep.mubr.f32.mxu0 0.0
    %1238 = vmatmul.mubr.f32.gmra.mxu0 %v1140
    %v1239 = vpop.f32.mrf.mxu0
    %v1240 = vadd.f32 %v1123, %v1239
    %v1241 = vpop.f32.mrf.mxu0
    %1242 = vmatprep.mubr.f32.mxu0 0.0
    %1243 = vmatmul.mubr.f32.gmra.mxu0 %v1143
    %v1244 = vpop.f32.mrf.mxu0
    %v1245 = vadd.f32 %v1123, %v1244
    %v1246 = vpop.f32.mrf.mxu0
    %1247 = vmatprep.mubr.f32.mxu0 0.0
    %1248 = vmatmul.mubr.f32.gmra.mxu0 %v1146
    %v1249 = vpop.f32.mrf.mxu0
    %v1250 = vadd.f32 %v1123, %v1249
    %v1251 = vpop.f32.mrf.mxu0
    %1252 = vdwg.mxu0
    %v1253 = vmax.f32 %v1215, 0.0
    %v1254 = vmax.f32 %v1220, 0.0
    %v1255 = vmax.f32 %v1225, 0.0
    %v1256 = vmax.f32 %v1230, 0.0
    %v1257 = vmax.f32 %v1235, 0.0
    %v1258 = vmax.f32 %v1240, 0.0
    %v1259 = vmax.f32 %v1245, 0.0
    %v1260 = vmax.f32 %v1250, 0.0
    %v1261 = vld [vmem:[#allocation2 + $0x1a8] sm:$0xff]
    %v1262 = vld [vmem:[#allocation2 + $0x1b0] sm:$0xff]
    %v1263 = vld [vmem:[#allocation2 + $0x1b8] sm:$0xff]
    %v1264 = vld [vmem:[#allocation2 + $0x1c0] sm:$0xff]
    %v1266 = vsel %vm533, %v1253, 0
    %v1269 = vsel %vm533, %v1254, 0
    %v1272 = vsel %vm533, %v1255, 0
    %v1275 = vsel %vm533, %v1256, 0
    %v1278 = vsel %vm533, %v1257, 0
    %v1281 = vsel %vm533, %v1258, 0
    %v1284 = vsel %vm533, %v1259, 0
    %v1287 = vsel %vm533, %v1260, 0
    %1289 = vmatprep.subr.mxu0 0.0
    %1290 = vmatpush1.msra.mxu0 0.0
    %1291 = vmatprep.subr.mxu0 0.0
    %1292 = vmatpush1.msra.mxu0 0.0
    %1293 = vmatprep.subr.mxu0 0.0
    %1294 = vmatpush1.msra.mxu0 0.0
    %1295 = vmatprep.subr.mxu0 0.0
    %1296 = vmatpush1.msra.mxu0 0.0
    %1297 = vmatprep.subr.mxu0 0.0
    %1298 = vmatpush1.msra.mxu0 0.0
    %1299 = vmatprep.subr.mxu0 0.0
    %1300 = vmatpush1.msra.mxu0 0.0
    %1301 = vmatprep.subr.mxu0 0.0
    %1302 = vmatpush1.msra.mxu0 0.0
    %1303 = vmatprep.subr.mxu0 0.0
    %1304 = vmatpush1.msra.mxu0 0.0
    %1305 = vmatprep.subr.mxu0 0.0
    %1306 = vmatpush1.msra.mxu0 0.0
    %1307 = vmatprep.subr.mxu0 0.0
    %1308 = vmatpush1.msra.mxu0 0.0
    %1309 = vmatprep.subr.mxu0 0.0
    %1310 = vmatpush1.msra.mxu0 0.0
    %1311 = vmatprep.subr.mxu0 0.0
    %1312 = vmatpush1.msra.mxu0 0.0
    %1313 = vmatprep.subr.mxu0 0.0
    %1314 = vmatpush1.msra.mxu0 0.0
    %1315 = vmatprep.subr.mxu0 0.0
    %1316 = vmatpush1.msra.mxu0 0.0
    %1317 = vmatprep.subr.mxu0 0.0
    %1318 = vmatpush1.msra.mxu0 %v1264
    %1319 = vmatprep.subr.mxu0 0.0
    %1320 = vmatpush1.msra.mxu0 %v1263
    %1321 = vmatprep.subr.mxu0 0.0
    %1322 = vmatpush2.msra.mxu0 0.0
    %1323 = vmatprep.subr.mxu0 0.0
    %1324 = vmatpush2.msra.mxu0 0.0
    %1325 = vmatprep.subr.mxu0 0.0
    %1326 = vmatpush2.msra.mxu0 0.0
    %1327 = vmatprep.subr.mxu0 0.0
    %1328 = vmatpush2.msra.mxu0 0.0
    %1329 = vmatprep.subr.mxu0 0.0
    %1330 = vmatpush2.msra.mxu0 0.0
    %1331 = vmatprep.subr.mxu0 0.0
    %1332 = vmatpush2.msra.mxu0 0.0
    %1333 = vmatprep.subr.mxu0 0.0
    %1334 = vmatpush2.msra.mxu0 0.0
    %1335 = vmatprep.subr.mxu0 0.0
    %1336 = vmatpush2.msra.mxu0 0.0
    %1337 = vmatprep.subr.mxu0 0.0
    %1338 = vmatpush2.msra.mxu0 0.0
    %1339 = vmatprep.subr.mxu0 0.0
    %1340 = vmatpush2.msra.mxu0 0.0
    %1341 = vmatprep.subr.mxu0 0.0
    %1342 = vmatpush2.msra.mxu0 0.0
    %1343 = vmatprep.subr.mxu0 0.0
    %1344 = vmatpush2.msra.mxu0 0.0
    %1345 = vmatprep.subr.mxu0 0.0
    %1346 = vmatpush2.msra.mxu0 0.0
    %1347 = vmatprep.subr.mxu0 0.0
    %1348 = vmatpush2.msra.mxu0 0.0
    %1349 = vmatprep.subr.mxu0 0.0
    %1350 = vmatpush2.msra.mxu0 0.0
    %1351 = vmatprep.subr.mxu0 0.0
    %1352 = vmatpush2.msra.mxu0 0.0
    %1353 = vmatprep.mubr.f32.mxu0 0.0
    %1354 = vmatmul.mubr.f32.gmra.mxu0 %v1266
    %v1355 = vpop.f32.mrf.mxu0
    %v1356 = vadd.f32 0.0, %v1355
    %v1357 = vpop.f32.mrf.mxu0
    %1358 = vmatprep.mubr.f32.mxu0 0.0
    %1359 = vmatmul.mubr.f32.gmra.mxu0 %v1269
    %v1360 = vpop.f32.mrf.mxu0
    %v1361 = vadd.f32 0.0, %v1360
    %v1362 = vpop.f32.mrf.mxu0
    %1363 = vmatprep.mubr.f32.mxu0 0.0
    %1364 = vmatmul.mubr.f32.gmra.mxu0 %v1272
    %v1365 = vpop.f32.mrf.mxu0
    %v1366 = vadd.f32 0.0, %v1365
    %v1367 = vpop.f32.mrf.mxu0
    %1368 = vmatprep.mubr.f32.mxu0 0.0
    %1369 = vmatmul.mubr.f32.gmra.mxu0 %v1275
    %v1370 = vpop.f32.mrf.mxu0
    %v1371 = vadd.f32 0.0, %v1370
    %v1372 = vpop.f32.mrf.mxu0
    %1373 = vmatprep.mubr.f32.mxu0 0.0
    %1374 = vmatmul.mubr.f32.gmra.mxu0 %v1278
    %v1375 = vpop.f32.mrf.mxu0
    %v1376 = vadd.f32 0.0, %v1375
    %v1377 = vpop.f32.mrf.mxu0
    %1378 = vmatprep.mubr.f32.mxu0 0.0
    %1379 = vmatmul.mubr.f32.gmra.mxu0 %v1281
    %v1380 = vpop.f32.mrf.mxu0
    %v1381 = vadd.f32 0.0, %v1380
    %v1382 = vpop.f32.mrf.mxu0
    %1383 = vmatprep.mubr.f32.mxu0 0.0
    %1384 = vmatmul.mubr.f32.gmra.mxu0 %v1284
    %v1385 = vpop.f32.mrf.mxu0
    %v1386 = vadd.f32 0.0, %v1385
    %v1387 = vpop.f32.mrf.mxu0
    %1388 = vmatprep.mubr.f32.mxu0 0.0
    %1389 = vmatmul.mubr.f32.gmra.mxu0 %v1287
    %v1390 = vpop.f32.mrf.mxu0
    %v1391 = vadd.f32 0.0, %v1390
    %v1392 = vpop.f32.mrf.mxu0
    %1393 = vdwg.mxu0
    %v1395 = vsel %vm533, %v1107, 0
    %v1398 = vsel %vm533, %v1108, 0
    %v1401 = vsel %vm533, %v1109, 0
    %v1404 = vsel %vm533, %v1110, 0
    %v1407 = vsel %vm533, %v1111, 0
    %v1410 = vsel %vm533, %v1112, 0
    %v1413 = vsel %vm533, %v1113, 0
    %v1416 = vsel %vm533, %v1114, 0
    %1418 = vmatprep.subr.mxu0 0.0
    %1419 = vmatpush1.msra.mxu0 0.0
    %1420 = vmatprep.subr.mxu0 0.0
    %1421 = vmatpush1.msra.mxu0 0.0
    %1422 = vmatprep.subr.mxu0 0.0
    %1423 = vmatpush1.msra.mxu0 0.0
    %1424 = vmatprep.subr.mxu0 0.0
    %1425 = vmatpush1.msra.mxu0 0.0
    %1426 = vmatprep.subr.mxu0 0.0
    %1427 = vmatpush1.msra.mxu0 0.0
    %1428 = vmatprep.subr.mxu0 0.0
    %1429 = vmatpush1.msra.mxu0 0.0
    %1430 = vmatprep.subr.mxu0 0.0
    %1431 = vmatpush1.msra.mxu0 0.0
    %1432 = vmatprep.subr.mxu0 0.0
    %1433 = vmatpush1.msra.mxu0 0.0
    %1434 = vmatprep.subr.mxu0 0.0
    %1435 = vmatpush1.msra.mxu0 0.0
    %1436 = vmatprep.subr.mxu0 0.0
    %1437 = vmatpush1.msra.mxu0 0.0
    %1438 = vmatprep.subr.mxu0 0.0
    %1439 = vmatpush1.msra.mxu0 0.0
    %1440 = vmatprep.subr.mxu0 0.0
    %1441 = vmatpush1.msra.mxu0 0.0
    %1442 = vmatprep.subr.mxu0 0.0
    %1443 = vmatpush1.msra.mxu0 0.0
    %1444 = vmatprep.subr.mxu0 0.0
    %1445 = vmatpush1.msra.mxu0 0.0
    %1446 = vmatprep.subr.mxu0 0.0
    %1447 = vmatpush1.msra.mxu0 %v1262
    %1448 = vmatprep.subr.mxu0 0.0
    %1449 = vmatpush1.msra.mxu0 %v1261
    %1450 = vmatprep.subr.mxu0 0.0
    %1451 = vmatpush2.msra.mxu0 0.0
    %1452 = vmatprep.subr.mxu0 0.0
    %1453 = vmatpush2.msra.mxu0 0.0
    %1454 = vmatprep.subr.mxu0 0.0
    %1455 = vmatpush2.msra.mxu0 0.0
    %1456 = vmatprep.subr.mxu0 0.0
    %1457 = vmatpush2.msra.mxu0 0.0
    %1458 = vmatprep.subr.mxu0 0.0
    %1459 = vmatpush2.msra.mxu0 0.0
    %1460 = vmatprep.subr.mxu0 0.0
    %1461 = vmatpush2.msra.mxu0 0.0
    %1462 = vmatprep.subr.mxu0 0.0
    %1463 = vmatpush2.msra.mxu0 0.0
    %1464 = vmatprep.subr.mxu0 0.0
    %1465 = vmatpush2.msra.mxu0 0.0
    %1466 = vmatprep.subr.mxu0 0.0
    %1467 = vmatpush2.msra.mxu0 0.0
    %1468 = vmatprep.subr.mxu0 0.0
    %1469 = vmatpush2.msra.mxu0 0.0
    %1470 = vmatprep.subr.mxu0 0.0
    %1471 = vmatpush2.msra.mxu0 0.0
    %1472 = vmatprep.subr.mxu0 0.0
    %1473 = vmatpush2.msra.mxu0 0.0
    %1474 = vmatprep.subr.mxu0 0.0
    %1475 = vmatpush2.msra.mxu0 0.0
    %1476 = vmatprep.subr.mxu0 0.0
    %1477 = vmatpush2.msra.mxu0 0.0
    %1478 = vmatprep.subr.mxu0 0.0
    %1479 = vmatpush2.msra.mxu0 0.0
    %1480 = vmatprep.subr.mxu0 0.0
    %1481 = vmatpush2.msra.mxu0 0.0
    %1482 = vmatprep.mubr.f32.mxu0 0.0
    %1483 = vmatmul.mubr.f32.gmra.mxu0 %v1395
    %v1484 = vpop.f32.mrf.mxu0
    %v1485 = vadd.f32 %v1356, %v1484
    %v1486 = vpop.f32.mrf.mxu0
    %1487 = vmatprep.mubr.f32.mxu0 0.0
    %1488 = vmatmul.mubr.f32.gmra.mxu0 %v1398
    %v1489 = vpop.f32.mrf.mxu0
    %v1490 = vadd.f32 %v1361, %v1489
    %v1491 = vpop.f32.mrf.mxu0
    %1492 = vmatprep.mubr.f32.mxu0 0.0
    %1493 = vmatmul.mubr.f32.gmra.mxu0 %v1401
    %v1494 = vpop.f32.mrf.mxu0
    %v1495 = vadd.f32 %v1366, %v1494
    %v1496 = vpop.f32.mrf.mxu0
    %1497 = vmatprep.mubr.f32.mxu0 0.0
    %1498 = vmatmul.mubr.f32.gmra.mxu0 %v1404
    %v1499 = vpop.f32.mrf.mxu0
    %v1500 = vadd.f32 %v1371, %v1499
    %v1501 = vpop.f32.mrf.mxu0
    %1502 = vmatprep.mubr.f32.mxu0 0.0
    %1503 = vmatmul.mubr.f32.gmra.mxu0 %v1407
    %v1504 = vpop.f32.mrf.mxu0
    %v1505 = vadd.f32 %v1376, %v1504
    %v1506 = vpop.f32.mrf.mxu0
    %1507 = vmatprep.mubr.f32.mxu0 0.0
    %1508 = vmatmul.mubr.f32.gmra.mxu0 %v1410
    %v1509 = vpop.f32.mrf.mxu0
    %v1510 = vadd.f32 %v1381, %v1509
    %v1511 = vpop.f32.mrf.mxu0
    %1512 = vmatprep.mubr.f32.mxu0 0.0
    %1513 = vmatmul.mubr.f32.gmra.mxu0 %v1413
    %v1514 = vpop.f32.mrf.mxu0
    %v1515 = vadd.f32 %v1386, %v1514
    %v1516 = vpop.f32.mrf.mxu0
    %1517 = vmatprep.mubr.f32.mxu0 0.0
    %1518 = vmatmul.mubr.f32.gmra.mxu0 %v1416
    %v1519 = vpop.f32.mrf.mxu0
    %v1520 = vadd.f32 %v1391, %v1519
    %v1521 = vpop.f32.mrf.mxu0
    %1522 = vdwg.mxu0
    %v1523 = vld [vmem:[#allocation2 + $0x1c8] sm:$0x1]
    %v1524 = vlaneseq
    %v1525 = vshrl.u32 %v1524, 7
    %v1526 = vsub.s32 0, %v1525
    %v1527 = vrot.slane %v1523, %v1526
    %v1528 = vadd.f32 %v1485, %v1527
    %v1529 = vadd.f32 %v1490, %v1527
    %v1530 = vadd.f32 %v1495, %v1527
    %v1531 = vadd.f32 %v1500, %v1527
    %v1532 = vadd.f32 %v1505, %v1527
    %v1533 = vadd.f32 %v1510, %v1527
    %v1534 = vadd.f32 %v1515, %v1527
    %v1535 = vadd.f32 %v1520, %v1527
    %v1536 = vmax.f32 %v1528, 0.0
    %v1537 = vmax.f32 %v1529, 0.0
    %v1538 = vmax.f32 %v1530, 0.0
    %v1539 = vmax.f32 %v1531, 0.0
    %v1540 = vmax.f32 %v1532, 0.0
    %v1541 = vmax.f32 %v1533, 0.0
    %v1542 = vmax.f32 %v1534, 0.0
    %v1543 = vmax.f32 %v1535, 0.0
    %v1544 = vld [vmem:[#allocation2 + $0x1d0] sm:$0xff]
    %v1545 = vld [vmem:[#allocation2 + $0x1d8] sm:$0xff]
    %v1546 = vld [vmem:[#allocation2 + $0x1e0] sm:$0x1]
    %v1547 = vlaneseq
    %v1548 = vshrl.u32 %v1547, 7
    %v1549 = vsub.s32 0, %v1548
    %v1550 = vrot.slane %v1546, %v1549
    %v1552 = vsel %vm533, %v1536, 0
    %v1555 = vsel %vm533, %v1537, 0
    %v1558 = vsel %vm533, %v1538, 0
    %v1561 = vsel %vm533, %v1539, 0
    %v1564 = vsel %vm533, %v1540, 0
    %v1567 = vsel %vm533, %v1541, 0
    %v1570 = vsel %vm533, %v1542, 0
    %v1573 = vsel %vm533, %v1543, 0
    %1575 = vmatprep.subr.mxu0 0.0
    %1576 = vmatpush1.msra.mxu0 0.0
    %1577 = vmatprep.subr.mxu0 0.0
    %1578 = vmatpush1.msra.mxu0 0.0
    %1579 = vmatprep.subr.mxu0 0.0
    %1580 = vmatpush1.msra.mxu0 0.0
    %1581 = vmatprep.subr.mxu0 0.0
    %1582 = vmatpush1.msra.mxu0 0.0
    %1583 = vmatprep.subr.mxu0 0.0
    %1584 = vmatpush1.msra.mxu0 0.0
    %1585 = vmatprep.subr.mxu0 0.0
    %1586 = vmatpush1.msra.mxu0 0.0
    %1587 = vmatprep.subr.mxu0 0.0
    %1588 = vmatpush1.msra.mxu0 0.0
    %1589 = vmatprep.subr.mxu0 0.0
    %1590 = vmatpush1.msra.mxu0 0.0
    %1591 = vmatprep.subr.mxu0 0.0
    %1592 = vmatpush1.msra.mxu0 0.0
    %1593 = vmatprep.subr.mxu0 0.0
    %1594 = vmatpush1.msra.mxu0 0.0
    %1595 = vmatprep.subr.mxu0 0.0
    %1596 = vmatpush1.msra.mxu0 0.0
    %1597 = vmatprep.subr.mxu0 0.0
    %1598 = vmatpush1.msra.mxu0 0.0
    %1599 = vmatprep.subr.mxu0 0.0
    %1600 = vmatpush1.msra.mxu0 0.0
    %1601 = vmatprep.subr.mxu0 0.0
    %1602 = vmatpush1.msra.mxu0 0.0
    %1603 = vmatprep.subr.mxu0 0.0
    %1604 = vmatpush1.msra.mxu0 %v1545
    %1605 = vmatprep.subr.mxu0 0.0
    %1606 = vmatpush1.msra.mxu0 %v1544
    %1607 = vmatprep.subr.mxu0 0.0
    %1608 = vmatpush2.msra.mxu0 0.0
    %1609 = vmatprep.subr.mxu0 0.0
    %1610 = vmatpush2.msra.mxu0 0.0
    %1611 = vmatprep.subr.mxu0 0.0
    %1612 = vmatpush2.msra.mxu0 0.0
    %1613 = vmatprep.subr.mxu0 0.0
    %1614 = vmatpush2.msra.mxu0 0.0
    %1615 = vmatprep.subr.mxu0 0.0
    %1616 = vmatpush2.msra.mxu0 0.0
    %1617 = vmatprep.subr.mxu0 0.0
    %1618 = vmatpush2.msra.mxu0 0.0
    %1619 = vmatprep.subr.mxu0 0.0
    %1620 = vmatpush2.msra.mxu0 0.0
    %1621 = vmatprep.subr.mxu0 0.0
    %1622 = vmatpush2.msra.mxu0 0.0
    %1623 = vmatprep.subr.mxu0 0.0
    %1624 = vmatpush2.msra.mxu0 0.0
    %1625 = vmatprep.subr.mxu0 0.0
    %1626 = vmatpush2.msra.mxu0 0.0
    %1627 = vmatprep.subr.mxu0 0.0
    %1628 = vmatpush2.msra.mxu0 0.0
    %1629 = vmatprep.subr.mxu0 0.0
    %1630 = vmatpush2.msra.mxu0 0.0
    %1631 = vmatprep.subr.mxu0 0.0
    %1632 = vmatpush2.msra.mxu0 0.0
    %1633 = vmatprep.subr.mxu0 0.0
    %1634 = vmatpush2.msra.mxu0 0.0
    %1635 = vmatprep.subr.mxu0 0.0
    %1636 = vmatpush2.msra.mxu0 0.0
    %1637 = vmatprep.subr.mxu0 0.0
    %1638 = vmatpush2.msra.mxu0 0.0
    %1639 = vmatprep.mubr.f32.mxu0 0.0
    %1640 = vmatmul.mubr.f32.gmra.mxu0 %v1552
    %v1641 = vpop.f32.mrf.mxu0
    %v1642 = vadd.f32 %v1550, %v1641
    %v1643 = vpop.f32.mrf.mxu0
    %1644 = vmatprep.mubr.f32.mxu0 0.0
    %1645 = vmatmul.mubr.f32.gmra.mxu0 %v1555
    %v1646 = vpop.f32.mrf.mxu0
    %v1647 = vadd.f32 %v1550, %v1646
    %v1648 = vpop.f32.mrf.mxu0
    %1649 = vmatprep.mubr.f32.mxu0 0.0
    %1650 = vmatmul.mubr.f32.gmra.mxu0 %v1558
    %v1651 = vpop.f32.mrf.mxu0
    %v1652 = vadd.f32 %v1550, %v1651
    %v1653 = vpop.f32.mrf.mxu0
    %1654 = vmatprep.mubr.f32.mxu0 0.0
    %1655 = vmatmul.mubr.f32.gmra.mxu0 %v1561
    %v1656 = vpop.f32.mrf.mxu0
    %v1657 = vadd.f32 %v1550, %v1656
    %v1658 = vpop.f32.mrf.mxu0
    %1659 = vmatprep.mubr.f32.mxu0 0.0
    %1660 = vmatmul.mubr.f32.gmra.mxu0 %v1564
    %v1661 = vpop.f32.mrf.mxu0
    %v1662 = vadd.f32 %v1550, %v1661
    %v1663 = vpop.f32.mrf.mxu0
    %1664 = vmatprep.mubr.f32.mxu0 0.0
    %1665 = vmatmul.mubr.f32.gmra.mxu0 %v1567
    %v1666 = vpop.f32.mrf.mxu0
    %v1667 = vadd.f32 %v1550, %v1666
    %v1668 = vpop.f32.mrf.mxu0
    %1669 = vmatprep.mubr.f32.mxu0 0.0
    %1670 = vmatmul.mubr.f32.gmra.mxu0 %v1570
    %v1671 = vpop.f32.mrf.mxu0
    %v1672 = vadd.f32 %v1550, %v1671
    %v1673 = vpop.f32.mrf.mxu0
    %1674 = vmatprep.mubr.f32.mxu0 0.0
    %1675 = vmatmul.mubr.f32.gmra.mxu0 %v1573
    %v1676 = vpop.f32.mrf.mxu0
    %v1677 = vadd.f32 %v1550, %v1676
    %v1678 = vpop.f32.mrf.mxu0
    %1679 = vdwg.mxu0
    %vm1680 = vcmask 15360
    %v1681 = vsel %vm1680, %v1642, -inf
    %1682 = vmax.xlane.f32.xlu0 %v1681
    %v1683 = vpop.xlane.xlu0 %1682
    %v1684 = vsel %vm1680, %v1647, -inf
    %1685 = vmax.xlane.f32.xlu0 %v1684
    %v1686 = vpop.xlane.xlu0 %1685
    %v1687 = vsel %vm1680, %v1652, -inf
    %1688 = vmax.xlane.f32.xlu0 %v1687
    %v1689 = vpop.xlane.xlu0 %1688
    %v1690 = vsel %vm1680, %v1657, -inf
    %1691 = vmax.xlane.f32.xlu0 %v1690
    %v1692 = vpop.xlane.xlu0 %1691
    %v1693 = vsel %vm1680, %v1662, -inf
    %1694 = vmax.xlane.f32.xlu0 %v1693
    %v1695 = vpop.xlane.xlu0 %1694
    %v1696 = vsel %vm1680, %v1667, -inf
    %1697 = vmax.xlane.f32.xlu0 %v1696
    %v1698 = vpop.xlane.xlu0 %1697
    %v1699 = vsel %vm1680, %v1672, -inf
    %1700 = vmax.xlane.f32.xlu0 %v1699
    %v1701 = vpop.xlane.xlu0 %1700
    %v1702 = vsel %vm1680, %v1677, -inf
    %1703 = vmax.xlane.f32.xlu0 %v1702
    %v1704 = vpop.xlane.xlu0 %1703
    %v1705 = vsub.f32 %v1642, %v1683
    %v1706 = vsub.f32 %v1647, %v1686
    %v1707 = vsub.f32 %v1652, %v1689
    %v1708 = vsub.f32 %v1657, %v1692
    %v1709 = vsub.f32 %v1662, %v1695
    %v1710 = vsub.f32 %v1667, %v1698
    %v1711 = vsub.f32 %v1672, %v1701
    %v1712 = vsub.f32 %v1677, %v1704
    %v1713 = vmul.f32 %v1705, 1.442695
    %v1714 = vpow.pop %v1713
    %v1715 = vmul.f32 %v1706, 1.442695
    %v1716 = vpow.pop %v1715
    %v1717 = vmul.f32 %v1707, 1.442695
    %v1718 = vpow.pop %v1717
    %v1719 = vmul.f32 %v1708, 1.442695
    %v1720 = vpow.pop %v1719
    %v1721 = vmul.f32 %v1709, 1.442695
    %v1722 = vpow.pop %v1721
    %v1723 = vmul.f32 %v1710, 1.442695
    %v1724 = vpow.pop %v1723
    %v1725 = vmul.f32 %v1711, 1.442695
    %v1726 = vpow.pop %v1725
    %v1727 = vmul.f32 %v1712, 1.442695
    %v1728 = vpow.pop %v1727
    %v1729 = vsel %vm1680, %v1714, 0.0
    %1730 = vadd.xlane.f32.xlu0 %v1729
    %v1731 = vpop.xlane.xlu0 %1730
    %v1732 = vsel %vm1680, %v1716, 0.0
    %1733 = vadd.xlane.f32.xlu0 %v1732
    %v1734 = vpop.xlane.xlu0 %1733
    %v1735 = vsel %vm1680, %v1718, 0.0
    %1736 = vadd.xlane.f32.xlu0 %v1735
    %v1737 = vpop.xlane.xlu0 %1736
    %v1738 = vsel %vm1680, %v1720, 0.0
    %1739 = vadd.xlane.f32.xlu0 %v1738
    %v1740 = vpop.xlane.xlu0 %1739
    %v1741 = vsel %vm1680, %v1722, 0.0
    %1742 = vadd.xlane.f32.xlu0 %v1741
    %v1743 = vpop.xlane.xlu0 %1742
    %v1744 = vsel %vm1680, %v1724, 0.0
    %1745 = vadd.xlane.f32.xlu0 %v1744
    %v1746 = vpop.xlane.xlu0 %1745
    %v1747 = vsel %vm1680, %v1726, 0.0
    %1748 = vadd.xlane.f32.xlu0 %v1747
    %v1749 = vpop.xlane.xlu0 %1748
    %v1750 = vsel %vm1680, %v1728, 0.0
    %1751 = vadd.xlane.f32.xlu0 %v1750
    %v1752 = vpop.xlane.xlu0 %1751
    %v1753 = vrcp.pop %v1731
    %v1754 = vrcp.pop %v1734
    %v1755 = vrcp.pop %v1737
    %v1756 = vrcp.pop %v1740
    %v1757 = vrcp.pop %v1743
    %v1758 = vrcp.pop %v1746
    %v1759 = vrcp.pop %v1749
    %v1760 = vrcp.pop %v1752
    %v1761 = vmul.f32 %v1714, %v1753
    %v1762 = vmul.f32 %v1716, %v1754
    %v1763 = vmul.f32 %v1718, %v1755
    %v1764 = vmul.f32 %v1720, %v1756
    %v1765 = vmul.f32 %v1722, %v1757
    %v1766 = vmul.f32 %v1724, %v1758
    %v1767 = vmul.f32 %v1726, %v1759
    %v1768 = vmul.f32 %v1728, %v1760
    %1770 = vset.pattern.permute.xlu0 0
    %1771 = vperm.xlu0 %1770, %v1761
    %v1772 = vpop.permute.xlu0 %1771
    %1775 = vset.pattern.permute.xlu0 0
    %1776 = vperm.xlu0 %1775, %v1762
    %v1777 = vpop.permute.xlu0 %1776
    %1780 = vset.pattern.permute.xlu0 0
    %1781 = vperm.xlu0 %1780, %v1763
    %v1782 = vpop.permute.xlu0 %1781
    %1785 = vset.pattern.permute.xlu0 0
    %1786 = vperm.xlu0 %1785, %v1764
    %v1787 = vpop.permute.xlu0 %1786
    %1790 = vset.pattern.permute.xlu0 0
    %1791 = vperm.xlu0 %1790, %v1765
    %v1792 = vpop.permute.xlu0 %1791
    %1795 = vset.pattern.permute.xlu0 0
    %1796 = vperm.xlu0 %1795, %v1766
    %v1797 = vpop.permute.xlu0 %1796
    %1800 = vset.pattern.permute.xlu0 0
    %1801 = vperm.xlu0 %1800, %v1767
    %v1802 = vpop.permute.xlu0 %1801
    %1805 = vset.pattern.permute.xlu0 0
    %1806 = vperm.xlu0 %1805, %v1768
    %v1807 = vpop.permute.xlu0 %1806
    %v1809 = vmul.f32 %v1772, %v1107
    %v1810 = vmul.f32 %v1777, %v1108
    %v1811 = vmul.f32 %v1782, %v1109
    %v1812 = vmul.f32 %v1787, %v1110
    %v1813 = vmul.f32 %v1792, %v1111
    %v1814 = vmul.f32 %v1797, %v1112
    %v1815 = vmul.f32 %v1802, %v1113
    %v1816 = vmul.f32 %v1807, %v1114
    %1817 = vset.pattern.permute.xlu0 1
    %1818 = vperm.xlu0 %1817, %v1761
    %v1819 = vpop.permute.xlu0 %1818
    %1821 = vset.pattern.permute.xlu0 1
    %1822 = vperm.xlu0 %1821, %v1762
    %v1823 = vpop.permute.xlu0 %1822
    %1825 = vset.pattern.permute.xlu0 1
    %1826 = vperm.xlu0 %1825, %v1763
    %v1827 = vpop.permute.xlu0 %1826
    %1829 = vset.pattern.permute.xlu0 1
    %1830 = vperm.xlu0 %1829, %v1764
    %v1831 = vpop.permute.xlu0 %1830
    %1833 = vset.pattern.permute.xlu0 1
    %1834 = vperm.xlu0 %1833, %v1765
    %v1835 = vpop.permute.xlu0 %1834
    %1837 = vset.pattern.permute.xlu0 1
    %1838 = vperm.xlu0 %1837, %v1766
    %v1839 = vpop.permute.xlu0 %1838
    %1841 = vset.pattern.permute.xlu0 1
    %1842 = vperm.xlu0 %1841, %v1767
    %v1843 = vpop.permute.xlu0 %1842
    %1845 = vset.pattern.permute.xlu0 1
    %1846 = vperm.xlu0 %1845, %v1768
    %v1847 = vpop.permute.xlu0 %1846
    %v1849 = vmul.f32 %v1819, %v1253
    %v1850 = vmul.f32 %v1823, %v1254
    %v1851 = vmul.f32 %v1827, %v1255
    %v1852 = vmul.f32 %v1831, %v1256
    %v1853 = vmul.f32 %v1835, %v1257
    %v1854 = vmul.f32 %v1839, %v1258
    %v1855 = vmul.f32 %v1843, %v1259
    %v1856 = vmul.f32 %v1847, %v1260
    %v1857 = vadd.f32 %v1809, %v1849
    %v1858 = vadd.f32 %v1810, %v1850
    %v1859 = vadd.f32 %v1811, %v1851
    %v1860 = vadd.f32 %v1812, %v1852
    %v1861 = vadd.f32 %v1813, %v1853
    %v1862 = vadd.f32 %v1814, %v1854
    %v1863 = vadd.f32 %v1815, %v1855
    %v1864 = vadd.f32 %v1816, %v1856
    %v1865 = vld [vmem:[#allocation2 + $0xc0] sm:$0xff]
    %v1866 = vld [vmem:[#allocation2 + $0xc8] sm:$0xff]
    %v1867 = vld [vmem:[#allocation2 + $0xd0] sm:$0xff]
    %v1868 = vld [vmem:[#allocation2 + $0xd8] sm:$0xff]
    %v1869 = vld [vmem:[#allocation2 + $0xe0] sm:$0x1]
    %v1870 = vlaneseq
    %v1871 = vshrl.u32 %v1870, 7
    %v1872 = vsub.s32 0, %v1871
    %v1873 = vrot.slane %v1869, %v1872
    %1874 = vmatprep.subr.mxu0 0.0
    %1875 = vmatpush1.msra.mxu0 0.0
    %1876 = vmatprep.subr.mxu0 0.0
    %1877 = vmatpush1.msra.mxu0 0.0
    %1878 = vmatprep.subr.mxu0 0.0
    %1879 = vmatpush1.msra.mxu0 0.0
    %1880 = vmatprep.subr.mxu0 0.0
    %1881 = vmatpush1.msra.mxu0 0.0
    %1882 = vmatprep.subr.mxu0 0.0
    %1883 = vmatpush1.msra.mxu0 0.0
    %1884 = vmatprep.subr.mxu0 0.0
    %1885 = vmatpush1.msra.mxu0 0.0
    %1886 = vmatprep.subr.mxu0 0.0
    %1887 = vmatpush1.msra.mxu0 0.0
    %1888 = vmatprep.subr.mxu0 0.0
    %1889 = vmatpush1.msra.mxu0 0.0
    %1890 = vmatprep.subr.mxu0 0.0
    %1891 = vmatpush1.msra.mxu0 0.0
    %1892 = vmatprep.subr.mxu0 0.0
    %1893 = vmatpush1.msra.mxu0 0.0
    %1894 = vmatprep.subr.mxu0 0.0
    %1895 = vmatpush1.msra.mxu0 0.0
    %1896 = vmatprep.subr.mxu0 0.0
    %1897 = vmatpush1.msra.mxu0 0.0
    %1898 = vmatprep.subr.mxu0 0.0
    %1899 = vmatpush1.msra.mxu0 %v1868
    %1900 = vmatprep.subr.mxu0 0.0
    %1901 = vmatpush1.msra.mxu0 %v1867
    %1902 = vmatprep.subr.mxu0 0.0
    %1903 = vmatpush1.msra.mxu0 %v1866
    %1904 = vmatprep.subr.mxu0 0.0
    %1905 = vmatpush1.msra.mxu0 %v1865
    %1906 = vmatprep.subr.mxu0 0.0
    %1907 = vmatpush2.msra.mxu0 0.0
    %1908 = vmatprep.subr.mxu0 0.0
    %1909 = vmatpush2.msra.mxu0 0.0
    %1910 = vmatprep.subr.mxu0 0.0
    %1911 = vmatpush2.msra.mxu0 0.0
    %1912 = vmatprep.subr.mxu0 0.0
    %1913 = vmatpush2.msra.mxu0 0.0
    %1914 = vmatprep.subr.mxu0 0.0
    %1915 = vmatpush2.msra.mxu0 0.0
    %1916 = vmatprep.subr.mxu0 0.0
    %1917 = vmatpush2.msra.mxu0 0.0
    %1918 = vmatprep.subr.mxu0 0.0
    %1919 = vmatpush2.msra.mxu0 0.0
    %1920 = vmatprep.subr.mxu0 0.0
    %1921 = vmatpush2.msra.mxu0 0.0
    %1922 = vmatprep.subr.mxu0 0.0
    %1923 = vmatpush2.msra.mxu0 0.0
    %1924 = vmatprep.subr.mxu0 0.0
    %1925 = vmatpush2.msra.mxu0 0.0
    %1926 = vmatprep.subr.mxu0 0.0
    %1927 = vmatpush2.msra.mxu0 0.0
    %1928 = vmatprep.subr.mxu0 0.0
    %1929 = vmatpush2.msra.mxu0 0.0
    %1930 = vmatprep.subr.mxu0 0.0
    %1931 = vmatpush2.msra.mxu0 0.0
    %1932 = vmatprep.subr.mxu0 0.0
    %1933 = vmatpush2.msra.mxu0 0.0
    %1934 = vmatprep.subr.mxu0 0.0
    %1935 = vmatpush2.msra.mxu0 0.0
    %1936 = vmatprep.subr.mxu0 0.0
    %1937 = vmatpush2.msra.mxu0 0.0
    %1938 = vmatprep.mubr.f32.mxu0 0.0
    %1939 = vmatmul.mubr.f32.gmra.mxu0 %v857
    %v1940 = vpop.f32.mrf.mxu0
    %v1941 = vadd.f32 %v1873, %v1940
    %v1942 = vpop.f32.mrf.mxu0
    %1943 = vmatprep.mubr.f32.mxu0 0.0
    %1944 = vmatmul.mubr.f32.gmra.mxu0 %v860
    %v1945 = vpop.f32.mrf.mxu0
    %v1946 = vadd.f32 %v1873, %v1945
    %v1947 = vpop.f32.mrf.mxu0
    %1948 = vmatprep.mubr.f32.mxu0 0.0
    %1949 = vmatmul.mubr.f32.gmra.mxu0 %v863
    %v1950 = vpop.f32.mrf.mxu0
    %v1951 = vadd.f32 %v1873, %v1950
    %v1952 = vpop.f32.mrf.mxu0
    %1953 = vmatprep.mubr.f32.mxu0 0.0
    %1954 = vmatmul.mubr.f32.gmra.mxu0 %v866
    %v1955 = vpop.f32.mrf.mxu0
    %v1956 = vadd.f32 %v1873, %v1955
    %v1957 = vpop.f32.mrf.mxu0
    %1958 = vmatprep.mubr.f32.mxu0 0.0
    %1959 = vmatmul.mubr.f32.gmra.mxu0 %v869
    %v1960 = vpop.f32.mrf.mxu0
    %v1961 = vadd.f32 %v1873, %v1960
    %v1962 = vpop.f32.mrf.mxu0
    %1963 = vmatprep.mubr.f32.mxu0 0.0
    %1964 = vmatmul.mubr.f32.gmra.mxu0 %v872
    %v1965 = vpop.f32.mrf.mxu0
    %v1966 = vadd.f32 %v1873, %v1965
    %v1967 = vpop.f32.mrf.mxu0
    %1968 = vmatprep.mubr.f32.mxu0 0.0
    %1969 = vmatmul.mubr.f32.gmra.mxu0 %v875
    %v1970 = vpop.f32.mrf.mxu0
    %v1971 = vadd.f32 %v1873, %v1970
    %v1972 = vpop.f32.mrf.mxu0
    %1973 = vmatprep.mubr.f32.mxu0 0.0
    %1974 = vmatmul.mubr.f32.gmra.mxu0 %v878
    %v1975 = vpop.f32.mrf.mxu0
    %v1976 = vadd.f32 %v1873, %v1975
    %v1977 = vpop.f32.mrf.mxu0
    %1978 = vdwg.mxu0
    %v1979 = vmax.f32 %v1941, 0.0
    %v1980 = vmax.f32 %v1946, 0.0
    %v1981 = vmax.f32 %v1951, 0.0
    %v1982 = vmax.f32 %v1956, 0.0
    %v1983 = vmax.f32 %v1961, 0.0
    %v1984 = vmax.f32 %v1966, 0.0
    %v1985 = vmax.f32 %v1971, 0.0
    %v1986 = vmax.f32 %v1976, 0.0
    %v1987 = vld [vmem:[#allocation2 + $0xe8] sm:$0xff]
    %v1988 = vld [vmem:[#allocation2 + $0xf0] sm:$0xff]
    %v1989 = vld [vmem:[#allocation2 + $0xf8] sm:$0xff]
    %v1990 = vld [vmem:[#allocation2 + $0x100] sm:$0xff]
    %v1991 = vld [vmem:[#allocation2 + $0x108] sm:$0x1]
    %v1992 = vlaneseq
    %v1993 = vshrl.u32 %v1992, 7
    %v1994 = vsub.s32 0, %v1993
    %v1995 = vrot.slane %v1991, %v1994
    %1996 = vmatprep.subr.mxu0 0.0
    %1997 = vmatpush1.msra.mxu0 0.0
    %1998 = vmatprep.subr.mxu0 0.0
    %1999 = vmatpush1.msra.mxu0 0.0
    %2000 = vmatprep.subr.mxu0 0.0
    %2001 = vmatpush1.msra.mxu0 0.0
    %2002 = vmatprep.subr.mxu0 0.0
    %2003 = vmatpush1.msra.mxu0 0.0
    %2004 = vmatprep.subr.mxu0 0.0
    %2005 = vmatpush1.msra.mxu0 0.0
    %2006 = vmatprep.subr.mxu0 0.0
    %2007 = vmatpush1.msra.mxu0 0.0
    %2008 = vmatprep.subr.mxu0 0.0
    %2009 = vmatpush1.msra.mxu0 0.0
    %2010 = vmatprep.subr.mxu0 0.0
    %2011 = vmatpush1.msra.mxu0 0.0
    %2012 = vmatprep.subr.mxu0 0.0
    %2013 = vmatpush1.msra.mxu0 0.0
    %2014 = vmatprep.subr.mxu0 0.0
    %2015 = vmatpush1.msra.mxu0 0.0
    %2016 = vmatprep.subr.mxu0 0.0
    %2017 = vmatpush1.msra.mxu0 0.0
    %2018 = vmatprep.subr.mxu0 0.0
    %2019 = vmatpush1.msra.mxu0 0.0
    %2020 = vmatprep.subr.mxu0 0.0
    %2021 = vmatpush1.msra.mxu0 %v1990
    %2022 = vmatprep.subr.mxu0 0.0
    %2023 = vmatpush1.msra.mxu0 %v1989
    %2024 = vmatprep.subr.mxu0 0.0
    %2025 = vmatpush1.msra.mxu0 %v1988
    %2026 = vmatprep.subr.mxu0 0.0
    %2027 = vmatpush1.msra.mxu0 %v1987
    %2028 = vmatprep.subr.mxu0 0.0
    %2029 = vmatpush2.msra.mxu0 0.0
    %2030 = vmatprep.subr.mxu0 0.0
    %2031 = vmatpush2.msra.mxu0 0.0
    %2032 = vmatprep.subr.mxu0 0.0
    %2033 = vmatpush2.msra.mxu0 0.0
    %2034 = vmatprep.subr.mxu0 0.0
    %2035 = vmatpush2.msra.mxu0 0.0
    %2036 = vmatprep.subr.mxu0 0.0
    %2037 = vmatpush2.msra.mxu0 0.0
    %2038 = vmatprep.subr.mxu0 0.0
    %2039 = vmatpush2.msra.mxu0 0.0
    %2040 = vmatprep.subr.mxu0 0.0
    %2041 = vmatpush2.msra.mxu0 0.0
    %2042 = vmatprep.subr.mxu0 0.0
    %2043 = vmatpush2.msra.mxu0 0.0
    %2044 = vmatprep.subr.mxu0 0.0
    %2045 = vmatpush2.msra.mxu0 0.0
    %2046 = vmatprep.subr.mxu0 0.0
    %2047 = vmatpush2.msra.mxu0 0.0
    %2048 = vmatprep.subr.mxu0 0.0
    %2049 = vmatpush2.msra.mxu0 0.0
    %2050 = vmatprep.subr.mxu0 0.0
    %2051 = vmatpush2.msra.mxu0 0.0
    %2052 = vmatprep.subr.mxu0 0.0
    %2053 = vmatpush2.msra.mxu0 0.0
    %2054 = vmatprep.subr.mxu0 0.0
    %2055 = vmatpush2.msra.mxu0 0.0
    %2056 = vmatprep.subr.mxu0 0.0
    %2057 = vmatpush2.msra.mxu0 0.0
    %2058 = vmatprep.subr.mxu0 0.0
    %2059 = vmatpush2.msra.mxu0 0.0
    %2060 = vmatprep.mubr.f32.mxu0 0.0
    %2061 = vmatmul.mubr.f32.gmra.mxu0 %v1125
    %v2062 = vpop.f32.mrf.mxu0
    %v2063 = vadd.f32 %v1995, %v2062
    %v2064 = vpop.f32.mrf.mxu0
    %2065 = vmatprep.mubr.f32.mxu0 0.0
    %2066 = vmatmul.mubr.f32.gmra.mxu0 %v1128
    %v2067 = vpop.f32.mrf.mxu0
    %v2068 = vadd.f32 %v1995, %v2067
    %v2069 = vpop.f32.mrf.mxu0
    %2070 = vmatprep.mubr.f32.mxu0 0.0
    %2071 = vmatmul.mubr.f32.gmra.mxu0 %v1131
    %v2072 = vpop.f32.mrf.mxu0
    %v2073 = vadd.f32 %v1995, %v2072
    %v2074 = vpop.f32.mrf.mxu0
    %2075 = vmatprep.mubr.f32.mxu0 0.0
    %2076 = vmatmul.mubr.f32.gmra.mxu0 %v1134
    %v2077 = vpop.f32.mrf.mxu0
    %v2078 = vadd.f32 %v1995, %v2077
    %v2079 = vpop.f32.mrf.mxu0
    %2080 = vmatprep.mubr.f32.mxu0 0.0
    %2081 = vmatmul.mubr.f32.gmra.mxu0 %v1137
    %v2082 = vpop.f32.mrf.mxu0
    %v2083 = vadd.f32 %v1995, %v2082
    %v2084 = vpop.f32.mrf.mxu0
    %2085 = vmatprep.mubr.f32.mxu0 0.0
    %2086 = vmatmul.mubr.f32.gmra.mxu0 %v1140
    %v2087 = vpop.f32.mrf.mxu0
    %v2088 = vadd.f32 %v1995, %v2087
    %v2089 = vpop.f32.mrf.mxu0
    %2090 = vmatprep.mubr.f32.mxu0 0.0
    %2091 = vmatmul.mubr.f32.gmra.mxu0 %v1143
    %v2092 = vpop.f32.mrf.mxu0
    %v2093 = vadd.f32 %v1995, %v2092
    %v2094 = vpop.f32.mrf.mxu0
    %2095 = vmatprep.mubr.f32.mxu0 0.0
    %2096 = vmatmul.mubr.f32.gmra.mxu0 %v1146
    %v2097 = vpop.f32.mrf.mxu0
    %v2098 = vadd.f32 %v1995, %v2097
    %v2099 = vpop.f32.mrf.mxu0
    %2100 = vdwg.mxu0
    %v2101 = vmax.f32 %v2063, 0.0
    %v2102 = vmax.f32 %v2068, 0.0
    %v2103 = vmax.f32 %v2073, 0.0
    %v2104 = vmax.f32 %v2078, 0.0
    %v2105 = vmax.f32 %v2083, 0.0
    %v2106 = vmax.f32 %v2088, 0.0
    %v2107 = vmax.f32 %v2093, 0.0
    %v2108 = vmax.f32 %v2098, 0.0
    %v2109 = vld [vmem:[#allocation2 + $0x110] sm:$0xff]
    %v2110 = vld [vmem:[#allocation2 + $0x118] sm:$0xff]
    %v2111 = vld [vmem:[#allocation2 + $0x120] sm:$0x1]
    %v2112 = vlaneseq
    %v2113 = vshrl.u32 %v2112, 7
    %v2114 = vsub.s32 0, %v2113
    %v2115 = vrot.slane %v2111, %v2114
    %v2117 = vsel %vm533, %v1857, 0
    %v2120 = vsel %vm533, %v1858, 0
    %v2123 = vsel %vm533, %v1859, 0
    %v2126 = vsel %vm533, %v1860, 0
    %v2129 = vsel %vm533, %v1861, 0
    %v2132 = vsel %vm533, %v1862, 0
    %v2135 = vsel %vm533, %v1863, 0
    %v2138 = vsel %vm533, %v1864, 0
    %2140 = vmatprep.subr.mxu0 0.0
    %2141 = vmatpush1.msra.mxu0 0.0
    %2142 = vmatprep.subr.mxu0 0.0
    %2143 = vmatpush1.msra.mxu0 0.0
    %2144 = vmatprep.subr.mxu0 0.0
    %2145 = vmatpush1.msra.mxu0 0.0
    %2146 = vmatprep.subr.mxu0 0.0
    %2147 = vmatpush1.msra.mxu0 0.0
    %2148 = vmatprep.subr.mxu0 0.0
    %2149 = vmatpush1.msra.mxu0 0.0
    %2150 = vmatprep.subr.mxu0 0.0
    %2151 = vmatpush1.msra.mxu0 0.0
    %2152 = vmatprep.subr.mxu0 0.0
    %2153 = vmatpush1.msra.mxu0 0.0
    %2154 = vmatprep.subr.mxu0 0.0
    %2155 = vmatpush1.msra.mxu0 0.0
    %2156 = vmatprep.subr.mxu0 0.0
    %2157 = vmatpush1.msra.mxu0 0.0
    %2158 = vmatprep.subr.mxu0 0.0
    %2159 = vmatpush1.msra.mxu0 0.0
    %2160 = vmatprep.subr.mxu0 0.0
    %2161 = vmatpush1.msra.mxu0 0.0
    %2162 = vmatprep.subr.mxu0 0.0
    %2163 = vmatpush1.msra.mxu0 0.0
    %2164 = vmatprep.subr.mxu0 0.0
    %2165 = vmatpush1.msra.mxu0 0.0
    %2166 = vmatprep.subr.mxu0 0.0
    %2167 = vmatpush1.msra.mxu0 0.0
    %2168 = vmatprep.subr.mxu0 0.0
    %2169 = vmatpush1.msra.mxu0 %v2110
    %2170 = vmatprep.subr.mxu0 0.0
    %2171 = vmatpush1.msra.mxu0 %v2109
    %2172 = vmatprep.subr.mxu0 0.0
    %2173 = vmatpush2.msra.mxu0 0.0
    %2174 = vmatprep.subr.mxu0 0.0
    %2175 = vmatpush2.msra.mxu0 0.0
    %2176 = vmatprep.subr.mxu0 0.0
    %2177 = vmatpush2.msra.mxu0 0.0
    %2178 = vmatprep.subr.mxu0 0.0
    %2179 = vmatpush2.msra.mxu0 0.0
    %2180 = vmatprep.subr.mxu0 0.0
    %2181 = vmatpush2.msra.mxu0 0.0
    %2182 = vmatprep.subr.mxu0 0.0
    %2183 = vmatpush2.msra.mxu0 0.0
    %2184 = vmatprep.subr.mxu0 0.0
    %2185 = vmatpush2.msra.mxu0 0.0
    %2186 = vmatprep.subr.mxu0 0.0
    %2187 = vmatpush2.msra.mxu0 0.0
    %2188 = vmatprep.subr.mxu0 0.0
    %2189 = vmatpush2.msra.mxu0 0.0
    %2190 = vmatprep.subr.mxu0 0.0
    %2191 = vmatpush2.msra.mxu0 0.0
    %2192 = vmatprep.subr.mxu0 0.0
    %2193 = vmatpush2.msra.mxu0 0.0
    %2194 = vmatprep.subr.mxu0 0.0
    %2195 = vmatpush2.msra.mxu0 0.0
    %2196 = vmatprep.subr.mxu0 0.0
    %2197 = vmatpush2.msra.mxu0 0.0
    %2198 = vmatprep.subr.mxu0 0.0
    %2199 = vmatpush2.msra.mxu0 0.0
    %2200 = vmatprep.subr.mxu0 0.0
    %2201 = vmatpush2.msra.mxu0 0.0
    %2202 = vmatprep.subr.mxu0 0.0
    %2203 = vmatpush2.msra.mxu0 0.0
    %2204 = vmatprep.mubr.f32.mxu0 0.0
    %2205 = vmatmul.mubr.f32.gmra.mxu0 %v2117
    %v2206 = vpop.f32.mrf.mxu0
    %v2207 = vadd.f32 %v2115, %v2206
    %v2208 = vpop.f32.mrf.mxu0
    %2209 = vmatprep.mubr.f32.mxu0 0.0
    %2210 = vmatmul.mubr.f32.gmra.mxu0 %v2120
    %v2211 = vpop.f32.mrf.mxu0
    %v2212 = vadd.f32 %v2115, %v2211
    %v2213 = vpop.f32.mrf.mxu0
    %2214 = vmatprep.mubr.f32.mxu0 0.0
    %2215 = vmatmul.mubr.f32.gmra.mxu0 %v2123
    %v2216 = vpop.f32.mrf.mxu0
    %v2217 = vadd.f32 %v2115, %v2216
    %v2218 = vpop.f32.mrf.mxu0
    %2219 = vmatprep.mubr.f32.mxu0 0.0
    %2220 = vmatmul.mubr.f32.gmra.mxu0 %v2126
    %v2221 = vpop.f32.mrf.mxu0
    %v2222 = vadd.f32 %v2115, %v2221
    %v2223 = vpop.f32.mrf.mxu0
    %2224 = vmatprep.mubr.f32.mxu0 0.0
    %2225 = vmatmul.mubr.f32.gmra.mxu0 %v2129
    %v2226 = vpop.f32.mrf.mxu0
    %v2227 = vadd.f32 %v2115, %v2226
    %v2228 = vpop.f32.mrf.mxu0
    %2229 = vmatprep.mubr.f32.mxu0 0.0
    %2230 = vmatmul.mubr.f32.gmra.mxu0 %v2132
    %v2231 = vpop.f32.mrf.mxu0
    %v2232 = vadd.f32 %v2115, %v2231
    %v2233 = vpop.f32.mrf.mxu0
    %2234 = vmatprep.mubr.f32.mxu0 0.0
    %2235 = vmatmul.mubr.f32.gmra.mxu0 %v2135
    %v2236 = vpop.f32.mrf.mxu0
    %v2237 = vadd.f32 %v2115, %v2236
    %v2238 = vpop.f32.mrf.mxu0
    %2239 = vmatprep.mubr.f32.mxu0 0.0
    %2240 = vmatmul.mubr.f32.gmra.mxu0 %v2138
    %v2241 = vpop.f32.mrf.mxu0
    %v2242 = vadd.f32 %v2115, %v2241
    %v2243 = vpop.f32.mrf.mxu0
    %2244 = vdwg.mxu0
    %v2245 = vmax.f32 %v2207, 0.0
    %v2246 = vmax.f32 %v2212, 0.0
    %v2247 = vmax.f32 %v2217, 0.0
    %v2248 = vmax.f32 %v2222, 0.0
    %v2249 = vmax.f32 %v2227, 0.0
    %v2250 = vmax.f32 %v2232, 0.0
    %v2251 = vmax.f32 %v2237, 0.0
    %v2252 = vmax.f32 %v2242, 0.0
    %v2253 = vld [vmem:[#allocation2 + $0x1e8] sm:$0xff]
    %v2254 = vld [vmem:[#allocation2 + $0x1f0] sm:$0xff]
    %v2255 = vld [vmem:[#allocation2 + $0x1f8] sm:$0xff]
    %v2256 = vld [vmem:[#allocation2 + $0x200] sm:$0xff]
    %v2258 = vsel %vm533, %v2101, 0
    %v2261 = vsel %vm533, %v2102, 0
    %v2264 = vsel %vm533, %v2103, 0
    %v2267 = vsel %vm533, %v2104, 0
    %v2270 = vsel %vm533, %v2105, 0
    %v2273 = vsel %vm533, %v2106, 0
    %v2276 = vsel %vm533, %v2107, 0
    %v2279 = vsel %vm533, %v2108, 0
    %2281 = vmatprep.subr.mxu0 0.0
    %2282 = vmatpush1.msra.mxu0 0.0
    %2283 = vmatprep.subr.mxu0 0.0
    %2284 = vmatpush1.msra.mxu0 0.0
    %2285 = vmatprep.subr.mxu0 0.0
    %2286 = vmatpush1.msra.mxu0 0.0
    %2287 = vmatprep.subr.mxu0 0.0
    %2288 = vmatpush1.msra.mxu0 0.0
    %2289 = vmatprep.subr.mxu0 0.0
    %2290 = vmatpush1.msra.mxu0 0.0
    %2291 = vmatprep.subr.mxu0 0.0
    %2292 = vmatpush1.msra.mxu0 0.0
    %2293 = vmatprep.subr.mxu0 0.0
    %2294 = vmatpush1.msra.mxu0 0.0
    %2295 = vmatprep.subr.mxu0 0.0
    %2296 = vmatpush1.msra.mxu0 0.0
    %2297 = vmatprep.subr.mxu0 0.0
    %2298 = vmatpush1.msra.mxu0 0.0
    %2299 = vmatprep.subr.mxu0 0.0
    %2300 = vmatpush1.msra.mxu0 0.0
    %2301 = vmatprep.subr.mxu0 0.0
    %2302 = vmatpush1.msra.mxu0 0.0
    %2303 = vmatprep.subr.mxu0 0.0
    %2304 = vmatpush1.msra.mxu0 0.0
    %2305 = vmatprep.subr.mxu0 0.0
    %2306 = vmatpush1.msra.mxu0 0.0
    %2307 = vmatprep.subr.mxu0 0.0
    %2308 = vmatpush1.msra.mxu0 0.0
    %2309 = vmatprep.subr.mxu0 0.0
    %2310 = vmatpush1.msra.mxu0 %v2256
    %2311 = vmatprep.subr.mxu0 0.0
    %2312 = vmatpush1.msra.mxu0 %v2255
    %2313 = vmatprep.subr.mxu0 0.0
    %2314 = vmatpush2.msra.mxu0 0.0
    %2315 = vmatprep.subr.mxu0 0.0
    %2316 = vmatpush2.msra.mxu0 0.0
    %2317 = vmatprep.subr.mxu0 0.0
    %2318 = vmatpush2.msra.mxu0 0.0
    %2319 = vmatprep.subr.mxu0 0.0
    %2320 = vmatpush2.msra.mxu0 0.0
    %2321 = vmatprep.subr.mxu0 0.0
    %2322 = vmatpush2.msra.mxu0 0.0
    %2323 = vmatprep.subr.mxu0 0.0
    %2324 = vmatpush2.msra.mxu0 0.0
    %2325 = vmatprep.subr.mxu0 0.0
    %2326 = vmatpush2.msra.mxu0 0.0
    %2327 = vmatprep.subr.mxu0 0.0
    %2328 = vmatpush2.msra.mxu0 0.0
    %2329 = vmatprep.subr.mxu0 0.0
    %2330 = vmatpush2.msra.mxu0 0.0
    %2331 = vmatprep.subr.mxu0 0.0
    %2332 = vmatpush2.msra.mxu0 0.0
    %2333 = vmatprep.subr.mxu0 0.0
    %2334 = vmatpush2.msra.mxu0 0.0
    %2335 = vmatprep.subr.mxu0 0.0
    %2336 = vmatpush2.msra.mxu0 0.0
    %2337 = vmatprep.subr.mxu0 0.0
    %2338 = vmatpush2.msra.mxu0 0.0
    %2339 = vmatprep.subr.mxu0 0.0
    %2340 = vmatpush2.msra.mxu0 0.0
    %2341 = vmatprep.subr.mxu0 0.0
    %2342 = vmatpush2.msra.mxu0 0.0
    %2343 = vmatprep.subr.mxu0 0.0
    %2344 = vmatpush2.msra.mxu0 0.0
    %2345 = vmatprep.mubr.f32.mxu0 0.0
    %2346 = vmatmul.mubr.f32.gmra.mxu0 %v2258
    %v2347 = vpop.f32.mrf.mxu0
    %v2348 = vadd.f32 0.0, %v2347
    %v2349 = vpop.f32.mrf.mxu0
    %2350 = vmatprep.mubr.f32.mxu0 0.0
    %2351 = vmatmul.mubr.f32.gmra.mxu0 %v2261
    %v2352 = vpop.f32.mrf.mxu0
    %v2353 = vadd.f32 0.0, %v2352
    %v2354 = vpop.f32.mrf.mxu0
    %2355 = vmatprep.mubr.f32.mxu0 0.0
    %2356 = vmatmul.mubr.f32.gmra.mxu0 %v2264
    %v2357 = vpop.f32.mrf.mxu0
    %v2358 = vadd.f32 0.0, %v2357
    %v2359 = vpop.f32.mrf.mxu0
    %2360 = vmatprep.mubr.f32.mxu0 0.0
    %2361 = vmatmul.mubr.f32.gmra.mxu0 %v2267
    %v2362 = vpop.f32.mrf.mxu0
    %v2363 = vadd.f32 0.0, %v2362
    %v2364 = vpop.f32.mrf.mxu0
    %2365 = vmatprep.mubr.f32.mxu0 0.0
    %2366 = vmatmul.mubr.f32.gmra.mxu0 %v2270
    %v2367 = vpop.f32.mrf.mxu0
    %v2368 = vadd.f32 0.0, %v2367
    %v2369 = vpop.f32.mrf.mxu0
    %2370 = vmatprep.mubr.f32.mxu0 0.0
    %2371 = vmatmul.mubr.f32.gmra.mxu0 %v2273
    %v2372 = vpop.f32.mrf.mxu0
    %v2373 = vadd.f32 0.0, %v2372
    %v2374 = vpop.f32.mrf.mxu0
    %2375 = vmatprep.mubr.f32.mxu0 0.0
    %2376 = vmatmul.mubr.f32.gmra.mxu0 %v2276
    %v2377 = vpop.f32.mrf.mxu0
    %v2378 = vadd.f32 0.0, %v2377
    %v2379 = vpop.f32.mrf.mxu0
    %2380 = vmatprep.mubr.f32.mxu0 0.0
    %2381 = vmatmul.mubr.f32.gmra.mxu0 %v2279
    %v2382 = vpop.f32.mrf.mxu0
    %v2383 = vadd.f32 0.0, %v2382
    %v2384 = vpop.f32.mrf.mxu0
    %2385 = vdwg.mxu0
    %v2387 = vsel %vm533, %v1979, 0
    %v2390 = vsel %vm533, %v1980, 0
    %v2393 = vsel %vm533, %v1981, 0
    %v2396 = vsel %vm533, %v1982, 0
    %v2399 = vsel %vm533, %v1983, 0
    %v2402 = vsel %vm533, %v1984, 0
    %v2405 = vsel %vm533, %v1985, 0
    %v2408 = vsel %vm533, %v1986, 0
    %2410 = vmatprep.subr.mxu0 0.0
    %2411 = vmatpush1.msra.mxu0 0.0
    %2412 = vmatprep.subr.mxu0 0.0
    %2413 = vmatpush1.msra.mxu0 0.0
    %2414 = vmatprep.subr.mxu0 0.0
    %2415 = vmatpush1.msra.mxu0 0.0
    %2416 = vmatprep.subr.mxu0 0.0
    %2417 = vmatpush1.msra.mxu0 0.0
    %2418 = vmatprep.subr.mxu0 0.0
    %2419 = vmatpush1.msra.mxu0 0.0
    %2420 = vmatprep.subr.mxu0 0.0
    %2421 = vmatpush1.msra.mxu0 0.0
    %2422 = vmatprep.subr.mxu0 0.0
    %2423 = vmatpush1.msra.mxu0 0.0
    %2424 = vmatprep.subr.mxu0 0.0
    %2425 = vmatpush1.msra.mxu0 0.0
    %2426 = vmatprep.subr.mxu0 0.0
    %2427 = vmatpush1.msra.mxu0 0.0
    %2428 = vmatprep.subr.mxu0 0.0
    %2429 = vmatpush1.msra.mxu0 0.0
    %2430 = vmatprep.subr.mxu0 0.0
    %2431 = vmatpush1.msra.mxu0 0.0
    %2432 = vmatprep.subr.mxu0 0.0
    %2433 = vmatpush1.msra.mxu0 0.0
    %2434 = vmatprep.subr.mxu0 0.0
    %2435 = vmatpush1.msra.mxu0 0.0
    %2436 = vmatprep.subr.mxu0 0.0
    %2437 = vmatpush1.msra.mxu0 0.0
    %2438 = vmatprep.subr.mxu0 0.0
    %2439 = vmatpush1.msra.mxu0 %v2254
    %2440 = vmatprep.subr.mxu0 0.0
    %2441 = vmatpush1.msra.mxu0 %v2253
    %2442 = vmatprep.subr.mxu0 0.0
    %2443 = vmatpush2.msra.mxu0 0.0
    %2444 = vmatprep.subr.mxu0 0.0
    %2445 = vmatpush2.msra.mxu0 0.0
    %2446 = vmatprep.subr.mxu0 0.0
    %2447 = vmatpush2.msra.mxu0 0.0
    %2448 = vmatprep.subr.mxu0 0.0
    %2449 = vmatpush2.msra.mxu0 0.0
    %2450 = vmatprep.subr.mxu0 0.0
    %2451 = vmatpush2.msra.mxu0 0.0
    %2452 = vmatprep.subr.mxu0 0.0
    %2453 = vmatpush2.msra.mxu0 0.0
    %2454 = vmatprep.subr.mxu0 0.0
    %2455 = vmatpush2.msra.mxu0 0.0
    %2456 = vmatprep.subr.mxu0 0.0
    %2457 = vmatpush2.msra.mxu0 0.0
    %2458 = vmatprep.subr.mxu0 0.0
    %2459 = vmatpush2.msra.mxu0 0.0
    %2460 = vmatprep.subr.mxu0 0.0
    %2461 = vmatpush2.msra.mxu0 0.0
    %2462 = vmatprep.subr.mxu0 0.0
    %2463 = vmatpush2.msra.mxu0 0.0
    %2464 = vmatprep.subr.mxu0 0.0
    %2465 = vmatpush2.msra.mxu0 0.0
    %2466 = vmatprep.subr.mxu0 0.0
    %2467 = vmatpush2.msra.mxu0 0.0
    %2468 = vmatprep.subr.mxu0 0.0
    %2469 = vmatpush2.msra.mxu0 0.0
    %2470 = vmatprep.subr.mxu0 0.0
    %2471 = vmatpush2.msra.mxu0 0.0
    %2472 = vmatprep.subr.mxu0 0.0
    %2473 = vmatpush2.msra.mxu0 0.0
    %2474 = vmatprep.mubr.f32.mxu0 0.0
    %2475 = vmatmul.mubr.f32.gmra.mxu0 %v2387
    %v2476 = vpop.f32.mrf.mxu0
    %v2477 = vadd.f32 %v2348, %v2476
    %v2478 = vpop.f32.mrf.mxu0
    %2479 = vmatprep.mubr.f32.mxu0 0.0
    %2480 = vmatmul.mubr.f32.gmra.mxu0 %v2390
    %v2481 = vpop.f32.mrf.mxu0
    %v2482 = vadd.f32 %v2353, %v2481
    %v2483 = vpop.f32.mrf.mxu0
    %2484 = vmatprep.mubr.f32.mxu0 0.0
    %2485 = vmatmul.mubr.f32.gmra.mxu0 %v2393
    %v2486 = vpop.f32.mrf.mxu0
    %v2487 = vadd.f32 %v2358, %v2486
    %v2488 = vpop.f32.mrf.mxu0
    %2489 = vmatprep.mubr.f32.mxu0 0.0
    %2490 = vmatmul.mubr.f32.gmra.mxu0 %v2396
    %v2491 = vpop.f32.mrf.mxu0
    %v2492 = vadd.f32 %v2363, %v2491
    %v2493 = vpop.f32.mrf.mxu0
    %2494 = vmatprep.mubr.f32.mxu0 0.0
    %2495 = vmatmul.mubr.f32.gmra.mxu0 %v2399
    %v2496 = vpop.f32.mrf.mxu0
    %v2497 = vadd.f32 %v2368, %v2496
    %v2498 = vpop.f32.mrf.mxu0
    %2499 = vmatprep.mubr.f32.mxu0 0.0
    %2500 = vmatmul.mubr.f32.gmra.mxu0 %v2402
    %v2501 = vpop.f32.mrf.mxu0
    %v2502 = vadd.f32 %v2373, %v2501
    %v2503 = vpop.f32.mrf.mxu0
    %2504 = vmatprep.mubr.f32.mxu0 0.0
    %2505 = vmatmul.mubr.f32.gmra.mxu0 %v2405
    %v2506 = vpop.f32.mrf.mxu0
    %v2507 = vadd.f32 %v2378, %v2506
    %v2508 = vpop.f32.mrf.mxu0
    %2509 = vmatprep.mubr.f32.mxu0 0.0
    %2510 = vmatmul.mubr.f32.gmra.mxu0 %v2408
    %v2511 = vpop.f32.mrf.mxu0
    %v2512 = vadd.f32 %v2383, %v2511
    %v2513 = vpop.f32.mrf.mxu0
    %2514 = vdwg.mxu0
    %v2515 = vld [vmem:[#allocation2 + $0x208] sm:$0xff]
    %v2516 = vld [vmem:[#allocation2 + $0x210] sm:$0xff]
    %v2518 = vsel %vm533, %v2245, 0
    %v2521 = vsel %vm533, %v2246, 0
    %v2524 = vsel %vm533, %v2247, 0
    %v2527 = vsel %vm533, %v2248, 0
    %v2530 = vsel %vm533, %v2249, 0
    %v2533 = vsel %vm533, %v2250, 0
    %v2536 = vsel %vm533, %v2251, 0
    %v2539 = vsel %vm533, %v2252, 0
    %2541 = vmatprep.subr.mxu0 0.0
    %2542 = vmatpush1.msra.mxu0 0.0
    %2543 = vmatprep.subr.mxu0 0.0
    %2544 = vmatpush1.msra.mxu0 0.0
    %2545 = vmatprep.subr.mxu0 0.0
    %2546 = vmatpush1.msra.mxu0 0.0
    %2547 = vmatprep.subr.mxu0 0.0
    %2548 = vmatpush1.msra.mxu0 0.0
    %2549 = vmatprep.subr.mxu0 0.0
    %2550 = vmatpush1.msra.mxu0 0.0
    %2551 = vmatprep.subr.mxu0 0.0
    %2552 = vmatpush1.msra.mxu0 0.0
    %2553 = vmatprep.subr.mxu0 0.0
    %2554 = vmatpush1.msra.mxu0 0.0
    %2555 = vmatprep.subr.mxu0 0.0
    %2556 = vmatpush1.msra.mxu0 0.0
    %2557 = vmatprep.subr.mxu0 0.0
    %2558 = vmatpush1.msra.mxu0 0.0
    %2559 = vmatprep.subr.mxu0 0.0
    %2560 = vmatpush1.msra.mxu0 0.0
    %2561 = vmatprep.subr.mxu0 0.0
    %2562 = vmatpush1.msra.mxu0 0.0
    %2563 = vmatprep.subr.mxu0 0.0
    %2564 = vmatpush1.msra.mxu0 0.0
    %2565 = vmatprep.subr.mxu0 0.0
    %2566 = vmatpush1.msra.mxu0 0.0
    %2567 = vmatprep.subr.mxu0 0.0
    %2568 = vmatpush1.msra.mxu0 0.0
    %2569 = vmatprep.subr.mxu0 0.0
    %2570 = vmatpush1.msra.mxu0 %v2516
    %2571 = vmatprep.subr.mxu0 0.0
    %2572 = vmatpush1.msra.mxu0 %v2515
    %2573 = vmatprep.subr.mxu0 0.0
    %2574 = vmatpush2.msra.mxu0 0.0
    %2575 = vmatprep.subr.mxu0 0.0
    %2576 = vmatpush2.msra.mxu0 0.0
    %2577 = vmatprep.subr.mxu0 0.0
    %2578 = vmatpush2.msra.mxu0 0.0
    %2579 = vmatprep.subr.mxu0 0.0
    %2580 = vmatpush2.msra.mxu0 0.0
    %2581 = vmatprep.subr.mxu0 0.0
    %2582 = vmatpush2.msra.mxu0 0.0
    %2583 = vmatprep.subr.mxu0 0.0
    %2584 = vmatpush2.msra.mxu0 0.0
    %2585 = vmatprep.subr.mxu0 0.0
    %2586 = vmatpush2.msra.mxu0 0.0
    %2587 = vmatprep.subr.mxu0 0.0
    %2588 = vmatpush2.msra.mxu0 0.0
    %2589 = vmatprep.subr.mxu0 0.0
    %2590 = vmatpush2.msra.mxu0 0.0
    %2591 = vmatprep.subr.mxu0 0.0
    %2592 = vmatpush2.msra.mxu0 0.0
    %2593 = vmatprep.subr.mxu0 0.0
    %2594 = vmatpush2.msra.mxu0 0.0
    %2595 = vmatprep.subr.mxu0 0.0
    %2596 = vmatpush2.msra.mxu0 0.0
    %2597 = vmatprep.subr.mxu0 0.0
    %2598 = vmatpush2.msra.mxu0 0.0
    %2599 = vmatprep.subr.mxu0 0.0
    %2600 = vmatpush2.msra.mxu0 0.0
    %2601 = vmatprep.subr.mxu0 0.0
    %2602 = vmatpush2.msra.mxu0 0.0
    %2603 = vmatprep.subr.mxu0 0.0
    %2604 = vmatpush2.msra.mxu0 0.0
    %2605 = vmatprep.mubr.f32.mxu0 0.0
    %2606 = vmatmul.mubr.f32.gmra.mxu0 %v2518
    %v2607 = vpop.f32.mrf.mxu0
    %v2608 = vadd.f32 0.0, %v2607
    %v2609 = vpop.f32.mrf.mxu0
    %2610 = vmatprep.mubr.f32.mxu0 0.0
    %2611 = vmatmul.mubr.f32.gmra.mxu0 %v2521
    %v2612 = vpop.f32.mrf.mxu0
    %v2613 = vadd.f32 0.0, %v2612
    %v2614 = vpop.f32.mrf.mxu0
    %2615 = vmatprep.mubr.f32.mxu0 0.0
    %2616 = vmatmul.mubr.f32.gmra.mxu0 %v2524
    %v2617 = vpop.f32.mrf.mxu0
    %v2618 = vadd.f32 0.0, %v2617
    %v2619 = vpop.f32.mrf.mxu0
    %2620 = vmatprep.mubr.f32.mxu0 0.0
    %2621 = vmatmul.mubr.f32.gmra.mxu0 %v2527
    %v2622 = vpop.f32.mrf.mxu0
    %v2623 = vadd.f32 0.0, %v2622
    %v2624 = vpop.f32.mrf.mxu0
    %2625 = vmatprep.mubr.f32.mxu0 0.0
    %2626 = vmatmul.mubr.f32.gmra.mxu0 %v2530
    %v2627 = vpop.f32.mrf.mxu0
    %v2628 = vadd.f32 0.0, %v2627
    %v2629 = vpop.f32.mrf.mxu0
    %2630 = vmatprep.mubr.f32.mxu0 0.0
    %2631 = vmatmul.mubr.f32.gmra.mxu0 %v2533
    %v2632 = vpop.f32.mrf.mxu0
    %v2633 = vadd.f32 0.0, %v2632
    %v2634 = vpop.f32.mrf.mxu0
    %2635 = vmatprep.mubr.f32.mxu0 0.0
    %2636 = vmatmul.mubr.f32.gmra.mxu0 %v2536
    %v2637 = vpop.f32.mrf.mxu0
    %v2638 = vadd.f32 0.0, %v2637
    %v2639 = vpop.f32.mrf.mxu0
    %2640 = vmatprep.mubr.f32.mxu0 0.0
    %2641 = vmatmul.mubr.f32.gmra.mxu0 %v2539
    %v2642 = vpop.f32.mrf.mxu0
    %v2643 = vadd.f32 0.0, %v2642
    %v2644 = vpop.f32.mrf.mxu0
    %2645 = vdwg.mxu0
    %v2646 = vadd.f32 %v2477, %v2608
    %v2647 = vadd.f32 %v2482, %v2613
    %v2648 = vadd.f32 %v2487, %v2618
    %v2649 = vadd.f32 %v2492, %v2623
    %v2650 = vadd.f32 %v2497, %v2628
    %v2651 = vadd.f32 %v2502, %v2633
    %v2652 = vadd.f32 %v2507, %v2638
    %v2653 = vadd.f32 %v2512, %v2643
    %v2654 = vld [vmem:[#allocation2 + $0x218] sm:$0x1]
    %v2655 = vlaneseq
    %v2656 = vshrl.u32 %v2655, 7
    %v2657 = vsub.s32 0, %v2656
    %v2658 = vrot.slane %v2654, %v2657
    %v2659 = vadd.f32 %v2646, %v2658
    %v2660 = vadd.f32 %v2647, %v2658
    %v2661 = vadd.f32 %v2648, %v2658
    %v2662 = vadd.f32 %v2649, %v2658
    %v2663 = vadd.f32 %v2650, %v2658
    %v2664 = vadd.f32 %v2651, %v2658
    %v2665 = vadd.f32 %v2652, %v2658
    %v2666 = vadd.f32 %v2653, %v2658
    %v2667 = vmax.f32 %v2659, 0.0
    %v2668 = vmax.f32 %v2660, 0.0
    %v2669 = vmax.f32 %v2661, 0.0
    %v2670 = vmax.f32 %v2662, 0.0
    %v2671 = vmax.f32 %v2663, 0.0
    %v2672 = vmax.f32 %v2664, 0.0
    %v2673 = vmax.f32 %v2665, 0.0
    %v2674 = vmax.f32 %v2666, 0.0
    %v2675 = vld [vmem:[#allocation2 + $0x220] sm:$0xff]
    %v2676 = vld [vmem:[#allocation2 + $0x228] sm:$0xff]
    %v2677 = vld [vmem:[#allocation2 + $0x230] sm:$0x1]
    %v2678 = vlaneseq
    %v2679 = vshrl.u32 %v2678, 7
    %v2680 = vsub.s32 0, %v2679
    %v2681 = vrot.slane %v2677, %v2680
    %v2683 = vsel %vm533, %v2667, 0
    %v2686 = vsel %vm533, %v2668, 0
    %v2689 = vsel %vm533, %v2669, 0
    %v2692 = vsel %vm533, %v2670, 0
    %v2695 = vsel %vm533, %v2671, 0
    %v2698 = vsel %vm533, %v2672, 0
    %v2701 = vsel %vm533, %v2673, 0
    %v2704 = vsel %vm533, %v2674, 0
    %2706 = vmatprep.subr.mxu0 0.0
    %2707 = vmatpush1.msra.mxu0 0.0
    %2708 = vmatprep.subr.mxu0 0.0
    %2709 = vmatpush1.msra.mxu0 0.0
    %2710 = vmatprep.subr.mxu0 0.0
    %2711 = vmatpush1.msra.mxu0 0.0
    %2712 = vmatprep.subr.mxu0 0.0
    %2713 = vmatpush1.msra.mxu0 0.0
    %2714 = vmatprep.subr.mxu0 0.0
    %2715 = vmatpush1.msra.mxu0 0.0
    %2716 = vmatprep.subr.mxu0 0.0
    %2717 = vmatpush1.msra.mxu0 0.0
    %2718 = vmatprep.subr.mxu0 0.0
    %2719 = vmatpush1.msra.mxu0 0.0
    %2720 = vmatprep.subr.mxu0 0.0
    %2721 = vmatpush1.msra.mxu0 0.0
    %2722 = vmatprep.subr.mxu0 0.0
    %2723 = vmatpush1.msra.mxu0 0.0
    %2724 = vmatprep.subr.mxu0 0.0
    %2725 = vmatpush1.msra.mxu0 0.0
    %2726 = vmatprep.subr.mxu0 0.0
    %2727 = vmatpush1.msra.mxu0 0.0
    %2728 = vmatprep.subr.mxu0 0.0
    %2729 = vmatpush1.msra.mxu0 0.0
    %2730 = vmatprep.subr.mxu0 0.0
    %2731 = vmatpush1.msra.mxu0 0.0
    %2732 = vmatprep.subr.mxu0 0.0
    %2733 = vmatpush1.msra.mxu0 0.0
    %2734 = vmatprep.subr.mxu0 0.0
    %2735 = vmatpush1.msra.mxu0 %v2676
    %2736 = vmatprep.subr.mxu0 0.0
    %2737 = vmatpush1.msra.mxu0 %v2675
    %2738 = vmatprep.subr.mxu0 0.0
    %2739 = vmatpush2.msra.mxu0 0.0
    %2740 = vmatprep.subr.mxu0 0.0
    %2741 = vmatpush2.msra.mxu0 0.0
    %2742 = vmatprep.subr.mxu0 0.0
    %2743 = vmatpush2.msra.mxu0 0.0
    %2744 = vmatprep.subr.mxu0 0.0
    %2745 = vmatpush2.msra.mxu0 0.0
    %2746 = vmatprep.subr.mxu0 0.0
    %2747 = vmatpush2.msra.mxu0 0.0
    %2748 = vmatprep.subr.mxu0 0.0
    %2749 = vmatpush2.msra.mxu0 0.0
    %2750 = vmatprep.subr.mxu0 0.0
    %2751 = vmatpush2.msra.mxu0 0.0
    %2752 = vmatprep.subr.mxu0 0.0
    %2753 = vmatpush2.msra.mxu0 0.0
    %2754 = vmatprep.subr.mxu0 0.0
    %2755 = vmatpush2.msra.mxu0 0.0
    %2756 = vmatprep.subr.mxu0 0.0
    %2757 = vmatpush2.msra.mxu0 0.0
    %2758 = vmatprep.subr.mxu0 0.0
    %2759 = vmatpush2.msra.mxu0 0.0
    %2760 = vmatprep.subr.mxu0 0.0
    %2761 = vmatpush2.msra.mxu0 0.0
    %2762 = vmatprep.subr.mxu0 0.0
    %2763 = vmatpush2.msra.mxu0 0.0
    %2764 = vmatprep.subr.mxu0 0.0
    %2765 = vmatpush2.msra.mxu0 0.0
    %2766 = vmatprep.subr.mxu0 0.0
    %2767 = vmatpush2.msra.mxu0 0.0
    %2768 = vmatprep.subr.mxu0 0.0
    %2769 = vmatpush2.msra.mxu0 0.0
    %2770 = vmatprep.mubr.f32.mxu0 0.0
    %2771 = vmatmul.mubr.f32.gmra.mxu0 %v2683
    %v2772 = vpop.f32.mrf.mxu0
    %v2773 = vadd.f32 %v2681, %v2772
    %v2774 = vpop.f32.mrf.mxu0
    %2775 = vmatprep.mubr.f32.mxu0 0.0
    %2776 = vmatmul.mubr.f32.gmra.mxu0 %v2686
    %v2777 = vpop.f32.mrf.mxu0
    %v2778 = vadd.f32 %v2681, %v2777
    %v2779 = vpop.f32.mrf.mxu0
    %2780 = vmatprep.mubr.f32.mxu0 0.0
    %2781 = vmatmul.mubr.f32.gmra.mxu0 %v2689
    %v2782 = vpop.f32.mrf.mxu0
    %v2783 = vadd.f32 %v2681, %v2782
    %v2784 = vpop.f32.mrf.mxu0
    %2785 = vmatprep.mubr.f32.mxu0 0.0
    %2786 = vmatmul.mubr.f32.gmra.mxu0 %v2692
    %v2787 = vpop.f32.mrf.mxu0
    %v2788 = vadd.f32 %v2681, %v2787
    %v2789 = vpop.f32.mrf.mxu0
    %2790 = vmatprep.mubr.f32.mxu0 0.0
    %2791 = vmatmul.mubr.f32.gmra.mxu0 %v2695
    %v2792 = vpop.f32.mrf.mxu0
    %v2793 = vadd.f32 %v2681, %v2792
    %v2794 = vpop.f32.mrf.mxu0
    %2795 = vmatprep.mubr.f32.mxu0 0.0
    %2796 = vmatmul.mubr.f32.gmra.mxu0 %v2698
    %v2797 = vpop.f32.mrf.mxu0
    %v2798 = vadd.f32 %v2681, %v2797
    %v2799 = vpop.f32.mrf.mxu0
    %2800 = vmatprep.mubr.f32.mxu0 0.0
    %2801 = vmatmul.mubr.f32.gmra.mxu0 %v2701
    %v2802 = vpop.f32.mrf.mxu0
    %v2803 = vadd.f32 %v2681, %v2802
    %v2804 = vpop.f32.mrf.mxu0
    %2805 = vmatprep.mubr.f32.mxu0 0.0
    %2806 = vmatmul.mubr.f32.gmra.mxu0 %v2704
    %v2807 = vpop.f32.mrf.mxu0
    %v2808 = vadd.f32 %v2681, %v2807
    %v2809 = vpop.f32.mrf.mxu0
    %2810 = vdwg.mxu0
    %vm2811 = vcmask 23552
    %v2812 = vsel %vm2811, %v2773, -inf
    %2813 = vmax.xlane.f32.xlu0 %v2812
    %v2814 = vpop.xlane.xlu0 %2813
    %v2815 = vsel %vm2811, %v2778, -inf
    %2816 = vmax.xlane.f32.xlu0 %v2815
    %v2817 = vpop.xlane.xlu0 %2816
    %v2818 = vsel %vm2811, %v2783, -inf
    %2819 = vmax.xlane.f32.xlu0 %v2818
    %v2820 = vpop.xlane.xlu0 %2819
    %v2821 = vsel %vm2811, %v2788, -inf
    %2822 = vmax.xlane.f32.xlu0 %v2821
    %v2823 = vpop.xlane.xlu0 %2822
    %v2824 = vsel %vm2811, %v2793, -inf
    %2825 = vmax.xlane.f32.xlu0 %v2824
    %v2826 = vpop.xlane.xlu0 %2825
    %v2827 = vsel %vm2811, %v2798, -inf
    %2828 = vmax.xlane.f32.xlu0 %v2827
    %v2829 = vpop.xlane.xlu0 %2828
    %v2830 = vsel %vm2811, %v2803, -inf
    %2831 = vmax.xlane.f32.xlu0 %v2830
    %v2832 = vpop.xlane.xlu0 %2831
    %v2833 = vsel %vm2811, %v2808, -inf
    %2834 = vmax.xlane.f32.xlu0 %v2833
    %v2835 = vpop.xlane.xlu0 %2834
    %v2836 = vsub.f32 %v2773, %v2814
    %v2837 = vsub.f32 %v2778, %v2817
    %v2838 = vsub.f32 %v2783, %v2820
    %v2839 = vsub.f32 %v2788, %v2823
    %v2840 = vsub.f32 %v2793, %v2826
    %v2841 = vsub.f32 %v2798, %v2829
    %v2842 = vsub.f32 %v2803, %v2832
    %v2843 = vsub.f32 %v2808, %v2835
    %v2844 = vmul.f32 %v2836, 1.442695
    %v2845 = vpow.pop %v2844
    %v2846 = vmul.f32 %v2837, 1.442695
    %v2847 = vpow.pop %v2846
    %v2848 = vmul.f32 %v2838, 1.442695
    %v2849 = vpow.pop %v2848
    %v2850 = vmul.f32 %v2839, 1.442695
    %v2851 = vpow.pop %v2850
    %v2852 = vmul.f32 %v2840, 1.442695
    %v2853 = vpow.pop %v2852
    %v2854 = vmul.f32 %v2841, 1.442695
    %v2855 = vpow.pop %v2854
    %v2856 = vmul.f32 %v2842, 1.442695
    %v2857 = vpow.pop %v2856
    %v2858 = vmul.f32 %v2843, 1.442695
    %v2859 = vpow.pop %v2858
    %v2860 = vsel %vm2811, %v2845, 0.0
    %2861 = vadd.xlane.f32.xlu0 %v2860
    %v2862 = vpop.xlane.xlu0 %2861
    %v2863 = vsel %vm2811, %v2847, 0.0
    %2864 = vadd.xlane.f32.xlu0 %v2863
    %v2865 = vpop.xlane.xlu0 %2864
    %v2866 = vsel %vm2811, %v2849, 0.0
    %2867 = vadd.xlane.f32.xlu0 %v2866
    %v2868 = vpop.xlane.xlu0 %2867
    %v2869 = vsel %vm2811, %v2851, 0.0
    %2870 = vadd.xlane.f32.xlu0 %v2869
    %v2871 = vpop.xlane.xlu0 %2870
    %v2872 = vsel %vm2811, %v2853, 0.0
    %2873 = vadd.xlane.f32.xlu0 %v2872
    %v2874 = vpop.xlane.xlu0 %2873
    %v2875 = vsel %vm2811, %v2855, 0.0
    %2876 = vadd.xlane.f32.xlu0 %v2875
    %v2877 = vpop.xlane.xlu0 %2876
    %v2878 = vsel %vm2811, %v2857, 0.0
    %2879 = vadd.xlane.f32.xlu0 %v2878
    %v2880 = vpop.xlane.xlu0 %2879
    %v2881 = vsel %vm2811, %v2859, 0.0
    %2882 = vadd.xlane.f32.xlu0 %v2881
    %v2883 = vpop.xlane.xlu0 %2882
    %v2884 = vrcp.pop %v2862
    %v2885 = vrcp.pop %v2865
    %v2886 = vrcp.pop %v2868
    %v2887 = vrcp.pop %v2871
    %v2888 = vrcp.pop %v2874
    %v2889 = vrcp.pop %v2877
    %v2890 = vrcp.pop %v2880
    %v2891 = vrcp.pop %v2883
    %v2892 = vmul.f32 %v2845, %v2884
    %v2893 = vmul.f32 %v2847, %v2885
    %v2894 = vmul.f32 %v2849, %v2886
    %v2895 = vmul.f32 %v2851, %v2887
    %v2896 = vmul.f32 %v2853, %v2888
    %v2897 = vmul.f32 %v2855, %v2889
    %v2898 = vmul.f32 %v2857, %v2890
    %v2899 = vmul.f32 %v2859, %v2891
    %2901 = vset.pattern.permute.xlu0 0
    %2902 = vperm.xlu0 %2901, %v2892
    %v2903 = vpop.permute.xlu0 %2902
    %2906 = vset.pattern.permute.xlu0 0
    %2907 = vperm.xlu0 %2906, %v2893
    %v2908 = vpop.permute.xlu0 %2907
    %2911 = vset.pattern.permute.xlu0 0
    %2912 = vperm.xlu0 %2911, %v2894
    %v2913 = vpop.permute.xlu0 %2912
    %2916 = vset.pattern.permute.xlu0 0
    %2917 = vperm.xlu0 %2916, %v2895
    %v2918 = vpop.permute.xlu0 %2917
    %2921 = vset.pattern.permute.xlu0 0
    %2922 = vperm.xlu0 %2921, %v2896
    %v2923 = vpop.permute.xlu0 %2922
    %2926 = vset.pattern.permute.xlu0 0
    %2927 = vperm.xlu0 %2926, %v2897
    %v2928 = vpop.permute.xlu0 %2927
    %2931 = vset.pattern.permute.xlu0 0
    %2932 = vperm.xlu0 %2931, %v2898
    %v2933 = vpop.permute.xlu0 %2932
    %2936 = vset.pattern.permute.xlu0 0
    %2937 = vperm.xlu0 %2936, %v2899
    %v2938 = vpop.permute.xlu0 %2937
    %v2940 = vmul.f32 %v2903, %v1979
    %v2941 = vmul.f32 %v2908, %v1980
    %v2942 = vmul.f32 %v2913, %v1981
    %v2943 = vmul.f32 %v2918, %v1982
    %v2944 = vmul.f32 %v2923, %v1983
    %v2945 = vmul.f32 %v2928, %v1984
    %v2946 = vmul.f32 %v2933, %v1985
    %v2947 = vmul.f32 %v2938, %v1986
    %2948 = vset.pattern.permute.xlu0 1
    %2949 = vperm.xlu0 %2948, %v2892
    %v2950 = vpop.permute.xlu0 %2949
    %2952 = vset.pattern.permute.xlu0 1
    %2953 = vperm.xlu0 %2952, %v2893
    %v2954 = vpop.permute.xlu0 %2953
    %2956 = vset.pattern.permute.xlu0 1
    %2957 = vperm.xlu0 %2956, %v2894
    %v2958 = vpop.permute.xlu0 %2957
    %2960 = vset.pattern.permute.xlu0 1
    %2961 = vperm.xlu0 %2960, %v2895
    %v2962 = vpop.permute.xlu0 %2961
    %2964 = vset.pattern.permute.xlu0 1
    %2965 = vperm.xlu0 %2964, %v2896
    %v2966 = vpop.permute.xlu0 %2965
    %2968 = vset.pattern.permute.xlu0 1
    %2969 = vperm.xlu0 %2968, %v2897
    %v2970 = vpop.permute.xlu0 %2969
    %2972 = vset.pattern.permute.xlu0 1
    %2973 = vperm.xlu0 %2972, %v2898
    %v2974 = vpop.permute.xlu0 %2973
    %2976 = vset.pattern.permute.xlu0 1
    %2977 = vperm.xlu0 %2976, %v2899
    %v2978 = vpop.permute.xlu0 %2977
    %v2980 = vmul.f32 %v2950, %v2101
    %v2981 = vmul.f32 %v2954, %v2102
    %v2982 = vmul.f32 %v2958, %v2103
    %v2983 = vmul.f32 %v2962, %v2104
    %v2984 = vmul.f32 %v2966, %v2105
    %v2985 = vmul.f32 %v2970, %v2106
    %v2986 = vmul.f32 %v2974, %v2107
    %v2987 = vmul.f32 %v2978, %v2108
    %v2988 = vadd.f32 %v2940, %v2980
    %v2989 = vadd.f32 %v2941, %v2981
    %v2990 = vadd.f32 %v2942, %v2982
    %v2991 = vadd.f32 %v2943, %v2983
    %v2992 = vadd.f32 %v2944, %v2984
    %v2993 = vadd.f32 %v2945, %v2985
    %v2994 = vadd.f32 %v2946, %v2986
    %v2995 = vadd.f32 %v2947, %v2987
    %2996 = vset.pattern.permute.xlu0 2
    %2997 = vperm.xlu0 %2996, %v2892
    %v2998 = vpop.permute.xlu0 %2997
    %3000 = vset.pattern.permute.xlu0 2
    %3001 = vperm.xlu0 %3000, %v2893
    %v3002 = vpop.permute.xlu0 %3001
    %3004 = vset.pattern.permute.xlu0 2
    %3005 = vperm.xlu0 %3004, %v2894
    %v3006 = vpop.permute.xlu0 %3005
    %3008 = vset.pattern.permute.xlu0 2
    %3009 = vperm.xlu0 %3008, %v2895
    %v3010 = vpop.permute.xlu0 %3009
    %3012 = vset.pattern.permute.xlu0 2
    %3013 = vperm.xlu0 %3012, %v2896
    %v3014 = vpop.permute.xlu0 %3013
    %3016 = vset.pattern.permute.xlu0 2
    %3017 = vperm.xlu0 %3016, %v2897
    %v3018 = vpop.permute.xlu0 %3017
    %3020 = vset.pattern.permute.xlu0 2
    %3021 = vperm.xlu0 %3020, %v2898
    %v3022 = vpop.permute.xlu0 %3021
    %3024 = vset.pattern.permute.xlu0 2
    %3025 = vperm.xlu0 %3024, %v2899
    %v3026 = vpop.permute.xlu0 %3025
    %v3028 = vmul.f32 %v2998, %v2245
    %v3029 = vmul.f32 %v3002, %v2246
    %v3030 = vmul.f32 %v3006, %v2247
    %v3031 = vmul.f32 %v3010, %v2248
    %v3032 = vmul.f32 %v3014, %v2249
    %v3033 = vmul.f32 %v3018, %v2250
    %v3034 = vmul.f32 %v3022, %v2251
    %v3035 = vmul.f32 %v3026, %v2252
    %v3036 = vadd.f32 %v2988, %v3028
    %v3037 = vadd.f32 %v2989, %v3029
    %v3038 = vadd.f32 %v2990, %v3030
    %v3039 = vadd.f32 %v2991, %v3031
    %v3040 = vadd.f32 %v2992, %v3032
    %v3041 = vadd.f32 %v2993, %v3033
    %v3042 = vadd.f32 %v2994, %v3034
    %v3043 = vadd.f32 %v2995, %v3035
    %v3044 = vld [vmem:[#allocation2 + $0x128] sm:$0xff]
    %v3045 = vld [vmem:[#allocation2 + $0x130] sm:$0xff]
    %v3046 = vld [vmem:[#allocation2 + $0x138] sm:$0xff]
    %v3047 = vld [vmem:[#allocation2 + $0x140] sm:$0xff]
    %v3048 = vld [vmem:[#allocation2 + $0x148] sm:$0x1]
    %v3049 = vlaneseq
    %v3050 = vshrl.u32 %v3049, 7
    %v3051 = vsub.s32 0, %v3050
    %v3052 = vrot.slane %v3048, %v3051
    %3053 = vmatprep.subr.mxu0 0.0
    %3054 = vmatpush1.msra.mxu0 0.0
    %3055 = vmatprep.subr.mxu0 0.0
    %3056 = vmatpush1.msra.mxu0 0.0
    %3057 = vmatprep.subr.mxu0 0.0
    %3058 = vmatpush1.msra.mxu0 0.0
    %3059 = vmatprep.subr.mxu0 0.0
    %3060 = vmatpush1.msra.mxu0 0.0
    %3061 = vmatprep.subr.mxu0 0.0
    %3062 = vmatpush1.msra.mxu0 0.0
    %3063 = vmatprep.subr.mxu0 0.0
    %3064 = vmatpush1.msra.mxu0 0.0
    %3065 = vmatprep.subr.mxu0 0.0
    %3066 = vmatpush1.msra.mxu0 0.0
    %3067 = vmatprep.subr.mxu0 0.0
    %3068 = vmatpush1.msra.mxu0 0.0
    %3069 = vmatprep.subr.mxu0 0.0
    %3070 = vmatpush1.msra.mxu0 0.0
    %3071 = vmatprep.subr.mxu0 0.0
    %3072 = vmatpush1.msra.mxu0 0.0
    %3073 = vmatprep.subr.mxu0 0.0
    %3074 = vmatpush1.msra.mxu0 0.0
    %3075 = vmatprep.subr.mxu0 0.0
    %3076 = vmatpush1.msra.mxu0 0.0
    %3077 = vmatprep.subr.mxu0 0.0
    %3078 = vmatpush1.msra.mxu0 %v3047
    %3079 = vmatprep.subr.mxu0 0.0
    %3080 = vmatpush1.msra.mxu0 %v3046
    %3081 = vmatprep.subr.mxu0 0.0
    %3082 = vmatpush1.msra.mxu0 %v3045
    %3083 = vmatprep.subr.mxu0 0.0
    %3084 = vmatpush1.msra.mxu0 %v3044
    %3085 = vmatprep.subr.mxu0 0.0
    %3086 = vmatpush2.msra.mxu0 0.0
    %3087 = vmatprep.subr.mxu0 0.0
    %3088 = vmatpush2.msra.mxu0 0.0
    %3089 = vmatprep.subr.mxu0 0.0
    %3090 = vmatpush2.msra.mxu0 0.0
    %3091 = vmatprep.subr.mxu0 0.0
    %3092 = vmatpush2.msra.mxu0 0.0
    %3093 = vmatprep.subr.mxu0 0.0
    %3094 = vmatpush2.msra.mxu0 0.0
    %3095 = vmatprep.subr.mxu0 0.0
    %3096 = vmatpush2.msra.mxu0 0.0
    %3097 = vmatprep.subr.mxu0 0.0
    %3098 = vmatpush2.msra.mxu0 0.0
    %3099 = vmatprep.subr.mxu0 0.0
    %3100 = vmatpush2.msra.mxu0 0.0
    %3101 = vmatprep.subr.mxu0 0.0
    %3102 = vmatpush2.msra.mxu0 0.0
    %3103 = vmatprep.subr.mxu0 0.0
    %3104 = vmatpush2.msra.mxu0 0.0
    %3105 = vmatprep.subr.mxu0 0.0
    %3106 = vmatpush2.msra.mxu0 0.0
    %3107 = vmatprep.subr.mxu0 0.0
    %3108 = vmatpush2.msra.mxu0 0.0
    %3109 = vmatprep.subr.mxu0 0.0
    %3110 = vmatpush2.msra.mxu0 0.0
    %3111 = vmatprep.subr.mxu0 0.0
    %3112 = vmatpush2.msra.mxu0 0.0
    %3113 = vmatprep.subr.mxu0 0.0
    %3114 = vmatpush2.msra.mxu0 0.0
    %3115 = vmatprep.subr.mxu0 0.0
    %3116 = vmatpush2.msra.mxu0 0.0
    %3117 = vmatprep.mubr.f32.mxu0 0.0
    %3118 = vmatmul.mubr.f32.gmra.mxu0 %v857
    %v3119 = vpop.f32.mrf.mxu0
    %v3120 = vadd.f32 %v3052, %v3119
    %v3121 = vpop.f32.mrf.mxu0
    %3122 = vmatprep.mubr.f32.mxu0 0.0
    %3123 = vmatmul.mubr.f32.gmra.mxu0 %v860
    %v3124 = vpop.f32.mrf.mxu0
    %v3125 = vadd.f32 %v3052, %v3124
    %v3126 = vpop.f32.mrf.mxu0
    %3127 = vmatprep.mubr.f32.mxu0 0.0
    %3128 = vmatmul.mubr.f32.gmra.mxu0 %v863
    %v3129 = vpop.f32.mrf.mxu0
    %v3130 = vadd.f32 %v3052, %v3129
    %v3131 = vpop.f32.mrf.mxu0
    %3132 = vmatprep.mubr.f32.mxu0 0.0
    %3133 = vmatmul.mubr.f32.gmra.mxu0 %v866
    %v3134 = vpop.f32.mrf.mxu0
    %v3135 = vadd.f32 %v3052, %v3134
    %v3136 = vpop.f32.mrf.mxu0
    %3137 = vmatprep.mubr.f32.mxu0 0.0
    %3138 = vmatmul.mubr.f32.gmra.mxu0 %v869
    %v3139 = vpop.f32.mrf.mxu0
    %v3140 = vadd.f32 %v3052, %v3139
    %v3141 = vpop.f32.mrf.mxu0
    %3142 = vmatprep.mubr.f32.mxu0 0.0
    %3143 = vmatmul.mubr.f32.gmra.mxu0 %v872
    %v3144 = vpop.f32.mrf.mxu0
    %v3145 = vadd.f32 %v3052, %v3144
    %v3146 = vpop.f32.mrf.mxu0
    %3147 = vmatprep.mubr.f32.mxu0 0.0
    %3148 = vmatmul.mubr.f32.gmra.mxu0 %v875
    %v3149 = vpop.f32.mrf.mxu0
    %v3150 = vadd.f32 %v3052, %v3149
    %v3151 = vpop.f32.mrf.mxu0
    %3152 = vmatprep.mubr.f32.mxu0 0.0
    %3153 = vmatmul.mubr.f32.gmra.mxu0 %v878
    %v3154 = vpop.f32.mrf.mxu0
    %v3155 = vadd.f32 %v3052, %v3154
    %v3156 = vpop.f32.mrf.mxu0
    %3157 = vdwg.mxu0
    %v3158 = vmax.f32 %v3120, 0.0
    %v3159 = vmax.f32 %v3125, 0.0
    %v3160 = vmax.f32 %v3130, 0.0
    %v3161 = vmax.f32 %v3135, 0.0
    %v3162 = vmax.f32 %v3140, 0.0
    %v3163 = vmax.f32 %v3145, 0.0
    %v3164 = vmax.f32 %v3150, 0.0
    %v3165 = vmax.f32 %v3155, 0.0
    %v3166 = vld [vmem:[#allocation2 + $0x150] sm:$0xff]
    %v3167 = vld [vmem:[#allocation2 + $0x158] sm:$0xff]
    %v3168 = vld [vmem:[#allocation2 + $0x160] sm:$0xff]
    %v3169 = vld [vmem:[#allocation2 + $0x168] sm:$0xff]
    %v3170 = vld [vmem:[#allocation2 + $0x170] sm:$0x1]
    %v3171 = vlaneseq
    %v3172 = vshrl.u32 %v3171, 7
    %v3173 = vsub.s32 0, %v3172
    %v3174 = vrot.slane %v3170, %v3173
    %3175 = vmatprep.subr.mxu0 0.0
    %3176 = vmatpush1.msra.mxu0 0.0
    %3177 = vmatprep.subr.mxu0 0.0
    %3178 = vmatpush1.msra.mxu0 0.0
    %3179 = vmatprep.subr.mxu0 0.0
    %3180 = vmatpush1.msra.mxu0 0.0
    %3181 = vmatprep.subr.mxu0 0.0
    %3182 = vmatpush1.msra.mxu0 0.0
    %3183 = vmatprep.subr.mxu0 0.0
    %3184 = vmatpush1.msra.mxu0 0.0
    %3185 = vmatprep.subr.mxu0 0.0
    %3186 = vmatpush1.msra.mxu0 0.0
    %3187 = vmatprep.subr.mxu0 0.0
    %3188 = vmatpush1.msra.mxu0 0.0
    %3189 = vmatprep.subr.mxu0 0.0
    %3190 = vmatpush1.msra.mxu0 0.0
    %3191 = vmatprep.subr.mxu0 0.0
    %3192 = vmatpush1.msra.mxu0 0.0
    %3193 = vmatprep.subr.mxu0 0.0
    %3194 = vmatpush1.msra.mxu0 0.0
    %3195 = vmatprep.subr.mxu0 0.0
    %3196 = vmatpush1.msra.mxu0 0.0
    %3197 = vmatprep.subr.mxu0 0.0
    %3198 = vmatpush1.msra.mxu0 0.0
    %3199 = vmatprep.subr.mxu0 0.0
    %3200 = vmatpush1.msra.mxu0 %v3169
    %3201 = vmatprep.subr.mxu0 0.0
    %3202 = vmatpush1.msra.mxu0 %v3168
    %3203 = vmatprep.subr.mxu0 0.0
    %3204 = vmatpush1.msra.mxu0 %v3167
    %3205 = vmatprep.subr.mxu0 0.0
    %3206 = vmatpush1.msra.mxu0 %v3166
    %3207 = vmatprep.subr.mxu0 0.0
    %3208 = vmatpush2.msra.mxu0 0.0
    %3209 = vmatprep.subr.mxu0 0.0
    %3210 = vmatpush2.msra.mxu0 0.0
    %3211 = vmatprep.subr.mxu0 0.0
    %3212 = vmatpush2.msra.mxu0 0.0
    %3213 = vmatprep.subr.mxu0 0.0
    %3214 = vmatpush2.msra.mxu0 0.0
    %3215 = vmatprep.subr.mxu0 0.0
    %3216 = vmatpush2.msra.mxu0 0.0
    %3217 = vmatprep.subr.mxu0 0.0
    %3218 = vmatpush2.msra.mxu0 0.0
    %3219 = vmatprep.subr.mxu0 0.0
    %3220 = vmatpush2.msra.mxu0 0.0
    %3221 = vmatprep.subr.mxu0 0.0
    %3222 = vmatpush2.msra.mxu0 0.0
    %3223 = vmatprep.subr.mxu0 0.0
    %3224 = vmatpush2.msra.mxu0 0.0
    %3225 = vmatprep.subr.mxu0 0.0
    %3226 = vmatpush2.msra.mxu0 0.0
    %3227 = vmatprep.subr.mxu0 0.0
    %3228 = vmatpush2.msra.mxu0 0.0
    %3229 = vmatprep.subr.mxu0 0.0
    %3230 = vmatpush2.msra.mxu0 0.0
    %3231 = vmatprep.subr.mxu0 0.0
    %3232 = vmatpush2.msra.mxu0 0.0
    %3233 = vmatprep.subr.mxu0 0.0
    %3234 = vmatpush2.msra.mxu0 0.0
    %3235 = vmatprep.subr.mxu0 0.0
    %3236 = vmatpush2.msra.mxu0 0.0
    %3237 = vmatprep.subr.mxu0 0.0
    %3238 = vmatpush2.msra.mxu0 0.0
    %3239 = vmatprep.mubr.f32.mxu0 0.0
    %3240 = vmatmul.mubr.f32.gmra.mxu0 %v1125
    %v3241 = vpop.f32.mrf.mxu0
    %v3242 = vadd.f32 %v3174, %v3241
    %v3243 = vpop.f32.mrf.mxu0
    %3244 = vmatprep.mubr.f32.mxu0 0.0
    %3245 = vmatmul.mubr.f32.gmra.mxu0 %v1128
    %v3246 = vpop.f32.mrf.mxu0
    %v3247 = vadd.f32 %v3174, %v3246
    %v3248 = vpop.f32.mrf.mxu0
    %3249 = vmatprep.mubr.f32.mxu0 0.0
    %3250 = vmatmul.mubr.f32.gmra.mxu0 %v1131
    %v3251 = vpop.f32.mrf.mxu0
    %v3252 = vadd.f32 %v3174, %v3251
    %v3253 = vpop.f32.mrf.mxu0
    %3254 = vmatprep.mubr.f32.mxu0 0.0
    %3255 = vmatmul.mubr.f32.gmra.mxu0 %v1134
    %v3256 = vpop.f32.mrf.mxu0
    %v3257 = vadd.f32 %v3174, %v3256
    %v3258 = vpop.f32.mrf.mxu0
    %3259 = vmatprep.mubr.f32.mxu0 0.0
    %3260 = vmatmul.mubr.f32.gmra.mxu0 %v1137
    %v3261 = vpop.f32.mrf.mxu0
    %v3262 = vadd.f32 %v3174, %v3261
    %v3263 = vpop.f32.mrf.mxu0
    %3264 = vmatprep.mubr.f32.mxu0 0.0
    %3265 = vmatmul.mubr.f32.gmra.mxu0 %v1140
    %v3266 = vpop.f32.mrf.mxu0
    %v3267 = vadd.f32 %v3174, %v3266
    %v3268 = vpop.f32.mrf.mxu0
    %3269 = vmatprep.mubr.f32.mxu0 0.0
    %3270 = vmatmul.mubr.f32.gmra.mxu0 %v1143
    %v3271 = vpop.f32.mrf.mxu0
    %v3272 = vadd.f32 %v3174, %v3271
    %v3273 = vpop.f32.mrf.mxu0
    %3274 = vmatprep.mubr.f32.mxu0 0.0
    %3275 = vmatmul.mubr.f32.gmra.mxu0 %v1146
    %v3276 = vpop.f32.mrf.mxu0
    %v3277 = vadd.f32 %v3174, %v3276
    %v3278 = vpop.f32.mrf.mxu0
    %3279 = vdwg.mxu0
    %v3280 = vmax.f32 %v3242, 0.0
    %v3281 = vmax.f32 %v3247, 0.0
    %v3282 = vmax.f32 %v3252, 0.0
    %v3283 = vmax.f32 %v3257, 0.0
    %v3284 = vmax.f32 %v3262, 0.0
    %v3285 = vmax.f32 %v3267, 0.0
    %v3286 = vmax.f32 %v3272, 0.0
    %v3287 = vmax.f32 %v3277, 0.0
    %v3288 = vld [vmem:[#allocation2 + $0x178] sm:$0xff]
    %v3289 = vld [vmem:[#allocation2 + $0x180] sm:$0xff]
    %v3290 = vld [vmem:[#allocation2 + $0x188] sm:$0x1]
    %v3291 = vlaneseq
    %v3292 = vshrl.u32 %v3291, 7
    %v3293 = vsub.s32 0, %v3292
    %v3294 = vrot.slane %v3290, %v3293
    %3295 = vmatprep.subr.mxu0 0.0
    %3296 = vmatpush1.msra.mxu0 0.0
    %3297 = vmatprep.subr.mxu0 0.0
    %3298 = vmatpush1.msra.mxu0 0.0
    %3299 = vmatprep.subr.mxu0 0.0
    %3300 = vmatpush1.msra.mxu0 0.0
    %3301 = vmatprep.subr.mxu0 0.0
    %3302 = vmatpush1.msra.mxu0 0.0
    %3303 = vmatprep.subr.mxu0 0.0
    %3304 = vmatpush1.msra.mxu0 0.0
    %3305 = vmatprep.subr.mxu0 0.0
    %3306 = vmatpush1.msra.mxu0 0.0
    %3307 = vmatprep.subr.mxu0 0.0
    %3308 = vmatpush1.msra.mxu0 0.0
    %3309 = vmatprep.subr.mxu0 0.0
    %3310 = vmatpush1.msra.mxu0 0.0
    %3311 = vmatprep.subr.mxu0 0.0
    %3312 = vmatpush1.msra.mxu0 0.0
    %3313 = vmatprep.subr.mxu0 0.0
    %3314 = vmatpush1.msra.mxu0 0.0
    %3315 = vmatprep.subr.mxu0 0.0
    %3316 = vmatpush1.msra.mxu0 0.0
    %3317 = vmatprep.subr.mxu0 0.0
    %3318 = vmatpush1.msra.mxu0 0.0
    %3319 = vmatprep.subr.mxu0 0.0
    %3320 = vmatpush1.msra.mxu0 0.0
    %3321 = vmatprep.subr.mxu0 0.0
    %3322 = vmatpush1.msra.mxu0 0.0
    %3323 = vmatprep.subr.mxu0 0.0
    %3324 = vmatpush1.msra.mxu0 %v3289
    %3325 = vmatprep.subr.mxu0 0.0
    %3326 = vmatpush1.msra.mxu0 %v3288
    %3327 = vmatprep.subr.mxu0 0.0
    %3328 = vmatpush2.msra.mxu0 0.0
    %3329 = vmatprep.subr.mxu0 0.0
    %3330 = vmatpush2.msra.mxu0 0.0
    %3331 = vmatprep.subr.mxu0 0.0
    %3332 = vmatpush2.msra.mxu0 0.0
    %3333 = vmatprep.subr.mxu0 0.0
    %3334 = vmatpush2.msra.mxu0 0.0
    %3335 = vmatprep.subr.mxu0 0.0
    %3336 = vmatpush2.msra.mxu0 0.0
    %3337 = vmatprep.subr.mxu0 0.0
    %3338 = vmatpush2.msra.mxu0 0.0
    %3339 = vmatprep.subr.mxu0 0.0
    %3340 = vmatpush2.msra.mxu0 0.0
    %3341 = vmatprep.subr.mxu0 0.0
    %3342 = vmatpush2.msra.mxu0 0.0
    %3343 = vmatprep.subr.mxu0 0.0
    %3344 = vmatpush2.msra.mxu0 0.0
    %3345 = vmatprep.subr.mxu0 0.0
    %3346 = vmatpush2.msra.mxu0 0.0
    %3347 = vmatprep.subr.mxu0 0.0
    %3348 = vmatpush2.msra.mxu0 0.0
    %3349 = vmatprep.subr.mxu0 0.0
    %3350 = vmatpush2.msra.mxu0 0.0
    %3351 = vmatprep.subr.mxu0 0.0
    %3352 = vmatpush2.msra.mxu0 0.0
    %3353 = vmatprep.subr.mxu0 0.0
    %3354 = vmatpush2.msra.mxu0 0.0
    %3355 = vmatprep.subr.mxu0 0.0
    %3356 = vmatpush2.msra.mxu0 0.0
    %3357 = vmatprep.subr.mxu0 0.0
    %3358 = vmatpush2.msra.mxu0 0.0
    %3359 = vmatprep.mubr.f32.mxu0 0.0
    %3360 = vmatmul.mubr.f32.gmra.mxu0 %v2117
    %v3361 = vpop.f32.mrf.mxu0
    %v3362 = vadd.f32 %v3294, %v3361
    %v3363 = vpop.f32.mrf.mxu0
    %3364 = vmatprep.mubr.f32.mxu0 0.0
    %3365 = vmatmul.mubr.f32.gmra.mxu0 %v2120
    %v3366 = vpop.f32.mrf.mxu0
    %v3367 = vadd.f32 %v3294, %v3366
    %v3368 = vpop.f32.mrf.mxu0
    %3369 = vmatprep.mubr.f32.mxu0 0.0
    %3370 = vmatmul.mubr.f32.gmra.mxu0 %v2123
    %v3371 = vpop.f32.mrf.mxu0
    %v3372 = vadd.f32 %v3294, %v3371
    %v3373 = vpop.f32.mrf.mxu0
    %3374 = vmatprep.mubr.f32.mxu0 0.0
    %3375 = vmatmul.mubr.f32.gmra.mxu0 %v2126
    %v3376 = vpop.f32.mrf.mxu0
    %v3377 = vadd.f32 %v3294, %v3376
    %v3378 = vpop.f32.mrf.mxu0
    %3379 = vmatprep.mubr.f32.mxu0 0.0
    %3380 = vmatmul.mubr.f32.gmra.mxu0 %v2129
    %v3381 = vpop.f32.mrf.mxu0
    %v3382 = vadd.f32 %v3294, %v3381
    %v3383 = vpop.f32.mrf.mxu0
    %3384 = vmatprep.mubr.f32.mxu0 0.0
    %3385 = vmatmul.mubr.f32.gmra.mxu0 %v2132
    %v3386 = vpop.f32.mrf.mxu0
    %v3387 = vadd.f32 %v3294, %v3386
    %v3388 = vpop.f32.mrf.mxu0
    %3389 = vmatprep.mubr.f32.mxu0 0.0
    %3390 = vmatmul.mubr.f32.gmra.mxu0 %v2135
    %v3391 = vpop.f32.mrf.mxu0
    %v3392 = vadd.f32 %v3294, %v3391
    %v3393 = vpop.f32.mrf.mxu0
    %3394 = vmatprep.mubr.f32.mxu0 0.0
    %3395 = vmatmul.mubr.f32.gmra.mxu0 %v2138
    %v3396 = vpop.f32.mrf.mxu0
    %v3397 = vadd.f32 %v3294, %v3396
    %v3398 = vpop.f32.mrf.mxu0
    %3399 = vdwg.mxu0
    %v3400 = vmax.f32 %v3362, 0.0
    %v3401 = vmax.f32 %v3367, 0.0
    %v3402 = vmax.f32 %v3372, 0.0
    %v3403 = vmax.f32 %v3377, 0.0
    %v3404 = vmax.f32 %v3382, 0.0
    %v3405 = vmax.f32 %v3387, 0.0
    %v3406 = vmax.f32 %v3392, 0.0
    %v3407 = vmax.f32 %v3397, 0.0
    %v3408 = vld [vmem:[#allocation2 + $0x190] sm:$0xff]
    %v3409 = vld [vmem:[#allocation2 + $0x198] sm:$0xff]
    %v3410 = vld [vmem:[#allocation2 + $0x1a0] sm:$0x1]
    %v3411 = vlaneseq
    %v3412 = vshrl.u32 %v3411, 7
    %v3413 = vsub.s32 0, %v3412
    %v3414 = vrot.slane %v3410, %v3413
    %v3416 = vsel %vm533, %v3036, 0
    %v3419 = vsel %vm533, %v3037, 0
    %v3422 = vsel %vm533, %v3038, 0
    %v3425 = vsel %vm533, %v3039, 0
    %v3428 = vsel %vm533, %v3040, 0
    %v3431 = vsel %vm533, %v3041, 0
    %v3434 = vsel %vm533, %v3042, 0
    %v3437 = vsel %vm533, %v3043, 0
    %3439 = vmatprep.subr.mxu0 0.0
    %3440 = vmatpush1.msra.mxu0 0.0
    %3441 = vmatprep.subr.mxu0 0.0
    %3442 = vmatpush1.msra.mxu0 0.0
    %3443 = vmatprep.subr.mxu0 0.0
    %3444 = vmatpush1.msra.mxu0 0.0
    %3445 = vmatprep.subr.mxu0 0.0
    %3446 = vmatpush1.msra.mxu0 0.0
    %3447 = vmatprep.subr.mxu0 0.0
    %3448 = vmatpush1.msra.mxu0 0.0
    %3449 = vmatprep.subr.mxu0 0.0
    %3450 = vmatpush1.msra.mxu0 0.0
    %3451 = vmatprep.subr.mxu0 0.0
    %3452 = vmatpush1.msra.mxu0 0.0
    %3453 = vmatprep.subr.mxu0 0.0
    %3454 = vmatpush1.msra.mxu0 0.0
    %3455 = vmatprep.subr.mxu0 0.0
    %3456 = vmatpush1.msra.mxu0 0.0
    %3457 = vmatprep.subr.mxu0 0.0
    %3458 = vmatpush1.msra.mxu0 0.0
    %3459 = vmatprep.subr.mxu0 0.0
    %3460 = vmatpush1.msra.mxu0 0.0
    %3461 = vmatprep.subr.mxu0 0.0
    %3462 = vmatpush1.msra.mxu0 0.0
    %3463 = vmatprep.subr.mxu0 0.0
    %3464 = vmatpush1.msra.mxu0 0.0
    %3465 = vmatprep.subr.mxu0 0.0
    %3466 = vmatpush1.msra.mxu0 0.0
    %3467 = vmatprep.subr.mxu0 0.0
    %3468 = vmatpush1.msra.mxu0 %v3409
    %3469 = vmatprep.subr.mxu0 0.0
    %3470 = vmatpush1.msra.mxu0 %v3408
    %3471 = vmatprep.subr.mxu0 0.0
    %3472 = vmatpush2.msra.mxu0 0.0
    %3473 = vmatprep.subr.mxu0 0.0
    %3474 = vmatpush2.msra.mxu0 0.0
    %3475 = vmatprep.subr.mxu0 0.0
    %3476 = vmatpush2.msra.mxu0 0.0
    %3477 = vmatprep.subr.mxu0 0.0
    %3478 = vmatpush2.msra.mxu0 0.0
    %3479 = vmatprep.subr.mxu0 0.0
    %3480 = vmatpush2.msra.mxu0 0.0
    %3481 = vmatprep.subr.mxu0 0.0
    %3482 = vmatpush2.msra.mxu0 0.0
    %3483 = vmatprep.subr.mxu0 0.0
    %3484 = vmatpush2.msra.mxu0 0.0
    %3485 = vmatprep.subr.mxu0 0.0
    %3486 = vmatpush2.msra.mxu0 0.0
    %3487 = vmatprep.subr.mxu0 0.0
    %3488 = vmatpush2.msra.mxu0 0.0
    %3489 = vmatprep.subr.mxu0 0.0
    %3490 = vmatpush2.msra.mxu0 0.0
    %3491 = vmatprep.subr.mxu0 0.0
    %3492 = vmatpush2.msra.mxu0 0.0
    %3493 = vmatprep.subr.mxu0 0.0
    %3494 = vmatpush2.msra.mxu0 0.0
    %3495 = vmatprep.subr.mxu0 0.0
    %3496 = vmatpush2.msra.mxu0 0.0
    %3497 = vmatprep.subr.mxu0 0.0
    %3498 = vmatpush2.msra.mxu0 0.0
    %3499 = vmatprep.subr.mxu0 0.0
    %3500 = vmatpush2.msra.mxu0 0.0
    %3501 = vmatprep.subr.mxu0 0.0
    %3502 = vmatpush2.msra.mxu0 0.0
    %3503 = vmatprep.mubr.f32.mxu0 0.0
    %3504 = vmatmul.mubr.f32.gmra.mxu0 %v3416
    %v3505 = vpop.f32.mrf.mxu0
    %v3506 = vadd.f32 %v3414, %v3505
    %v3507 = vpop.f32.mrf.mxu0
    %3508 = vmatprep.mubr.f32.mxu0 0.0
    %3509 = vmatmul.mubr.f32.gmra.mxu0 %v3419
    %v3510 = vpop.f32.mrf.mxu0
    %v3511 = vadd.f32 %v3414, %v3510
    %v3512 = vpop.f32.mrf.mxu0
    %3513 = vmatprep.mubr.f32.mxu0 0.0
    %3514 = vmatmul.mubr.f32.gmra.mxu0 %v3422
    %v3515 = vpop.f32.mrf.mxu0
    %v3516 = vadd.f32 %v3414, %v3515
    %v3517 = vpop.f32.mrf.mxu0
    %3518 = vmatprep.mubr.f32.mxu0 0.0
    %3519 = vmatmul.mubr.f32.gmra.mxu0 %v3425
    %v3520 = vpop.f32.mrf.mxu0
    %v3521 = vadd.f32 %v3414, %v3520
    %v3522 = vpop.f32.mrf.mxu0
    %3523 = vmatprep.mubr.f32.mxu0 0.0
    %3524 = vmatmul.mubr.f32.gmra.mxu0 %v3428
    %v3525 = vpop.f32.mrf.mxu0
    %v3526 = vadd.f32 %v3414, %v3525
    %v3527 = vpop.f32.mrf.mxu0
    %3528 = vmatprep.mubr.f32.mxu0 0.0
    %3529 = vmatmul.mubr.f32.gmra.mxu0 %v3431
    %v3530 = vpop.f32.mrf.mxu0
    %v3531 = vadd.f32 %v3414, %v3530
    %v3532 = vpop.f32.mrf.mxu0
    %3533 = vmatprep.mubr.f32.mxu0 0.0
    %3534 = vmatmul.mubr.f32.gmra.mxu0 %v3434
    %v3535 = vpop.f32.mrf.mxu0
    %v3536 = vadd.f32 %v3414, %v3535
    %v3537 = vpop.f32.mrf.mxu0
    %3538 = vmatprep.mubr.f32.mxu0 0.0
    %3539 = vmatmul.mubr.f32.gmra.mxu0 %v3437
    %v3540 = vpop.f32.mrf.mxu0
    %v3541 = vadd.f32 %v3414, %v3540
    %v3542 = vpop.f32.mrf.mxu0
    %3543 = vdwg.mxu0
    %v3544 = vmax.f32 %v3506, 0.0
    %v3545 = vmax.f32 %v3511, 0.0
    %v3546 = vmax.f32 %v3516, 0.0
    %v3547 = vmax.f32 %v3521, 0.0
    %v3548 = vmax.f32 %v3526, 0.0
    %v3549 = vmax.f32 %v3531, 0.0
    %v3550 = vmax.f32 %v3536, 0.0
    %v3551 = vmax.f32 %v3541, 0.0
    %v3552 = vld [vmem:[#allocation2 + $0x238] sm:$0xff]
    %v3553 = vld [vmem:[#allocation2 + $0x240] sm:$0xff]
    %vm3554 = vcmask 64512
    %v3556 = vsel %vm3554, %v3280, 0
    %v3559 = vsel %vm3554, %v3281, 0
    %v3562 = vsel %vm3554, %v3282, 0
    %v3565 = vsel %vm3554, %v3283, 0
    %v3568 = vsel %vm3554, %v3284, 0
    %v3571 = vsel %vm3554, %v3285, 0
    %v3574 = vsel %vm3554, %v3286, 0
    %v3577 = vsel %vm3554, %v3287, 0
    %3579 = vmatprep.subr.mxu0 0.0
    %3580 = vmatpush1.msra.mxu0 0.0
    %3581 = vmatprep.subr.mxu0 0.0
    %3582 = vmatpush1.msra.mxu0 0.0
    %3583 = vmatprep.subr.mxu0 0.0
    %3584 = vmatpush1.msra.mxu0 0.0
    %3585 = vmatprep.subr.mxu0 0.0
    %3586 = vmatpush1.msra.mxu0 0.0
    %3587 = vmatprep.subr.mxu0 0.0
    %3588 = vmatpush1.msra.mxu0 0.0
    %3589 = vmatprep.subr.mxu0 0.0
    %3590 = vmatpush1.msra.mxu0 0.0
    %3591 = vmatprep.subr.mxu0 0.0
    %3592 = vmatpush1.msra.mxu0 0.0
    %3593 = vmatprep.subr.mxu0 0.0
    %3594 = vmatpush1.msra.mxu0 0.0
    %3595 = vmatprep.subr.mxu0 0.0
    %3596 = vmatpush1.msra.mxu0 0.0
    %3597 = vmatprep.subr.mxu0 0.0
    %3598 = vmatpush1.msra.mxu0 0.0
    %3599 = vmatprep.subr.mxu0 0.0
    %3600 = vmatpush1.msra.mxu0 0.0
    %3601 = vmatprep.subr.mxu0 0.0
    %3602 = vmatpush1.msra.mxu0 0.0
    %3603 = vmatprep.subr.mxu0 0.0
    %3604 = vmatpush1.msra.mxu0 0.0
    %3605 = vmatprep.subr.mxu0 0.0
    %3606 = vmatpush1.msra.mxu0 0.0
    %3607 = vmatprep.subr.mxu0 0.0
    %3608 = vmatpush1.msra.mxu0 0.0
    %3609 = vmatprep.subr.mxu0 0.0
    %3610 = vmatpush1.msra.mxu0 %v3553
    %3611 = vmatprep.subr.mxu0 0.0
    %3612 = vmatpush2.msra.mxu0 0.0
    %3613 = vmatprep.subr.mxu0 0.0
    %3614 = vmatpush2.msra.mxu0 0.0
    %3615 = vmatprep.subr.mxu0 0.0
    %3616 = vmatpush2.msra.mxu0 0.0
    %3617 = vmatprep.subr.mxu0 0.0
    %3618 = vmatpush2.msra.mxu0 0.0
    %3619 = vmatprep.subr.mxu0 0.0
    %3620 = vmatpush2.msra.mxu0 0.0
    %3621 = vmatprep.subr.mxu0 0.0
    %3622 = vmatpush2.msra.mxu0 0.0
    %3623 = vmatprep.subr.mxu0 0.0
    %3624 = vmatpush2.msra.mxu0 0.0
    %3625 = vmatprep.subr.mxu0 0.0
    %3626 = vmatpush2.msra.mxu0 0.0
    %3627 = vmatprep.subr.mxu0 0.0
    %3628 = vmatpush2.msra.mxu0 0.0
    %3629 = vmatprep.subr.mxu0 0.0
    %3630 = vmatpush2.msra.mxu0 0.0
    %3631 = vmatprep.subr.mxu0 0.0
    %3632 = vmatpush2.msra.mxu0 0.0
    %3633 = vmatprep.subr.mxu0 0.0
    %3634 = vmatpush2.msra.mxu0 0.0
    %3635 = vmatprep.subr.mxu0 0.0
    %3636 = vmatpush2.msra.mxu0 0.0
    %3637 = vmatprep.subr.mxu0 0.0
    %3638 = vmatpush2.msra.mxu0 0.0
    %3639 = vmatprep.subr.mxu0 0.0
    %3640 = vmatpush2.msra.mxu0 0.0
    %3641 = vmatprep.subr.mxu0 0.0
    %3642 = vmatpush2.msra.mxu0 0.0
    %3643 = vmatprep.mubr.f32.mxu0 0.0
    %3644 = vmatmul.mubr.f32.gmra.mxu0 %v3556
    %v3645 = vpop.f32.mrf.mxu0
    %v3646 = vadd.f32 0.0, %v3645
    %v3647 = vpop.f32.mrf.mxu0
    %3648 = vmatprep.mubr.f32.mxu0 0.0
    %3649 = vmatmul.mubr.f32.gmra.mxu0 %v3559
    %v3650 = vpop.f32.mrf.mxu0
    %v3651 = vadd.f32 0.0, %v3650
    %v3652 = vpop.f32.mrf.mxu0
    %3653 = vmatprep.mubr.f32.mxu0 0.0
    %3654 = vmatmul.mubr.f32.gmra.mxu0 %v3562
    %v3655 = vpop.f32.mrf.mxu0
    %v3656 = vadd.f32 0.0, %v3655
    %v3657 = vpop.f32.mrf.mxu0
    %3658 = vmatprep.mubr.f32.mxu0 0.0
    %3659 = vmatmul.mubr.f32.gmra.mxu0 %v3565
    %v3660 = vpop.f32.mrf.mxu0
    %v3661 = vadd.f32 0.0, %v3660
    %v3662 = vpop.f32.mrf.mxu0
    %3663 = vmatprep.mubr.f32.mxu0 0.0
    %3664 = vmatmul.mubr.f32.gmra.mxu0 %v3568
    %v3665 = vpop.f32.mrf.mxu0
    %v3666 = vadd.f32 0.0, %v3665
    %v3667 = vpop.f32.mrf.mxu0
    %3668 = vmatprep.mubr.f32.mxu0 0.0
    %3669 = vmatmul.mubr.f32.gmra.mxu0 %v3571
    %v3670 = vpop.f32.mrf.mxu0
    %v3671 = vadd.f32 0.0, %v3670
    %v3672 = vpop.f32.mrf.mxu0
    %3673 = vmatprep.mubr.f32.mxu0 0.0
    %3674 = vmatmul.mubr.f32.gmra.mxu0 %v3574
    %v3675 = vpop.f32.mrf.mxu0
    %v3676 = vadd.f32 0.0, %v3675
    %v3677 = vpop.f32.mrf.mxu0
    %3678 = vmatprep.mubr.f32.mxu0 0.0
    %3679 = vmatmul.mubr.f32.gmra.mxu0 %v3577
    %v3680 = vpop.f32.mrf.mxu0
    %v3681 = vadd.f32 0.0, %v3680
    %v3682 = vpop.f32.mrf.mxu0
    %3683 = vdwg.mxu0
    %v3685 = vsel %vm3554, %v3158, 0
    %v3688 = vsel %vm3554, %v3159, 0
    %v3691 = vsel %vm3554, %v3160, 0
    %v3694 = vsel %vm3554, %v3161, 0
    %v3697 = vsel %vm3554, %v3162, 0
    %v3700 = vsel %vm3554, %v3163, 0
    %v3703 = vsel %vm3554, %v3164, 0
    %v3706 = vsel %vm3554, %v3165, 0
    %3708 = vmatprep.subr.mxu0 0.0
    %3709 = vmatpush1.msra.mxu0 0.0
    %3710 = vmatprep.subr.mxu0 0.0
    %3711 = vmatpush1.msra.mxu0 0.0
    %3712 = vmatprep.subr.mxu0 0.0
    %3713 = vmatpush1.msra.mxu0 0.0
    %3714 = vmatprep.subr.mxu0 0.0
    %3715 = vmatpush1.msra.mxu0 0.0
    %3716 = vmatprep.subr.mxu0 0.0
    %3717 = vmatpush1.msra.mxu0 0.0
    %3718 = vmatprep.subr.mxu0 0.0
    %3719 = vmatpush1.msra.mxu0 0.0
    %3720 = vmatprep.subr.mxu0 0.0
    %3721 = vmatpush1.msra.mxu0 0.0
    %3722 = vmatprep.subr.mxu0 0.0
    %3723 = vmatpush1.msra.mxu0 0.0
    %3724 = vmatprep.subr.mxu0 0.0
    %3725 = vmatpush1.msra.mxu0 0.0
    %3726 = vmatprep.subr.mxu0 0.0
    %3727 = vmatpush1.msra.mxu0 0.0
    %3728 = vmatprep.subr.mxu0 0.0
    %3729 = vmatpush1.msra.mxu0 0.0
    %3730 = vmatprep.subr.mxu0 0.0
    %3731 = vmatpush1.msra.mxu0 0.0
    %3732 = vmatprep.subr.mxu0 0.0
    %3733 = vmatpush1.msra.mxu0 0.0
    %3734 = vmatprep.subr.mxu0 0.0
    %3735 = vmatpush1.msra.mxu0 0.0
    %3736 = vmatprep.subr.mxu0 0.0
    %3737 = vmatpush1.msra.mxu0 0.0
    %3738 = vmatprep.subr.mxu0 0.0
    %3739 = vmatpush1.msra.mxu0 %v3552
    %3740 = vmatprep.subr.mxu0 0.0
    %3741 = vmatpush2.msra.mxu0 0.0
    %3742 = vmatprep.subr.mxu0 0.0
    %3743 = vmatpush2.msra.mxu0 0.0
    %3744 = vmatprep.subr.mxu0 0.0
    %3745 = vmatpush2.msra.mxu0 0.0
    %3746 = vmatprep.subr.mxu0 0.0
    %3747 = vmatpush2.msra.mxu0 0.0
    %3748 = vmatprep.subr.mxu0 0.0
    %3749 = vmatpush2.msra.mxu0 0.0
    %3750 = vmatprep.subr.mxu0 0.0
    %3751 = vmatpush2.msra.mxu0 0.0
    %3752 = vmatprep.subr.mxu0 0.0
    %3753 = vmatpush2.msra.mxu0 0.0
    %3754 = vmatprep.subr.mxu0 0.0
    %3755 = vmatpush2.msra.mxu0 0.0
    %3756 = vmatprep.subr.mxu0 0.0
    %3757 = vmatpush2.msra.mxu0 0.0
    %3758 = vmatprep.subr.mxu0 0.0
    %3759 = vmatpush2.msra.mxu0 0.0
    %3760 = vmatprep.subr.mxu0 0.0
    %3761 = vmatpush2.msra.mxu0 0.0
    %3762 = vmatprep.subr.mxu0 0.0
    %3763 = vmatpush2.msra.mxu0 0.0
    %3764 = vmatprep.subr.mxu0 0.0
    %3765 = vmatpush2.msra.mxu0 0.0
    %3766 = vmatprep.subr.mxu0 0.0
    %3767 = vmatpush2.msra.mxu0 0.0
    %3768 = vmatprep.subr.mxu0 0.0
    %3769 = vmatpush2.msra.mxu0 0.0
    %3770 = vmatprep.subr.mxu0 0.0
    %3771 = vmatpush2.msra.mxu0 0.0
    %3772 = vmatprep.mubr.f32.mxu0 0.0
    %3773 = vmatmul.mubr.f32.gmra.mxu0 %v3685
    %v3774 = vpop.f32.mrf.mxu0
    %v3775 = vadd.f32 %v3646, %v3774
    %v3776 = vpop.f32.mrf.mxu0
    %3777 = vmatprep.mubr.f32.mxu0 0.0
    %3778 = vmatmul.mubr.f32.gmra.mxu0 %v3688
    %v3779 = vpop.f32.mrf.mxu0
    %v3780 = vadd.f32 %v3651, %v3779
    %v3781 = vpop.f32.mrf.mxu0
    %3782 = vmatprep.mubr.f32.mxu0 0.0
    %3783 = vmatmul.mubr.f32.gmra.mxu0 %v3691
    %v3784 = vpop.f32.mrf.mxu0
    %v3785 = vadd.f32 %v3656, %v3784
    %v3786 = vpop.f32.mrf.mxu0
    %3787 = vmatprep.mubr.f32.mxu0 0.0
    %3788 = vmatmul.mubr.f32.gmra.mxu0 %v3694
    %v3789 = vpop.f32.mrf.mxu0
    %v3790 = vadd.f32 %v3661, %v3789
    %v3791 = vpop.f32.mrf.mxu0
    %3792 = vmatprep.mubr.f32.mxu0 0.0
    %3793 = vmatmul.mubr.f32.gmra.mxu0 %v3697
    %v3794 = vpop.f32.mrf.mxu0
    %v3795 = vadd.f32 %v3666, %v3794
    %v3796 = vpop.f32.mrf.mxu0
    %3797 = vmatprep.mubr.f32.mxu0 0.0
    %3798 = vmatmul.mubr.f32.gmra.mxu0 %v3700
    %v3799 = vpop.f32.mrf.mxu0
    %v3800 = vadd.f32 %v3671, %v3799
    %v3801 = vpop.f32.mrf.mxu0
    %3802 = vmatprep.mubr.f32.mxu0 0.0
    %3803 = vmatmul.mubr.f32.gmra.mxu0 %v3703
    %v3804 = vpop.f32.mrf.mxu0
    %v3805 = vadd.f32 %v3676, %v3804
    %v3806 = vpop.f32.mrf.mxu0
    %3807 = vmatprep.mubr.f32.mxu0 0.0
    %3808 = vmatmul.mubr.f32.gmra.mxu0 %v3706
    %v3809 = vpop.f32.mrf.mxu0
    %v3810 = vadd.f32 %v3681, %v3809
    %v3811 = vpop.f32.mrf.mxu0
    %3812 = vdwg.mxu0
    %v3813 = vld [vmem:[#allocation2 + $0x248] sm:$0xff]
    %v3815 = vsel %vm3554, %v3400, 0
    %v3818 = vsel %vm3554, %v3401, 0
    %v3821 = vsel %vm3554, %v3402, 0
    %v3824 = vsel %vm3554, %v3403, 0
    %v3827 = vsel %vm3554, %v3404, 0
    %v3830 = vsel %vm3554, %v3405, 0
    %v3833 = vsel %vm3554, %v3406, 0
    %v3836 = vsel %vm3554, %v3407, 0
    %3838 = vmatprep.subr.mxu0 0.0
    %3839 = vmatpush1.msra.mxu0 0.0
    %3840 = vmatprep.subr.mxu0 0.0
    %3841 = vmatpush1.msra.mxu0 0.0
    %3842 = vmatprep.subr.mxu0 0.0
    %3843 = vmatpush1.msra.mxu0 0.0
    %3844 = vmatprep.subr.mxu0 0.0
    %3845 = vmatpush1.msra.mxu0 0.0
    %3846 = vmatprep.subr.mxu0 0.0
    %3847 = vmatpush1.msra.mxu0 0.0
    %3848 = vmatprep.subr.mxu0 0.0
    %3849 = vmatpush1.msra.mxu0 0.0
    %3850 = vmatprep.subr.mxu0 0.0
    %3851 = vmatpush1.msra.mxu0 0.0
    %3852 = vmatprep.subr.mxu0 0.0
    %3853 = vmatpush1.msra.mxu0 0.0
    %3854 = vmatprep.subr.mxu0 0.0
    %3855 = vmatpush1.msra.mxu0 0.0
    %3856 = vmatprep.subr.mxu0 0.0
    %3857 = vmatpush1.msra.mxu0 0.0
    %3858 = vmatprep.subr.mxu0 0.0
    %3859 = vmatpush1.msra.mxu0 0.0
    %3860 = vmatprep.subr.mxu0 0.0
    %3861 = vmatpush1.msra.mxu0 0.0
    %3862 = vmatprep.subr.mxu0 0.0
    %3863 = vmatpush1.msra.mxu0 0.0
    %3864 = vmatprep.subr.mxu0 0.0
    %3865 = vmatpush1.msra.mxu0 0.0
    %3866 = vmatprep.subr.mxu0 0.0
    %3867 = vmatpush1.msra.mxu0 0.0
    %3868 = vmatprep.subr.mxu0 0.0
    %3869 = vmatpush1.msra.mxu0 %v3813
    %3870 = vmatprep.subr.mxu0 0.0
    %3871 = vmatpush2.msra.mxu0 0.0
    %3872 = vmatprep.subr.mxu0 0.0
    %3873 = vmatpush2.msra.mxu0 0.0
    %3874 = vmatprep.subr.mxu0 0.0
    %3875 = vmatpush2.msra.mxu0 0.0
    %3876 = vmatprep.subr.mxu0 0.0
    %3877 = vmatpush2.msra.mxu0 0.0
    %3878 = vmatprep.subr.mxu0 0.0
    %3879 = vmatpush2.msra.mxu0 0.0
    %3880 = vmatprep.subr.mxu0 0.0
    %3881 = vmatpush2.msra.mxu0 0.0
    %3882 = vmatprep.subr.mxu0 0.0
    %3883 = vmatpush2.msra.mxu0 0.0
    %3884 = vmatprep.subr.mxu0 0.0
    %3885 = vmatpush2.msra.mxu0 0.0
    %3886 = vmatprep.subr.mxu0 0.0
    %3887 = vmatpush2.msra.mxu0 0.0
    %3888 = vmatprep.subr.mxu0 0.0
    %3889 = vmatpush2.msra.mxu0 0.0
    %3890 = vmatprep.subr.mxu0 0.0
    %3891 = vmatpush2.msra.mxu0 0.0
    %3892 = vmatprep.subr.mxu0 0.0
    %3893 = vmatpush2.msra.mxu0 0.0
    %3894 = vmatprep.subr.mxu0 0.0
    %3895 = vmatpush2.msra.mxu0 0.0
    %3896 = vmatprep.subr.mxu0 0.0
    %3897 = vmatpush2.msra.mxu0 0.0
    %3898 = vmatprep.subr.mxu0 0.0
    %3899 = vmatpush2.msra.mxu0 0.0
    %3900 = vmatprep.subr.mxu0 0.0
    %3901 = vmatpush2.msra.mxu0 0.0
    %3902 = vmatprep.mubr.f32.mxu0 0.0
    %3903 = vmatmul.mubr.f32.gmra.mxu0 %v3815
    %v3904 = vpop.f32.mrf.mxu0
    %v3905 = vadd.f32 0.0, %v3904
    %v3906 = vpop.f32.mrf.mxu0
    %3907 = vmatprep.mubr.f32.mxu0 0.0
    %3908 = vmatmul.mubr.f32.gmra.mxu0 %v3818
    %v3909 = vpop.f32.mrf.mxu0
    %v3910 = vadd.f32 0.0, %v3909
    %v3911 = vpop.f32.mrf.mxu0
    %3912 = vmatprep.mubr.f32.mxu0 0.0
    %3913 = vmatmul.mubr.f32.gmra.mxu0 %v3821
    %v3914 = vpop.f32.mrf.mxu0
    %v3915 = vadd.f32 0.0, %v3914
    %v3916 = vpop.f32.mrf.mxu0
    %3917 = vmatprep.mubr.f32.mxu0 0.0
    %3918 = vmatmul.mubr.f32.gmra.mxu0 %v3824
    %v3919 = vpop.f32.mrf.mxu0
    %v3920 = vadd.f32 0.0, %v3919
    %v3921 = vpop.f32.mrf.mxu0
    %3922 = vmatprep.mubr.f32.mxu0 0.0
    %3923 = vmatmul.mubr.f32.gmra.mxu0 %v3827
    %v3924 = vpop.f32.mrf.mxu0
    %v3925 = vadd.f32 0.0, %v3924
    %v3926 = vpop.f32.mrf.mxu0
    %3927 = vmatprep.mubr.f32.mxu0 0.0
    %3928 = vmatmul.mubr.f32.gmra.mxu0 %v3830
    %v3929 = vpop.f32.mrf.mxu0
    %v3930 = vadd.f32 0.0, %v3929
    %v3931 = vpop.f32.mrf.mxu0
    %3932 = vmatprep.mubr.f32.mxu0 0.0
    %3933 = vmatmul.mubr.f32.gmra.mxu0 %v3833
    %v3934 = vpop.f32.mrf.mxu0
    %v3935 = vadd.f32 0.0, %v3934
    %v3936 = vpop.f32.mrf.mxu0
    %3937 = vmatprep.mubr.f32.mxu0 0.0
    %3938 = vmatmul.mubr.f32.gmra.mxu0 %v3836
    %v3939 = vpop.f32.mrf.mxu0
    %v3940 = vadd.f32 0.0, %v3939
    %v3941 = vpop.f32.mrf.mxu0
    %3942 = vdwg.mxu0
    %v3943 = vadd.f32 %v3775, %v3905
    %v3944 = vadd.f32 %v3780, %v3910
    %v3945 = vadd.f32 %v3785, %v3915
    %v3946 = vadd.f32 %v3790, %v3920
    %v3947 = vadd.f32 %v3795, %v3925
    %v3948 = vadd.f32 %v3800, %v3930
    %v3949 = vadd.f32 %v3805, %v3935
    %v3950 = vadd.f32 %v3810, %v3940
    %v3951 = vld [vmem:[#allocation2 + $0x250] sm:$0xff]
    %v3953 = vsel %vm3554, %v3544, 0
    %v3956 = vsel %vm3554, %v3545, 0
    %v3959 = vsel %vm3554, %v3546, 0
    %v3962 = vsel %vm3554, %v3547, 0
    %v3965 = vsel %vm3554, %v3548, 0
    %v3968 = vsel %vm3554, %v3549, 0
    %v3971 = vsel %vm3554, %v3550, 0
    %v3974 = vsel %vm3554, %v3551, 0
    %3976 = vmatprep.subr.mxu0 0.0
    %3977 = vmatpush1.msra.mxu0 0.0
    %3978 = vmatprep.subr.mxu0 0.0
    %3979 = vmatpush1.msra.mxu0 0.0
    %3980 = vmatprep.subr.mxu0 0.0
    %3981 = vmatpush1.msra.mxu0 0.0
    %3982 = vmatprep.subr.mxu0 0.0
    %3983 = vmatpush1.msra.mxu0 0.0
    %3984 = vmatprep.subr.mxu0 0.0
    %3985 = vmatpush1.msra.mxu0 0.0
    %3986 = vmatprep.subr.mxu0 0.0
    %3987 = vmatpush1.msra.mxu0 0.0
    %3988 = vmatprep.subr.mxu0 0.0
    %3989 = vmatpush1.msra.mxu0 0.0
    %3990 = vmatprep.subr.mxu0 0.0
    %3991 = vmatpush1.msra.mxu0 0.0
    %3992 = vmatprep.subr.mxu0 0.0
    %3993 = vmatpush1.msra.mxu0 0.0
    %3994 = vmatprep.subr.mxu0 0.0
    %3995 = vmatpush1.msra.mxu0 0.0
    %3996 = vmatprep.subr.mxu0 0.0
    %3997 = vmatpush1.msra.mxu0 0.0
    %3998 = vmatprep.subr.mxu0 0.0
    %3999 = vmatpush1.msra.mxu0 0.0
    %4000 = vmatprep.subr.mxu0 0.0
    %4001 = vmatpush1.msra.mxu0 0.0
    %4002 = vmatprep.subr.mxu0 0.0
    %4003 = vmatpush1.msra.mxu0 0.0
    %4004 = vmatprep.subr.mxu0 0.0
    %4005 = vmatpush1.msra.mxu0 0.0
    %4006 = vmatprep.subr.mxu0 0.0
    %4007 = vmatpush1.msra.mxu0 %v3951
    %4008 = vmatprep.subr.mxu0 0.0
    %4009 = vmatpush2.msra.mxu0 0.0
    %4010 = vmatprep.subr.mxu0 0.0
    %4011 = vmatpush2.msra.mxu0 0.0
    %4012 = vmatprep.subr.mxu0 0.0
    %4013 = vmatpush2.msra.mxu0 0.0
    %4014 = vmatprep.subr.mxu0 0.0
    %4015 = vmatpush2.msra.mxu0 0.0
    %4016 = vmatprep.subr.mxu0 0.0
    %4017 = vmatpush2.msra.mxu0 0.0
    %4018 = vmatprep.subr.mxu0 0.0
    %4019 = vmatpush2.msra.mxu0 0.0
    %4020 = vmatprep.subr.mxu0 0.0
    %4021 = vmatpush2.msra.mxu0 0.0
    %4022 = vmatprep.subr.mxu0 0.0
    %4023 = vmatpush2.msra.mxu0 0.0
    %4024 = vmatprep.subr.mxu0 0.0
    %4025 = vmatpush2.msra.mxu0 0.0
    %4026 = vmatprep.subr.mxu0 0.0
    %4027 = vmatpush2.msra.mxu0 0.0
    %4028 = vmatprep.subr.mxu0 0.0
    %4029 = vmatpush2.msra.mxu0 0.0
    %4030 = vmatprep.subr.mxu0 0.0
    %4031 = vmatpush2.msra.mxu0 0.0
    %4032 = vmatprep.subr.mxu0 0.0
    %4033 = vmatpush2.msra.mxu0 0.0
    %4034 = vmatprep.subr.mxu0 0.0
    %4035 = vmatpush2.msra.mxu0 0.0
    %4036 = vmatprep.subr.mxu0 0.0
    %4037 = vmatpush2.msra.mxu0 0.0
    %4038 = vmatprep.subr.mxu0 0.0
    %4039 = vmatpush2.msra.mxu0 0.0
    %4040 = vmatprep.mubr.f32.mxu0 0.0
    %4041 = vmatmul.mubr.f32.gmra.mxu0 %v3953
    %v4042 = vpop.f32.mrf.mxu0
    %v4043 = vadd.f32 0.0, %v4042
    %v4044 = vpop.f32.mrf.mxu0
    %4045 = vmatprep.mubr.f32.mxu0 0.0
    %4046 = vmatmul.mubr.f32.gmra.mxu0 %v3956
    %v4047 = vpop.f32.mrf.mxu0
    %v4048 = vadd.f32 0.0, %v4047
    %v4049 = vpop.f32.mrf.mxu0
    %4050 = vmatprep.mubr.f32.mxu0 0.0
    %4051 = vmatmul.mubr.f32.gmra.mxu0 %v3959
    %v4052 = vpop.f32.mrf.mxu0
    %v4053 = vadd.f32 0.0, %v4052
    %v4054 = vpop.f32.mrf.mxu0
    %4055 = vmatprep.mubr.f32.mxu0 0.0
    %4056 = vmatmul.mubr.f32.gmra.mxu0 %v3962
    %v4057 = vpop.f32.mrf.mxu0
    %v4058 = vadd.f32 0.0, %v4057
    %v4059 = vpop.f32.mrf.mxu0
    %4060 = vmatprep.mubr.f32.mxu0 0.0
    %4061 = vmatmul.mubr.f32.gmra.mxu0 %v3965
    %v4062 = vpop.f32.mrf.mxu0
    %v4063 = vadd.f32 0.0, %v4062
    %v4064 = vpop.f32.mrf.mxu0
    %4065 = vmatprep.mubr.f32.mxu0 0.0
    %4066 = vmatmul.mubr.f32.gmra.mxu0 %v3968
    %v4067 = vpop.f32.mrf.mxu0
    %v4068 = vadd.f32 0.0, %v4067
    %v4069 = vpop.f32.mrf.mxu0
    %4070 = vmatprep.mubr.f32.mxu0 0.0
    %4071 = vmatmul.mubr.f32.gmra.mxu0 %v3971
    %v4072 = vpop.f32.mrf.mxu0
    %v4073 = vadd.f32 0.0, %v4072
    %v4074 = vpop.f32.mrf.mxu0
    %4075 = vmatprep.mubr.f32.mxu0 0.0
    %4076 = vmatmul.mubr.f32.gmra.mxu0 %v3974
    %v4077 = vpop.f32.mrf.mxu0
    %v4078 = vadd.f32 0.0, %v4077
    %v4079 = vpop.f32.mrf.mxu0
    %4080 = vdwg.mxu0
    %v4081 = vadd.f32 %v3943, %v4043
    %v4082 = vadd.f32 %v3944, %v4048
    %v4083 = vadd.f32 %v3945, %v4053
    %v4084 = vadd.f32 %v3946, %v4058
    %v4085 = vadd.f32 %v3947, %v4063
    %v4086 = vadd.f32 %v3948, %v4068
    %v4087 = vadd.f32 %v3949, %v4073
    %v4088 = vadd.f32 %v3950, %v4078
    %v4089 = vld [vmem:[#allocation2 + $0x258] sm:$0x1]
    %v4090 = vlaneseq
    %v4091 = vshrl.u32 %v4090, 7
    %v4092 = vsub.s32 0, %v4091
    %v4093 = vrot.slane %v4089, %v4092
    %v4094 = vadd.f32 %v4081, %v4093
    %v4095 = vadd.f32 %v4082, %v4093
    %v4096 = vadd.f32 %v4083, %v4093
    %v4097 = vadd.f32 %v4084, %v4093
    %v4098 = vadd.f32 %v4085, %v4093
    %v4099 = vadd.f32 %v4086, %v4093
    %v4100 = vadd.f32 %v4087, %v4093
    %v4101 = vadd.f32 %v4088, %v4093
    %v4102 = vmax.f32 %v4094, 0.0
    %v4103 = vmax.f32 %v4095, 0.0
    %v4104 = vmax.f32 %v4096, 0.0
    %v4105 = vmax.f32 %v4097, 0.0
    %v4106 = vmax.f32 %v4098, 0.0
    %v4107 = vmax.f32 %v4099, 0.0
    %v4108 = vmax.f32 %v4100, 0.0
    %v4109 = vmax.f32 %v4101, 0.0
    %v4110 = vld [vmem:[#allocation2 + $0x260] sm:$0xff]
    %v4111 = vld [vmem:[#allocation2 + $0x268] sm:$0x1]
    %v4112 = vlaneseq
    %v4113 = vshrl.u32 %v4112, 7
    %v4114 = vsub.s32 0, %v4113
    %v4115 = vrot.slane %v4111, %v4114
    %v4117 = vsel %vm3554, %v4102, 0
    %v4120 = vsel %vm3554, %v4103, 0
    %v4123 = vsel %vm3554, %v4104, 0
    %v4126 = vsel %vm3554, %v4105, 0
    %v4129 = vsel %vm3554, %v4106, 0
    %v4132 = vsel %vm3554, %v4107, 0
    %v4135 = vsel %vm3554, %v4108, 0
    %v4138 = vsel %vm3554, %v4109, 0
    %4140 = vmatprep.subr.mxu0 0.0
    %4141 = vmatpush1.msra.mxu0 0.0
    %4142 = vmatprep.subr.mxu0 0.0
    %4143 = vmatpush1.msra.mxu0 0.0
    %4144 = vmatprep.subr.mxu0 0.0
    %4145 = vmatpush1.msra.mxu0 0.0
    %4146 = vmatprep.subr.mxu0 0.0
    %4147 = vmatpush1.msra.mxu0 0.0
    %4148 = vmatprep.subr.mxu0 0.0
    %4149 = vmatpush1.msra.mxu0 0.0
    %4150 = vmatprep.subr.mxu0 0.0
    %4151 = vmatpush1.msra.mxu0 0.0
    %4152 = vmatprep.subr.mxu0 0.0
    %4153 = vmatpush1.msra.mxu0 0.0
    %4154 = vmatprep.subr.mxu0 0.0
    %4155 = vmatpush1.msra.mxu0 0.0
    %4156 = vmatprep.subr.mxu0 0.0
    %4157 = vmatpush1.msra.mxu0 0.0
    %4158 = vmatprep.subr.mxu0 0.0
    %4159 = vmatpush1.msra.mxu0 0.0
    %4160 = vmatprep.subr.mxu0 0.0
    %4161 = vmatpush1.msra.mxu0 0.0
    %4162 = vmatprep.subr.mxu0 0.0
    %4163 = vmatpush1.msra.mxu0 0.0
    %4164 = vmatprep.subr.mxu0 0.0
    %4165 = vmatpush1.msra.mxu0 0.0
    %4166 = vmatprep.subr.mxu0 0.0
    %4167 = vmatpush1.msra.mxu0 0.0
    %4168 = vmatprep.subr.mxu0 0.0
    %4169 = vmatpush1.msra.mxu0 0.0
    %4170 = vmatprep.subr.mxu0 0.0
    %4171 = vmatpush1.msra.mxu0 %v4110
    %4172 = vmatprep.subr.mxu0 0.0
    %4173 = vmatpush2.msra.mxu0 0.0
    %4174 = vmatprep.subr.mxu0 0.0
    %4175 = vmatpush2.msra.mxu0 0.0
    %4176 = vmatprep.subr.mxu0 0.0
    %4177 = vmatpush2.msra.mxu0 0.0
    %4178 = vmatprep.subr.mxu0 0.0
    %4179 = vmatpush2.msra.mxu0 0.0
    %4180 = vmatprep.subr.mxu0 0.0
    %4181 = vmatpush2.msra.mxu0 0.0
    %4182 = vmatprep.subr.mxu0 0.0
    %4183 = vmatpush2.msra.mxu0 0.0
    %4184 = vmatprep.subr.mxu0 0.0
    %4185 = vmatpush2.msra.mxu0 0.0
    %4186 = vmatprep.subr.mxu0 0.0
    %4187 = vmatpush2.msra.mxu0 0.0
    %4188 = vmatprep.subr.mxu0 0.0
    %4189 = vmatpush2.msra.mxu0 0.0
    %4190 = vmatprep.subr.mxu0 0.0
    %4191 = vmatpush2.msra.mxu0 0.0
    %4192 = vmatprep.subr.mxu0 0.0
    %4193 = vmatpush2.msra.mxu0 0.0
    %4194 = vmatprep.subr.mxu0 0.0
    %4195 = vmatpush2.msra.mxu0 0.0
    %4196 = vmatprep.subr.mxu0 0.0
    %4197 = vmatpush2.msra.mxu0 0.0
    %4198 = vmatprep.subr.mxu0 0.0
    %4199 = vmatpush2.msra.mxu0 0.0
    %4200 = vmatprep.subr.mxu0 0.0
    %4201 = vmatpush2.msra.mxu0 0.0
    %4202 = vmatprep.subr.mxu0 0.0
    %4203 = vmatpush2.msra.mxu0 0.0
    %4204 = vmatprep.mubr.f32.mxu0 0.0
    %4205 = vmatmul.mubr.f32.gmra.mxu0 %v4117
    %v4206 = vpop.f32.mrf.mxu0
    %v4207 = vadd.f32 %v4115, %v4206
    %v4208 = vpop.f32.mrf.mxu0
    %4209 = vmatprep.mubr.f32.mxu0 0.0
    %4210 = vmatmul.mubr.f32.gmra.mxu0 %v4120
    %v4211 = vpop.f32.mrf.mxu0
    %v4212 = vadd.f32 %v4115, %v4211
    %v4213 = vpop.f32.mrf.mxu0
    %4214 = vmatprep.mubr.f32.mxu0 0.0
    %4215 = vmatmul.mubr.f32.gmra.mxu0 %v4123
    %v4216 = vpop.f32.mrf.mxu0
    %v4217 = vadd.f32 %v4115, %v4216
    %v4218 = vpop.f32.mrf.mxu0
    %4219 = vmatprep.mubr.f32.mxu0 0.0
    %4220 = vmatmul.mubr.f32.gmra.mxu0 %v4126
    %v4221 = vpop.f32.mrf.mxu0
    %v4222 = vadd.f32 %v4115, %v4221
    %v4223 = vpop.f32.mrf.mxu0
    %4224 = vmatprep.mubr.f32.mxu0 0.0
    %4225 = vmatmul.mubr.f32.gmra.mxu0 %v4129
    %v4226 = vpop.f32.mrf.mxu0
    %v4227 = vadd.f32 %v4115, %v4226
    %v4228 = vpop.f32.mrf.mxu0
    %4229 = vmatprep.mubr.f32.mxu0 0.0
    %4230 = vmatmul.mubr.f32.gmra.mxu0 %v4132
    %v4231 = vpop.f32.mrf.mxu0
    %v4232 = vadd.f32 %v4115, %v4231
    %v4233 = vpop.f32.mrf.mxu0
    %4234 = vmatprep.mubr.f32.mxu0 0.0
    %4235 = vmatmul.mubr.f32.gmra.mxu0 %v4135
    %v4236 = vpop.f32.mrf.mxu0
    %v4237 = vadd.f32 %v4115, %v4236
    %v4238 = vpop.f32.mrf.mxu0
    %4239 = vmatprep.mubr.f32.mxu0 0.0
    %4240 = vmatmul.mubr.f32.gmra.mxu0 %v4138
    %v4241 = vpop.f32.mrf.mxu0
    %v4242 = vadd.f32 %v4115, %v4241
    %v4243 = vpop.f32.mrf.mxu0
    %4244 = vdwg.mxu0
    %vm4245 = vcmask 31744
    %v4246 = vsel %vm4245, %v4207, -inf
    %4247 = vmax.xlane.f32.xlu0 %v4246
    %v4248 = vpop.xlane.xlu0 %4247
    %v4249 = vsel %vm4245, %v4212, -inf
    %4250 = vmax.xlane.f32.xlu0 %v4249
    %v4251 = vpop.xlane.xlu0 %4250
    %v4252 = vsel %vm4245, %v4217, -inf
    %4253 = vmax.xlane.f32.xlu0 %v4252
    %v4254 = vpop.xlane.xlu0 %4253
    %v4255 = vsel %vm4245, %v4222, -inf
    %4256 = vmax.xlane.f32.xlu0 %v4255
    %v4257 = vpop.xlane.xlu0 %4256
    %v4258 = vsel %vm4245, %v4227, -inf
    %4259 = vmax.xlane.f32.xlu0 %v4258
    %v4260 = vpop.xlane.xlu0 %4259
    %v4261 = vsel %vm4245, %v4232, -inf
    %4262 = vmax.xlane.f32.xlu0 %v4261
    %v4263 = vpop.xlane.xlu0 %4262
    %v4264 = vsel %vm4245, %v4237, -inf
    %4265 = vmax.xlane.f32.xlu0 %v4264
    %v4266 = vpop.xlane.xlu0 %4265
    %v4267 = vsel %vm4245, %v4242, -inf
    %4268 = vmax.xlane.f32.xlu0 %v4267
    %v4269 = vpop.xlane.xlu0 %4268
    %v4270 = vsub.f32 %v4207, %v4248
    %v4271 = vsub.f32 %v4212, %v4251
    %v4272 = vsub.f32 %v4217, %v4254
    %v4273 = vsub.f32 %v4222, %v4257
    %v4274 = vsub.f32 %v4227, %v4260
    %v4275 = vsub.f32 %v4232, %v4263
    %v4276 = vsub.f32 %v4237, %v4266
    %v4277 = vsub.f32 %v4242, %v4269
    %v4278 = vmul.f32 %v4270, 1.442695
    %v4279 = vpow.pop %v4278
    %v4280 = vmul.f32 %v4271, 1.442695
    %v4281 = vpow.pop %v4280
    %v4282 = vmul.f32 %v4272, 1.442695
    %v4283 = vpow.pop %v4282
    %v4284 = vmul.f32 %v4273, 1.442695
    %v4285 = vpow.pop %v4284
    %v4286 = vmul.f32 %v4274, 1.442695
    %v4287 = vpow.pop %v4286
    %v4288 = vmul.f32 %v4275, 1.442695
    %v4289 = vpow.pop %v4288
    %v4290 = vmul.f32 %v4276, 1.442695
    %v4291 = vpow.pop %v4290
    %v4292 = vmul.f32 %v4277, 1.442695
    %v4293 = vpow.pop %v4292
    %v4294 = vsel %vm4245, %v4279, 0.0
    %4295 = vadd.xlane.f32.xlu0 %v4294
    %v4296 = vpop.xlane.xlu0 %4295
    %v4297 = vsel %vm4245, %v4281, 0.0
    %4298 = vadd.xlane.f32.xlu0 %v4297
    %v4299 = vpop.xlane.xlu0 %4298
    %v4300 = vsel %vm4245, %v4283, 0.0
    %4301 = vadd.xlane.f32.xlu0 %v4300
    %v4302 = vpop.xlane.xlu0 %4301
    %v4303 = vsel %vm4245, %v4285, 0.0
    %4304 = vadd.xlane.f32.xlu0 %v4303
    %v4305 = vpop.xlane.xlu0 %4304
    %v4306 = vsel %vm4245, %v4287, 0.0
    %4307 = vadd.xlane.f32.xlu0 %v4306
    %v4308 = vpop.xlane.xlu0 %4307
    %v4309 = vsel %vm4245, %v4289, 0.0
    %4310 = vadd.xlane.f32.xlu0 %v4309
    %v4311 = vpop.xlane.xlu0 %4310
    %v4312 = vsel %vm4245, %v4291, 0.0
    %4313 = vadd.xlane.f32.xlu0 %v4312
    %v4314 = vpop.xlane.xlu0 %4313
    %v4315 = vsel %vm4245, %v4293, 0.0
    %4316 = vadd.xlane.f32.xlu0 %v4315
    %v4317 = vpop.xlane.xlu0 %4316
    %v4318 = vrcp.pop %v4296
    %v4319 = vrcp.pop %v4299
    %v4320 = vrcp.pop %v4302
    %v4321 = vrcp.pop %v4305
    %v4322 = vrcp.pop %v4308
    %v4323 = vrcp.pop %v4311
    %v4324 = vrcp.pop %v4314
    %v4325 = vrcp.pop %v4317
    %v4326 = vmul.f32 %v4279, %v4318
    %v4327 = vmul.f32 %v4281, %v4319
    %v4328 = vmul.f32 %v4283, %v4320
    %v4329 = vmul.f32 %v4285, %v4321
    %v4330 = vmul.f32 %v4287, %v4322
    %v4331 = vmul.f32 %v4289, %v4323
    %v4332 = vmul.f32 %v4291, %v4324
    %v4333 = vmul.f32 %v4293, %v4325
    %4335 = vset.pattern.permute.xlu0 0
    %4336 = vperm.xlu0 %4335, %v4326
    %v4337 = vpop.permute.xlu0 %4336
    %4340 = vset.pattern.permute.xlu0 0
    %4341 = vperm.xlu0 %4340, %v4327
    %v4342 = vpop.permute.xlu0 %4341
    %4345 = vset.pattern.permute.xlu0 0
    %4346 = vperm.xlu0 %4345, %v4328
    %v4347 = vpop.permute.xlu0 %4346
    %4350 = vset.pattern.permute.xlu0 0
    %4351 = vperm.xlu0 %4350, %v4329
    %v4352 = vpop.permute.xlu0 %4351
    %4355 = vset.pattern.permute.xlu0 0
    %4356 = vperm.xlu0 %4355, %v4330
    %v4357 = vpop.permute.xlu0 %4356
    %4360 = vset.pattern.permute.xlu0 0
    %4361 = vperm.xlu0 %4360, %v4331
    %v4362 = vpop.permute.xlu0 %4361
    %4365 = vset.pattern.permute.xlu0 0
    %4366 = vperm.xlu0 %4365, %v4332
    %v4367 = vpop.permute.xlu0 %4366
    %4370 = vset.pattern.permute.xlu0 0
    %4371 = vperm.xlu0 %4370, %v4333
    %v4372 = vpop.permute.xlu0 %4371
    %v4374 = vmul.f32 %v4337, %v3158
    %v4375 = vmul.f32 %v4342, %v3159
    %v4376 = vmul.f32 %v4347, %v3160
    %v4377 = vmul.f32 %v4352, %v3161
    %v4378 = vmul.f32 %v4357, %v3162
    %v4379 = vmul.f32 %v4362, %v3163
    %v4380 = vmul.f32 %v4367, %v3164
    %v4381 = vmul.f32 %v4372, %v3165
    %4382 = vset.pattern.permute.xlu0 1
    %4383 = vperm.xlu0 %4382, %v4326
    %v4384 = vpop.permute.xlu0 %4383
    %4386 = vset.pattern.permute.xlu0 1
    %4387 = vperm.xlu0 %4386, %v4327
    %v4388 = vpop.permute.xlu0 %4387
    %4390 = vset.pattern.permute.xlu0 1
    %4391 = vperm.xlu0 %4390, %v4328
    %v4392 = vpop.permute.xlu0 %4391
    %4394 = vset.pattern.permute.xlu0 1
    %4395 = vperm.xlu0 %4394, %v4329
    %v4396 = vpop.permute.xlu0 %4395
    %4398 = vset.pattern.permute.xlu0 1
    %4399 = vperm.xlu0 %4398, %v4330
    %v4400 = vpop.permute.xlu0 %4399
    %4402 = vset.pattern.permute.xlu0 1
    %4403 = vperm.xlu0 %4402, %v4331
    %v4404 = vpop.permute.xlu0 %4403
    %4406 = vset.pattern.permute.xlu0 1
    %4407 = vperm.xlu0 %4406, %v4332
    %v4408 = vpop.permute.xlu0 %4407
    %4410 = vset.pattern.permute.xlu0 1
    %4411 = vperm.xlu0 %4410, %v4333
    %v4412 = vpop.permute.xlu0 %4411
    %v4414 = vmul.f32 %v4384, %v3280
    %v4415 = vmul.f32 %v4388, %v3281
    %v4416 = vmul.f32 %v4392, %v3282
    %v4417 = vmul.f32 %v4396, %v3283
    %v4418 = vmul.f32 %v4400, %v3284
    %v4419 = vmul.f32 %v4404, %v3285
    %v4420 = vmul.f32 %v4408, %v3286
    %v4421 = vmul.f32 %v4412, %v3287
    %v4422 = vadd.f32 %v4374, %v4414
    %v4423 = vadd.f32 %v4375, %v4415
    %v4424 = vadd.f32 %v4376, %v4416
    %v4425 = vadd.f32 %v4377, %v4417
    %v4426 = vadd.f32 %v4378, %v4418
    %v4427 = vadd.f32 %v4379, %v4419
    %v4428 = vadd.f32 %v4380, %v4420
    %v4429 = vadd.f32 %v4381, %v4421
    %4430 = vset.pattern.permute.xlu0 2
    %4431 = vperm.xlu0 %4430, %v4326
    %v4432 = vpop.permute.xlu0 %4431
    %4434 = vset.pattern.permute.xlu0 2
    %4435 = vperm.xlu0 %4434, %v4327
    %v4436 = vpop.permute.xlu0 %4435
    %4438 = vset.pattern.permute.xlu0 2
    %4439 = vperm.xlu0 %4438, %v4328
    %v4440 = vpop.permute.xlu0 %4439
    %4442 = vset.pattern.permute.xlu0 2
    %4443 = vperm.xlu0 %4442, %v4329
    %v4444 = vpop.permute.xlu0 %4443
    %4446 = vset.pattern.permute.xlu0 2
    %4447 = vperm.xlu0 %4446, %v4330
    %v4448 = vpop.permute.xlu0 %4447
    %4450 = vset.pattern.permute.xlu0 2
    %4451 = vperm.xlu0 %4450, %v4331
    %v4452 = vpop.permute.xlu0 %4451
    %4454 = vset.pattern.permute.xlu0 2
    %4455 = vperm.xlu0 %4454, %v4332
    %v4456 = vpop.permute.xlu0 %4455
    %4458 = vset.pattern.permute.xlu0 2
    %4459 = vperm.xlu0 %4458, %v4333
    %v4460 = vpop.permute.xlu0 %4459
    %v4462 = vmul.f32 %v4432, %v3400
    %v4463 = vmul.f32 %v4436, %v3401
    %v4464 = vmul.f32 %v4440, %v3402
    %v4465 = vmul.f32 %v4444, %v3403
    %v4466 = vmul.f32 %v4448, %v3404
    %v4467 = vmul.f32 %v4452, %v3405
    %v4468 = vmul.f32 %v4456, %v3406
    %v4469 = vmul.f32 %v4460, %v3407
    %v4470 = vadd.f32 %v4422, %v4462
    %v4471 = vadd.f32 %v4423, %v4463
    %v4472 = vadd.f32 %v4424, %v4464
    %v4473 = vadd.f32 %v4425, %v4465
    %v4474 = vadd.f32 %v4426, %v4466
    %v4475 = vadd.f32 %v4427, %v4467
    %v4476 = vadd.f32 %v4428, %v4468
    %v4477 = vadd.f32 %v4429, %v4469
    %4478 = vset.pattern.permute.xlu0 3
    %4479 = vperm.xlu0 %4478, %v4326
    %v4480 = vpop.permute.xlu0 %4479
    %4482 = vset.pattern.permute.xlu0 3
    %4483 = vperm.xlu0 %4482, %v4327
    %v4484 = vpop.permute.xlu0 %4483
    %4486 = vset.pattern.permute.xlu0 3
    %4487 = vperm.xlu0 %4486, %v4328
    %v4488 = vpop.permute.xlu0 %4487
    %4490 = vset.pattern.permute.xlu0 3
    %4491 = vperm.xlu0 %4490, %v4329
    %v4492 = vpop.permute.xlu0 %4491
    %4494 = vset.pattern.permute.xlu0 3
    %4495 = vperm.xlu0 %4494, %v4330
    %v4496 = vpop.permute.xlu0 %4495
    %4498 = vset.pattern.permute.xlu0 3
    %4499 = vperm.xlu0 %4498, %v4331
    %v4500 = vpop.permute.xlu0 %4499
    %4502 = vset.pattern.permute.xlu0 3
    %4503 = vperm.xlu0 %4502, %v4332
    %v4504 = vpop.permute.xlu0 %4503
    %4506 = vset.pattern.permute.xlu0 3
    %4507 = vperm.xlu0 %4506, %v4333
    %v4508 = vpop.permute.xlu0 %4507
    %v4510 = vmul.f32 %v4480, %v3544
    %v4511 = vmul.f32 %v4484, %v3545
    %v4512 = vmul.f32 %v4488, %v3546
    %v4513 = vmul.f32 %v4492, %v3547
    %v4514 = vmul.f32 %v4496, %v3548
    %v4515 = vmul.f32 %v4500, %v3549
    %v4516 = vmul.f32 %v4504, %v3550
    %v4517 = vmul.f32 %v4508, %v3551
    %v4518 = vadd.f32 %v4470, %v4510
    %v4519 = vadd.f32 %v4471, %v4511
    %v4520 = vadd.f32 %v4472, %v4512
    %v4521 = vadd.f32 %v4473, %v4513
    %v4522 = vadd.f32 %v4474, %v4514
    %v4523 = vadd.f32 %v4475, %v4515
    %v4524 = vadd.f32 %v4476, %v4516
    %v4525 = vadd.f32 %v4477, %v4517
    %v4526 = vpack.c.bf16 %v4519, %v4518
    %v4527 = vpack.c.bf16 %v4521, %v4520
    %v4528 = vpack.c.bf16 %v4523, %v4522
    %v4529 = vpack.c.bf16 %v4525, %v4524
    %v4534 = vunpack.c.l.b16 %v4526
    %v4535 = vunpack.c.h.b16 %v4526
    %v4536 = vunpack.c.l.b16 %v4527
    %v4537 = vunpack.c.h.b16 %v4527
    %v4538 = vunpack.c.l.b16 %v4528
    %v4539 = vunpack.c.h.b16 %v4528
    %v4540 = vunpack.c.l.b16 %v4529
    %v4541 = vunpack.c.h.b16 %v4529
    %v4542 = vpack.c.b16 %v4534, %v4534
    %v4543 = vpack.c.b16 %v4535, %v4535
    %v4544 = vpack.c.b16 %v4536, %v4536
    %v4545 = vpack.c.b16 %v4537, %v4537
    %v4546 = vpack.c.b16 %v4538, %v4538
    %v4547 = vpack.c.b16 %v4539, %v4539
    %v4548 = vpack.c.b16 %v4540, %v4540
    %v4549 = vpack.c.b16 %v4541, %v4541
    %4550 = vrot.lane.b32.xlu0 %v4542, 32
    %v4551 = vpop.permute.xlu0 %4550
    %4552 = vrot.lane.b32.xlu0 %v4543, 32
    %v4553 = vpop.permute.xlu0 %4552
    %4554 = vrot.lane.b32.xlu0 %v4544, 32
    %v4555 = vpop.permute.xlu0 %4554
    %4556 = vrot.lane.b32.xlu0 %v4545, 32
    %v4557 = vpop.permute.xlu0 %4556
    %4558 = vrot.lane.b32.xlu0 %v4546, 32
    %v4559 = vpop.permute.xlu0 %4558
    %4560 = vrot.lane.b32.xlu0 %v4547, 32
    %v4561 = vpop.permute.xlu0 %4560
    %4562 = vrot.lane.b32.xlu0 %v4548, 32
    %v4563 = vpop.permute.xlu0 %4562
    %4564 = vrot.lane.b32.xlu0 %v4549, 32
    %v4565 = vpop.permute.xlu0 %4564
    %vm4574 = vcmask 322816
    %4575 = vst.msk [vmem:[#allocation5] sm:$0xf] %vm4574, %v4551
    %4576 = vst.msk [vmem:[#allocation5 + $0x4] sm:$0xf] %vm4574, %v4553
    %4577 = vst.msk [vmem:[#allocation5 + $0x8] sm:$0xf] %vm4574, %v4555
    %4578 = vst.msk [vmem:[#allocation5 + $0xc] sm:$0xf] %vm4574, %v4557
    %4579 = vst.msk [vmem:[#allocation5 + $0x10] sm:$0xf] %vm4574, %v4559
    %4580 = vst.msk [vmem:[#allocation5 + $0x14] sm:$0xf] %vm4574, %v4561
    %4581 = vst.msk [vmem:[#allocation5 + $0x18] sm:$0xf] %vm4574, %v4563
    %4582 = vst.msk [vmem:[#allocation5 + $0x1c] sm:$0xf] %vm4574, %v4565
    // Predicated region
    $region18: #{tpu_custom_call.1} parent=1 // pred_check
      _
    $region19: #{tpu_custom_call.1} parent=1 // pred_check_branch
      %4584 = sbr.rel (0) target = $region21
    $region20: #{tpu_custom_call.1} parent=1 // pred_region
      %s4586 = ssub.s32 512, 512
      %4587 = vsyncadd [#allocation4], %s4586
      %s4588 = sshll.u32 [#allocation5], 4
      %s4589 = int_to_ptr.vmem [resolvable:$true] %s4588
      %4594 = dma.vmem_to_hbm [thread:$0]  %s4589, 512, %s3, [#allocation4], 64, 64, 4
    $region21: #{tpu_custom_call.1} parent=1 // pred_fallthru
      _
    // Predicated region
    $region22: #{tpu_custom_call.1} parent=1 // pred_check
      _
    $region23: #{tpu_custom_call.1} parent=1 // pred_check_branch
      %4596 = sbr.rel (0) target = $region25
    $region24: #{tpu_custom_call.1} parent=1 // pred_region
      %4597 = dma.done [#allocation4], 512
    $region25: #{tpu_custom_call.1} parent=1 // pred_fallthru
      _
    %4598 = vsyncpa [#allocation3], 1
    %4599 = vsyncpa [#allocation4], 1

</llo_original>
